<compile_context>
chip_gen: v6e
topology: v6e:2x2x1
jax: 0.10.0
libtpu: 0.0.40
codegen_flags: <defaults>
</compile_context>

<pallas_src>
import jax
import jax.numpy as jnp
from jax.experimental import pallas as pl
from jax.experimental.pallas import tpu as pltpu

H = W = 16          # spatial size
CIN = 3             # conv1 input channels
C1 = 64             # conv1 output channels
C2 = 128            # conv2 output channels
NCLS = 10           # fc output classes
K = 3               # conv kernel size
NPAD = 128          # lane-padded logits width (>= NCLS, multiple of 128)


def cnn_kernel(xcol_ref, w1_ref, b1_ref, w2_ref, b2_ref, wfc_ref, bfc_ref,
               o_ref, h1p_ref, x2_ref):
    # xcol_ref: (Bb, H*W, K*K*CIN) bf16   -- conv1 im2col built by XLA
    # w1_ref  : (K*K*CIN, C1) bf16        b1_ref: (1, C1) f32
    # w2_ref  : (K*K*C1, C2)  bf16        b2_ref: (1, C2) f32
    # wfc_ref : (C2, NPAD) bf16 (pre-scaled by 1/(H*W), zero-padded cols)
    # bfc_ref : (1, NPAD) f32
    # o_ref   : (Bb, 1, NPAD) f32
    # h1p_ref : VMEM scratch (Bb, H+2, W+2, C1) bf16  -- zero-haloed conv1 act
    # x2_ref  : VMEM scratch (Bb*H*W, K*K*C1) bf16    -- conv2 im2col rows
    Bb = xcol_ref.shape[0]

    # ---- conv1: single im2col matmul (bf16 x bf16 -> f32) + bias + ReLU ----
    xcol = xcol_ref[...].reshape(Bb * H * W, K * K * CIN)
    a1 = jnp.dot(xcol, w1_ref[...], preferred_element_type=jnp.float32)
    h1 = jnp.maximum(a1 + b1_ref[...], 0.0).astype(jnp.bfloat16)  # one cast

    # zero only the 1-wide halo (interior is fully overwritten every step;
    # cheap and megacore-safe), then write the interior in bf16
    h1p_ref[:, 0:1, :, :] = jnp.zeros((Bb, 1, W + 2, C1), jnp.bfloat16)
    h1p_ref[:, H + 1:H + 2, :, :] = jnp.zeros((Bb, 1, W + 2, C1), jnp.bfloat16)
    h1p_ref[:, 1:H + 1, 0:1, :] = jnp.zeros((Bb, H, 1, C1), jnp.bfloat16)
    h1p_ref[:, 1:H + 1, W + 1:W + 2, :] = jnp.zeros((Bb, H, 1, C1), jnp.bfloat16)
    h1p_ref[:, 1:H + 1, 1:W + 1, :] = h1.reshape(Bb, H, W, C1)

    # ---- conv2: write 9 shifted windows straight into the lane-dense x2
    #      scratch (no concat temporary), then one K=576 matmul + bias + ReLU
    for k in range(K * K):
        dy, dx = k // K, k % K
        x2_ref[:, k * C1:(k + 1) * C1] = (
            h1p_ref[:, dy:dy + H, dx:dx + W, :].reshape(Bb * H * W, C1))
    a2 = jnp.dot(x2_ref[...], w2_ref[...], preferred_element_type=jnp.float32)
    h2 = jnp.maximum(a2 + b2_ref[...], 0.0)                     # (Bb*256, C2)

    # ---- AdaptiveAvgPool2d((1,1)) + fc: pooling scale folded into wfc ----
    pooled = jnp.sum(h2.reshape(Bb, H * W, C2), axis=1).astype(jnp.bfloat16)
    logits = jnp.dot(pooled, wfc_ref[...],
                     preferred_element_type=jnp.float32) + bfc_ref[...]
    o_ref[...] = logits.reshape(Bb, 1, NPAD)


@jax.jit
def simple_cnn(x_nchw, params):
    w1, b1, w2, b2, wfc, bfc = params
    B = x_nchw.shape[0]

    # ---- conv1 im2col in the wrapper: NCHW -> NHWC, pad, 9 shifted windows ----
    x = jnp.transpose(x_nchw, (0, 2, 3, 1)).astype(jnp.bfloat16)   # (B,H,W,CIN)
    xp = jnp.pad(x, ((0, 0), (1, 1), (1, 1), (0, 0)))              # (B,H+2,W+2,CIN)
    xcol = jnp.concatenate(
        [xp[:, dy:dy + H, dx:dx + W, :] for dy in range(K) for dx in range(K)],
        axis=-1).reshape(B, H * W, K * K * CIN)                    # (B,256,27)

    # ---- weights: (O,I,KH,KW) -> (KH*KW*I, O), bf16 for the MXU ----
    w1k = jnp.transpose(w1, (2, 3, 1, 0)).reshape(K * K * CIN, C1)
    w1k = w1k.astype(jnp.bfloat16)
    w2k = jnp.transpose(w2, (2, 3, 1, 0)).reshape(K * K * C1, C2)
    w2k = w2k.astype(jnp.bfloat16)
    # fold 1/(H*W) pooling into fc weight; pad logits to lane-dense 128; bf16
    wfck = jnp.pad(wfc.T / float(H * W),
                   ((0, 0), (0, NPAD - NCLS))).astype(jnp.bfloat16)
    bfck = jnp.pad(bfc.reshape(1, NCLS), ((0, 0), (0, NPAD - NCLS)))

    # ---- batch blocking: up to 16 images / step, but keep >= 2 grid steps so
    #      the "parallel" batch axis can use both TensorCores on v7x ----
    Bb = max(1, min(16, pl.cdiv(B, 2)))
    B_pad = pl.cdiv(B, Bb) * Bb
    if B_pad != B:
        xcol = jnp.pad(xcol, ((0, B_pad - B), (0, 0), (0, 0)))

    out = pl.pallas_call(
        cnn_kernel,
        out_shape=jax.ShapeDtypeStruct((B_pad, 1, NPAD), jnp.float32),
        grid_spec=pltpu.PrefetchScalarGridSpec(
            num_scalar_prefetch=0,
            grid=(B_pad // Bb,),
            in_specs=[
                pl.BlockSpec((Bb, H * W, K * K * CIN), lambda b: (b, 0, 0)),
                pl.BlockSpec((K * K * CIN, C1), lambda b: (0, 0)),
                pl.BlockSpec((1, C1), lambda b: (0, 0)),
                pl.BlockSpec((K * K * C1, C2), lambda b: (0, 0)),
                pl.BlockSpec((1, C2), lambda b: (0, 0)),
                pl.BlockSpec((C2, NPAD), lambda b: (0, 0)),
                pl.BlockSpec((1, NPAD), lambda b: (0, 0)),
            ],
            out_specs=pl.BlockSpec((Bb, 1, NPAD), lambda b: (b, 0, 0)),
            scratch_shapes=[
                pltpu.VMEM((Bb, H + 2, W + 2, C1), jnp.bfloat16),   # conv1 act
                pltpu.VMEM((Bb * H * W, K * K * C1), jnp.bfloat16),  # conv2 im2col
            ],
        ),
        compiler_params=pltpu.CompilerParams(
            dimension_semantics=("parallel",),        # batch steps independent
            vmem_limit_bytes=48 * 1024 * 1024),
    )(xcol, w1k, b1.reshape(1, C1), w2k, b2.reshape(1, C2), wfck, bfck)

    return out[:B, 0, :NCLS]


def ref_forward(x_nchw, params):
    """Pure-JAX f32 reference matching PyTorch semantics (NCHW)."""
    w1, b1, w2, b2, wfc, bfc = params
    dn = ('NCHW', 'OIHW', 'NCHW')
    y = jax.lax.conv_general_dilated(x_nchw, w1, (1, 1), 'SAME',
                                     dimension_numbers=dn)
    y = jax.nn.relu(y + b1[None, :, None, None])
    y = jax.lax.conv_general_dilated(y, w2, (1, 1), 'SAME',
                                     dimension_numbers=dn)
    y = jax.nn.relu(y + b2[None, :, None, None])
    y = jnp.mean(y, axis=(2, 3))                 # AdaptiveAvgPool2d((1,1)) + flatten
    return y @ wfc.T + bfc


def init_params(key):
    """Deterministic init mirroring PyTorch default shapes/scales."""
    ks = jax.random.split(key, 6)

    def uinit(k, shape, fan_in):
        bound = 1.0 / jnp.sqrt(jnp.float32(fan_in))
        return jax.random.uniform(k, shape, jnp.float32, -bound, bound)

    w1 = uinit(ks[0], (C1, CIN, K, K), CIN * K * K)
    b1 = uinit(ks[1], (C1,), CIN * K * K)
    w2 = uinit(ks[2], (C2, C1, K, K), C1 * K * K)
    b2 = uinit(ks[3], (C2,), C1 * K * K)
    wfc = uinit(ks[4], (NCLS, C2), C2)
    bfc = uinit(ks[5], (NCLS,), C2)
    return (w1, b1, w2, b2, wfc, bfc)


if __name__ == "__main__":
    key = jax.random.PRNGKey(0)
    kp, kx = jax.random.split(key)
    params = init_params(kp)

    batch = 2
    x = jax.random.normal(kx, (batch, CIN, H, W), jnp.float32)   # NCHW like PyTorch

    out = simple_cnn(x, params)
    out = jax.block_until_ready(out)
    assert out.shape == (batch, NCLS)

    ref = ref_forward(x, params)
    assert jnp.allclose(out, ref, rtol=5e-2, atol=5e-2), (
        f"mismatch: max abs diff {jnp.max(jnp.abs(out - ref))}")

    print("KERNEL_OK")
</pallas_src>

<mosaic_0001>
module attributes {stable_mosaic.version = 11 : i64} {
  func.func @cnn_kernel(%arg0: i32, %arg1: memref<1x256x27xbf16, #tpu.memory_space<vmem>>, %arg2: memref<27x64xbf16, #tpu.memory_space<vmem>>, %arg3: memref<1x64xf32, #tpu.memory_space<vmem>>, %arg4: memref<576x128xbf16, #tpu.memory_space<vmem>>, %arg5: memref<1x128xf32, #tpu.memory_space<vmem>>, %arg6: memref<128x128xbf16, #tpu.memory_space<vmem>>, %arg7: memref<1x128xf32, #tpu.memory_space<vmem>>, %arg8: memref<1x1x128xf32, #tpu.memory_space<vmem>>, %arg9: memref<1x18x18x64xbf16, #tpu.memory_space<vmem>>, %arg10: memref<256x576xbf16, #tpu.memory_space<vmem>>) attributes {dimension_semantics = [#tpu.dimension_semantics<parallel>], iteration_bounds = array<i64: 2>, scalar_prefetch = 0 : i64, scratch_operands = 2 : i64, tpu.core_type = #tpu.core_type<tc>, window_params = [{transform_indices = @transform_0, window_bounds = array<i64: 1, 256, 27>}, {pipeline_mode = #tpu.pipeline_mode<synchronous>, transform_indices = @transform_1, window_bounds = array<i64: 27, 64>}, {pipeline_mode = #tpu.pipeline_mode<synchronous>, transform_indices = @transform_2, window_bounds = array<i64: 1, 64>}, {pipeline_mode = #tpu.pipeline_mode<synchronous>, transform_indices = @transform_3, window_bounds = array<i64: 576, 128>}, {pipeline_mode = #tpu.pipeline_mode<synchronous>, transform_indices = @transform_4, window_bounds = array<i64: 1, 128>}, {pipeline_mode = #tpu.pipeline_mode<synchronous>, transform_indices = @transform_5, window_bounds = array<i64: 128, 128>}, {pipeline_mode = #tpu.pipeline_mode<synchronous>, transform_indices = @transform_6, window_bounds = array<i64: 1, 128>}, {transform_indices = @transform_7, window_bounds = array<i64: 1, 1, 128>}]} {
    %c0 = arith.constant 0 : index
    %c0_0 = arith.constant 0 : index
    %c0_1 = arith.constant 0 : index
    %0 = vector.load %arg1[%c0, %c0_0, %c0_1] : memref<1x256x27xbf16, #tpu.memory_space<vmem>>, vector<1x256x27xbf16>
    %1 = vector.shape_cast %0 : vector<1x256x27xbf16> to vector<256x27xbf16>
    %c0_2 = arith.constant 0 : index
    %c0_3 = arith.constant 0 : index
    %2 = vector.load %arg2[%c0_2, %c0_3] : memref<27x64xbf16, #tpu.memory_space<vmem>>, vector<27x64xbf16>
    %cst = arith.constant dense<0.000000e+00> : vector<256x64xf32>
    %3 = tpu.matmul %1, %2, %cst {dimension_numbers = #tpu.dot_dimension_numbers<[1], [0], [0], [1], [0, 0, 1, 1], [], []>} : vector<256x27xbf16>, vector<27x64xbf16>, vector<256x64xf32> -> vector<256x64xf32>
    %c0_4 = arith.constant 0 : index
    %c0_5 = arith.constant 0 : index
    %4 = vector.load %arg3[%c0_4, %c0_5] : memref<1x64xf32, #tpu.memory_space<vmem>>, vector<1x64xf32>
    %5 = vector.broadcast %4 : vector<1x64xf32> to vector<256x64xf32>
    %6 = arith.addf %3, %5 : vector<256x64xf32>
    %cst_6 = arith.constant 0.000000e+00 : f32
    %7 = vector.broadcast %cst_6 : f32 to vector<256x64xf32>
    %8 = arith.maximumf %6, %7 : vector<256x64xf32>
    %9 = arith.truncf %8 : vector<256x64xf32> to vector<256x64xbf16>
    %cst_7 = arith.constant 0.000000e+00 : bf16
    %10 = vector.broadcast %cst_7 : bf16 to vector<1x1x18x64xbf16>
    %c0_8 = arith.constant 0 : index
    %c0_9 = arith.constant 0 : index
    %c0_10 = arith.constant 0 : index
    %c0_11 = arith.constant 0 : index
    %11 = vector.load %arg9[%c0_8, %c0_9, %c0_10, %c0_11] : memref<1x18x18x64xbf16, #tpu.memory_space<vmem>>, vector<1x1x18x64xbf16>
    tpu.vector_store %arg9[%c0_8, %c0_9, %c0_10, %c0_11], %10 {strides = array<i32>} : memref<1x18x18x64xbf16, #tpu.memory_space<vmem>>, vector<1x1x18x64xbf16>,
    %cst_12 = arith.constant 0.000000e+00 : bf16
    %12 = vector.broadcast %cst_12 : bf16 to vector<1x1x18x64xbf16>
    %c0_13 = arith.constant 0 : index
    %c17 = arith.constant 17 : index
    %c0_14 = arith.constant 0 : index
    %c0_15 = arith.constant 0 : index
    %13 = vector.load %arg9[%c0_13, %c17, %c0_14, %c0_15] : memref<1x18x18x64xbf16, #tpu.memory_space<vmem>>, vector<1x1x18x64xbf16>
    tpu.vector_store %arg9[%c0_13, %c17, %c0_14, %c0_15], %12 {strides = array<i32>} : memref<1x18x18x64xbf16, #tpu.memory_space<vmem>>, vector<1x1x18x64xbf16>,
    %cst_16 = arith.constant 0.000000e+00 : bf16
    %14 = vector.broadcast %cst_16 : bf16 to vector<1x16x1x64xbf16>
    %c0_17 = arith.constant 0 : index
    %c1 = arith.constant 1 : index
    %c0_18 = arith.constant 0 : index
    %c0_19 = arith.constant 0 : index
    %15 = vector.load %arg9[%c0_17, %c1, %c0_18, %c0_19] : memref<1x18x18x64xbf16, #tpu.memory_space<vmem>>, vector<1x16x1x64xbf16>
    tpu.vector_store %arg9[%c0_17, %c1, %c0_18, %c0_19], %14 {strides = array<i32>} : memref<1x18x18x64xbf16, #tpu.memory_space<vmem>>, vector<1x16x1x64xbf16>,
    %cst_20 = arith.constant 0.000000e+00 : bf16
    %16 = vector.broadcast %cst_20 : bf16 to vector<1x16x1x64xbf16>
    %c0_21 = arith.constant 0 : index
    %c1_22 = arith.constant 1 : index
    %c17_23 = arith.constant 17 : index
    %c0_24 = arith.constant 0 : index
    %17 = vector.load %arg9[%c0_21, %c1_22, %c17_23, %c0_24] : memref<1x18x18x64xbf16, #tpu.memory_space<vmem>>, vector<1x16x1x64xbf16>
    tpu.vector_store %arg9[%c0_21, %c1_22, %c17_23, %c0_24], %16 {strides = array<i32>} : memref<1x18x18x64xbf16, #tpu.memory_space<vmem>>, vector<1x16x1x64xbf16>,
    %18 = vector.shape_cast %9 : vector<256x64xbf16> to vector<1x16x16x64xbf16>
    %c0_25 = arith.constant 0 : index
    %c1_26 = arith.constant 1 : index
    %c1_27 = arith.constant 1 : index
    %c0_28 = arith.constant 0 : index
    %19 = vector.load %arg9[%c0_25, %c1_26, %c1_27, %c0_28] : memref<1x18x18x64xbf16, #tpu.memory_space<vmem>>, vector<1x16x16x64xbf16>
    tpu.vector_store %arg9[%c0_25, %c1_26, %c1_27, %c0_28], %18 {strides = array<i32>} : memref<1x18x18x64xbf16, #tpu.memory_space<vmem>>, vector<1x16x16x64xbf16>,
    %c0_29 = arith.constant 0 : index
    %c0_30 = arith.constant 0 : index
    %c0_31 = arith.constant 0 : index
    %c0_32 = arith.constant 0 : index
    %20 = vector.load %arg9[%c0_29, %c0_30, %c0_31, %c0_32] : memref<1x18x18x64xbf16, #tpu.memory_space<vmem>>, vector<1x16x16x64xbf16>
    %21 = vector.shape_cast %20 : vector<1x16x16x64xbf16> to vector<256x64xbf16>
    %c0_33 = arith.constant 0 : index
    %c0_34 = arith.constant 0 : index
    %22 = vector.load %arg10[%c0_33, %c0_34] : memref<256x576xbf16, #tpu.memory_space<vmem>>, vector<256x64xbf16>
    tpu.vector_store %arg10[%c0_33, %c0_34], %21 {strides = array<i32>} : memref<256x576xbf16, #tpu.memory_space<vmem>>, vector<256x64xbf16>,
    %c0_35 = arith.constant 0 : index
    %c0_36 = arith.constant 0 : index
    %c1_37 = arith.constant 1 : index
    %c0_38 = arith.constant 0 : index
    %23 = vector.load %arg9[%c0_35, %c0_36, %c1_37, %c0_38] : memref<1x18x18x64xbf16, #tpu.memory_space<vmem>>, vector<1x16x16x64xbf16>
    %24 = vector.shape_cast %23 : vector<1x16x16x64xbf16> to vector<256x64xbf16>
    %c0_39 = arith.constant 0 : index
    %c64 = arith.constant 64 : index
    %25 = vector.load %arg10[%c0_39, %c64] : memref<256x576xbf16, #tpu.memory_space<vmem>>, vector<256x64xbf16>
    tpu.vector_store %arg10[%c0_39, %c64], %24 {strides = array<i32>} : memref<256x576xbf16, #tpu.memory_space<vmem>>, vector<256x64xbf16>,
    %c0_40 = arith.constant 0 : index
    %c0_41 = arith.constant 0 : index
    %c2 = arith.constant 2 : index
    %c0_42 = arith.constant 0 : index
    %26 = vector.load %arg9[%c0_40, %c0_41, %c2, %c0_42] : memref<1x18x18x64xbf16, #tpu.memory_space<vmem>>, vector<1x16x16x64xbf16>
    %27 = vector.shape_cast %26 : vector<1x16x16x64xbf16> to vector<256x64xbf16>
    %c0_43 = arith.constant 0 : index
    %c128 = arith.constant 128 : index
    %28 = vector.load %arg10[%c0_43, %c128] : memref<256x576xbf16, #tpu.memory_space<vmem>>, vector<256x64xbf16>
    tpu.vector_store %arg10[%c0_43, %c128], %27 {strides = array<i32>} : memref<256x576xbf16, #tpu.memory_space<vmem>>, vector<256x64xbf16>,
    %c0_44 = arith.constant 0 : index
    %c1_45 = arith.constant 1 : index
    %c0_46 = arith.constant 0 : index
    %c0_47 = arith.constant 0 : index
    %29 = vector.load %arg9[%c0_44, %c1_45, %c0_46, %c0_47] : memref<1x18x18x64xbf16, #tpu.memory_space<vmem>>, vector<1x16x16x64xbf16>
    %30 = vector.shape_cast %29 : vector<1x16x16x64xbf16> to vector<256x64xbf16>
    %c0_48 = arith.constant 0 : index
    %c192 = arith.constant 192 : index
    %31 = vector.load %arg10[%c0_48, %c192] : memref<256x576xbf16, #tpu.memory_space<vmem>>, vector<256x64xbf16>
    tpu.vector_store %arg10[%c0_48, %c192], %30 {strides = array<i32>} : memref<256x576xbf16, #tpu.memory_space<vmem>>, vector<256x64xbf16>,
    %c0_49 = arith.constant 0 : index
    %c1_50 = arith.constant 1 : index
    %c1_51 = arith.constant 1 : index
    %c0_52 = arith.constant 0 : index
    %32 = vector.load %arg9[%c0_49, %c1_50, %c1_51, %c0_52] : memref<1x18x18x64xbf16, #tpu.memory_space<vmem>>, vector<1x16x16x64xbf16>
    %33 = vector.shape_cast %32 : vector<1x16x16x64xbf16> to vector<256x64xbf16>
    %c0_53 = arith.constant 0 : index
    %c256 = arith.constant 256 : index
    %34 = vector.load %arg10[%c0_53, %c256] : memref<256x576xbf16, #tpu.memory_space<vmem>>, vector<256x64xbf16>
    tpu.vector_store %arg10[%c0_53, %c256], %33 {strides = array<i32>} : memref<256x576xbf16, #tpu.memory_space<vmem>>, vector<256x64xbf16>,
    %c0_54 = arith.constant 0 : index
    %c1_55 = arith.constant 1 : index
    %c2_56 = arith.constant 2 : index
    %c0_57 = arith.constant 0 : index
    %35 = vector.load %arg9[%c0_54, %c1_55, %c2_56, %c0_57] : memref<1x18x18x64xbf16, #tpu.memory_space<vmem>>, vector<1x16x16x64xbf16>
    %36 = vector.shape_cast %35 : vector<1x16x16x64xbf16> to vector<256x64xbf16>
    %c0_58 = arith.constant 0 : index
    %c320 = arith.constant 320 : index
    %37 = vector.load %arg10[%c0_58, %c320] : memref<256x576xbf16, #tpu.memory_space<vmem>>, vector<256x64xbf16>
    tpu.vector_store %arg10[%c0_58, %c320], %36 {strides = array<i32>} : memref<256x576xbf16, #tpu.memory_space<vmem>>, vector<256x64xbf16>,
    %c0_59 = arith.constant 0 : index
    %c2_60 = arith.constant 2 : index
    %c0_61 = arith.constant 0 : index
    %c0_62 = arith.constant 0 : index
    %38 = vector.load %arg9[%c0_59, %c2_60, %c0_61, %c0_62] : memref<1x18x18x64xbf16, #tpu.memory_space<vmem>>, vector<1x16x16x64xbf16>
    %39 = vector.shape_cast %38 : vector<1x16x16x64xbf16> to vector<256x64xbf16>
    %c0_63 = arith.constant 0 : index
    %c384 = arith.constant 384 : index
    %40 = vector.load %arg10[%c0_63, %c384] : memref<256x576xbf16, #tpu.memory_space<vmem>>, vector<256x64xbf16>
    tpu.vector_store %arg10[%c0_63, %c384], %39 {strides = array<i32>} : memref<256x576xbf16, #tpu.memory_space<vmem>>, vector<256x64xbf16>,
    %c0_64 = arith.constant 0 : index
    %c2_65 = arith.constant 2 : index
    %c1_66 = arith.constant 1 : index
    %c0_67 = arith.constant 0 : index
    %41 = vector.load %arg9[%c0_64, %c2_65, %c1_66, %c0_67] : memref<1x18x18x64xbf16, #tpu.memory_space<vmem>>, vector<1x16x16x64xbf16>
    %42 = vector.shape_cast %41 : vector<1x16x16x64xbf16> to vector<256x64xbf16>
    %c0_68 = arith.constant 0 : index
    %c448 = arith.constant 448 : index
    %43 = vector.load %arg10[%c0_68, %c448] : memref<256x576xbf16, #tpu.memory_space<vmem>>, vector<256x64xbf16>
    tpu.vector_store %arg10[%c0_68, %c448], %42 {strides = array<i32>} : memref<256x576xbf16, #tpu.memory_space<vmem>>, vector<256x64xbf16>,
    %c0_69 = arith.constant 0 : index
    %c2_70 = arith.constant 2 : index
    %c2_71 = arith.constant 2 : index
    %c0_72 = arith.constant 0 : index
    %44 = vector.load %arg9[%c0_69, %c2_70, %c2_71, %c0_72] : memref<1x18x18x64xbf16, #tpu.memory_space<vmem>>, vector<1x16x16x64xbf16>
    %45 = vector.shape_cast %44 : vector<1x16x16x64xbf16> to vector<256x64xbf16>
    %c0_73 = arith.constant 0 : index
    %c512 = arith.constant 512 : index
    %46 = vector.load %arg10[%c0_73, %c512] : memref<256x576xbf16, #tpu.memory_space<vmem>>, vector<256x64xbf16>
    tpu.vector_store %arg10[%c0_73, %c512], %45 {strides = array<i32>} : memref<256x576xbf16, #tpu.memory_space<vmem>>, vector<256x64xbf16>,
    %c0_74 = arith.constant 0 : index
    %c0_75 = arith.constant 0 : index
    %47 = vector.load %arg10[%c0_74, %c0_75] : memref<256x576xbf16, #tpu.memory_space<vmem>>, vector<256x576xbf16>
    %c0_76 = arith.constant 0 : index
    %c0_77 = arith.constant 0 : index
    %48 = vector.load %arg4[%c0_76, %c0_77] : memref<576x128xbf16, #tpu.memory_space<vmem>>, vector<576x128xbf16>
    %cst_78 = arith.constant dense<0.000000e+00> : vector<256x128xf32>
    %49 = tpu.matmul %47, %48, %cst_78 {dimension_numbers = #tpu.dot_dimension_numbers<[1], [0], [0], [1], [0, 0, 1, 1], [], []>} : vector<256x576xbf16>, vector<576x128xbf16>, vector<256x128xf32> -> vector<256x128xf32>
    %c0_79 = arith.constant 0 : index
    %c0_80 = arith.constant 0 : index
    %50 = vector.load %arg5[%c0_79, %c0_80] : memref<1x128xf32, #tpu.memory_space<vmem>>, vector<1x128xf32>
    %51 = vector.broadcast %50 : vector<1x128xf32> to vector<256x128xf32>
    %52 = arith.addf %49, %51 : vector<256x128xf32>
    %cst_81 = arith.constant 0.000000e+00 : f32
    %53 = vector.broadcast %cst_81 : f32 to vector<256x128xf32>
    %54 = arith.maximumf %52, %53 : vector<256x128xf32>
    %55 = vector.shape_cast %54 : vector<256x128xf32> to vector<1x256x128xf32>
    %cst_82 = arith.constant dense<0.000000e+00> : vector<1x128xf32>
    %56 = vector.multi_reduction <add>, %55, %cst_82 [1] : vector<1x256x128xf32> to vector<1x128xf32>
    %57 = arith.truncf %56 : vector<1x128xf32> to vector<1x128xbf16>
    %c0_83 = arith.constant 0 : index
    %c0_84 = arith.constant 0 : index
    %58 = vector.load %arg6[%c0_83, %c0_84] : memref<128x128xbf16, #tpu.memory_space<vmem>>, vector<128x128xbf16>
    %cst_85 = arith.constant dense<0.000000e+00> : vector<1x128xf32>
    %59 = tpu.matmul %57, %58, %cst_85 {dimension_numbers = #tpu.dot_dimension_numbers<[1], [0], [0], [1], [0, 0, 1, 1], [], []>} : vector<1x128xbf16>, vector<128x128xbf16>, vector<1x128xf32> -> vector<1x128xf32>
    %c0_86 = arith.constant 0 : index
    %c0_87 = arith.constant 0 : index
    %60 = vector.load %arg7[%c0_86, %c0_87] : memref<1x128xf32, #tpu.memory_space<vmem>>, vector<1x128xf32>
    %61 = arith.addf %59, %60 : vector<1x128xf32>
    %62 = vector.shape_cast %61 : vector<1x128xf32> to vector<1x1x128xf32>
    %c0_88 = arith.constant 0 : index
    %c0_89 = arith.constant 0 : index
    %c0_90 = arith.constant 0 : index
    %63 = vector.load %arg8[%c0_88, %c0_89, %c0_90] : memref<1x1x128xf32, #tpu.memory_space<vmem>>, vector<1x1x128xf32>
    tpu.vector_store %arg8[%c0_88, %c0_89, %c0_90], %62 {strides = array<i32>} : memref<1x1x128xf32, #tpu.memory_space<vmem>>, vector<1x1x128xf32>,
    return
  }
  func.func @transform_0(%arg0: i32) -> (i32, i32, i32) {
    %c0_i32 = arith.constant 0 : i32
    %c0_i32_0 = arith.constant 0 : i32
    %c0_i32_1 = arith.constant 0 : i32
    return %arg0, %c0_i32, %c0_i32_0 : i32, i32, i32
  }
  func.func @transform_1(%arg0: i32) -> (i32, i32) {
    %c0_i32 = arith.constant 0 : i32
    %c0_i32_0 = arith.constant 0 : i32
    %c0_i32_1 = arith.constant 0 : i32
    return %c0_i32, %c0_i32_0 : i32, i32
  }
  func.func @transform_2(%arg0: i32) -> (i32, i32) {
    %c0_i32 = arith.constant 0 : i32
    %c0_i32_0 = arith.constant 0 : i32
    %c0_i32_1 = arith.constant 0 : i32
    return %c0_i32, %c0_i32_0 : i32, i32
  }
  func.func @transform_3(%arg0: i32) -> (i32, i32) {
    %c0_i32 = arith.constant 0 : i32
    %c0_i32_0 = arith.constant 0 : i32
    %c0_i32_1 = arith.constant 0 : i32
    return %c0_i32, %c0_i32_0 : i32, i32
  }
  func.func @transform_4(%arg0: i32) -> (i32, i32) {
    %c0_i32 = arith.constant 0 : i32
    %c0_i32_0 = arith.constant 0 : i32
    %c0_i32_1 = arith.constant 0 : i32
    return %c0_i32, %c0_i32_0 : i32, i32
  }
  func.func @transform_5(%arg0: i32) -> (i32, i32) {
    %c0_i32 = arith.constant 0 : i32
    %c0_i32_0 = arith.constant 0 : i32
    %c0_i32_1 = arith.constant 0 : i32
    return %c0_i32, %c0_i32_0 : i32, i32
  }
  func.func @transform_6(%arg0: i32) -> (i32, i32) {
    %c0_i32 = arith.constant 0 : i32
    %c0_i32_0 = arith.constant 0 : i32
    %c0_i32_1 = arith.constant 0 : i32
    return %c0_i32, %c0_i32_0 : i32, i32
  }
  func.func @transform_7(%arg0: i32) -> (i32, i32, i32) {
    %c0_i32 = arith.constant 0 : i32
    %c0_i32_0 = arith.constant 0 : i32
    %c0_i32_1 = arith.constant 0 : i32
    return %arg0, %c0_i32, %c0_i32_0 : i32, i32, i32
  }
}

</mosaic_0001>

<llo_original>
// kernel: simple_cnn.1
$region0: #{simple_cnn.1}
  #allocation0 [shape = 'u32[]', space=smem, size = 0x4, offset = 0x4, fixed_abs, tag = 'smem constant byte address 0x4 - core index']
  #allocation1 [shape = 'u32[144,128]{1,0:T(1,128)}', space=vmem, size = 0x12000, scoped, tag = 'internal scratch']
  #allocation2 [shape = 'bf16[1,18,18,64]{3,2,1,0:T(8,128)(2,1)}', space=vmem, size = 0x1b000, scoped, tag = 'scratch operand']
  #allocation3 [shape = 'bf16[256,576]{1,0:T(8,128)(2,1)}', space=vmem, size = 0x50000, scoped, tag = 'scratch operand']
  %s0 = inlined_call_operand.vmem [shape: bf16[2,256,27], index: 0, kind: input, shape index: {}]
  %s1 = inlined_call_operand.vmem [shape: bf16[27,64], index: 1, kind: input, shape index: {}]
  %s2 = inlined_call_operand.vmem [shape: f32[1,64], index: 2, kind: input, shape index: {}]
  %s3 = inlined_call_operand.vmem [shape: bf16[576,128], index: 3, kind: input, shape index: {}]
  %s4 = inlined_call_operand.vmem [shape: f32[1,128], index: 4, kind: input, shape index: {}]
  %s5 = inlined_call_operand.vmem [shape: bf16[128,128], index: 5, kind: input, shape index: {}]
  %s6 = inlined_call_operand.vmem [shape: f32[1,128], index: 6, kind: input, shape index: {}]
  %s7 = inlined_call_operand.hbm [shape: f32[2,1,128], index: 7, kind: output, shape index: {}]
  %s8 = sld [smem:[#allocation0]]
  $region61: #{simple_cnn.1} parent=0
    _
  %s10 = ssub.s32 1, %s8
  %s11 = scalar_select 0, %s10, %s8
  $region1: #{simple_cnn.1} parent=0
    #allocation4 [shape = 'u8[1024]{0}', space=vmem, size = 0x400, scoped, tag = 'output window, operand 0']
    #allocation5 [shape = 's32[2]{0}', space=sflag, size = 0x8, scoped, tag = 'scoped memory for simple_cnn.1']
    %12 = vsyncpa [#allocation5], 0
    %s13 = scalar_lea.sflag [#allocation5], 1
    %14 = vsyncpa %s13, 0
    loop: start=0, step=1, limit=4
    $region2: #{simple_cnn.1} parent=1 // loop_pre_header
      _
    $region3: #{simple_cnn.1} parent=1 // loop_header
      %s16 = sphi 0, %s20
      %p17 = scmp.ge.s32.totalorder %s16, 4
      %s26 = sphi 0, %s28
      %s29 = sphi 0, %s26
      %s30 = sphi 0, %s29
      %s46 = sphi 0, %s30
      %s50 = sphi 0, %s50
      %s52 = sphi 0, %s50
      %s53 = sphi 0, %s52
      %s67 = sphi 0, %s53
      %s71 = sphi 0, %s71
      %s73 = sphi 0, %s71
      %s74 = sphi 0, %s73
      %s88 = sphi 0, %s74
      %s92 = sphi 0, %s92
      %s94 = sphi 0, %s92
      %s95 = sphi 0, %s94
      %s109 = sphi 0, %s95
      %s113 = sphi 0, %s113
      %s115 = sphi 0, %s113
      %s116 = sphi 0, %s115
      %s130 = sphi 0, %s116
      %s134 = sphi 0, %s134
      %s136 = sphi 0, %s134
      %s137 = sphi 0, %s136
      %s151 = sphi 0, %s137
      %s155 = sphi 0, %s155
      %s157 = sphi 0, %s155
      %s158 = sphi 0, %s157
      %s172 = sphi 0, %s158
      %s178 = sphi 0, %s180
      %s181 = sphi 0, %s178
      %s182 = sphi 0, %s181
      %s198 = sphi 0, %s182
    $region4: #{simple_cnn.1} parent=1 // loop_header_branch
      %19 = sbr.rel (%p17) target = $region8
    $region5: #{simple_cnn.1} parent=1 // loop_body
      %s21 = ssub.s32 %s16, 1
      %s22 = ssub.s32 %s16, 2
      %s23 = sadd.s32 %s16, 1
      %s24 = ssub.s32 %s16, %s23
      %p25 = scmp.eq.s32.totalorder %s24, 0
      %s27 = sadd.s32 %s26, 1
      %s28 = scalar_select %p25, %s26, %s27
      %p31 = pneg %p25
      %p32 = scmp.eq.s32.totalorder %s16, 1
      %p33 = por %p31, %p32
      %p34 = scmp.ne.s32.totalorder %s26, %s29
      %p35 = scmp.eq.s32.totalorder %s16, 0
      %p36 = por %p34, %p35
      %p37 = scmp.ne.s32.totalorder %s26, %s29
      %p38 = scmp.eq.s32.totalorder %s21, 1
      %p39 = por %p37, %p38
      %p40 = scmp.ne.s32.totalorder %s29, %s30
      %p41 = scmp.eq.s32.totalorder %s21, 0
      %p42 = por %p40, %p41
      %p43 = scmp.ne.s32.totalorder %s29, %s30
      %p44 = scmp.eq.s32.totalorder %s22, 1
      %p45 = por %p43, %p44
      %p47 = scmp.ne.s32.totalorder %s30, %s46
      %p48 = scmp.eq.s32.totalorder %s22, 0
      %p49 = por %p47, %p48
      %s51 = sadd.s32 %s50, 1
      %p54 = scmp.eq.s32.totalorder %s16, 1
      %p55 = scmp.ne.s32.totalorder %s50, %s52
      %p56 = scmp.eq.s32.totalorder %s16, 0
      %p57 = por %p55, %p56
      %p58 = scmp.ne.s32.totalorder %s50, %s52
      %p59 = scmp.eq.s32.totalorder %s21, 1
      %p60 = por %p58, %p59
      %p61 = scmp.ne.s32.totalorder %s52, %s53
      %p62 = scmp.eq.s32.totalorder %s21, 0
      %p63 = por %p61, %p62
      %p64 = scmp.ne.s32.totalorder %s52, %s53
      %p65 = scmp.eq.s32.totalorder %s22, 1
      %p66 = por %p64, %p65
      %p68 = scmp.ne.s32.totalorder %s53, %s67
      %p69 = scmp.eq.s32.totalorder %s22, 0
      %p70 = por %p68, %p69
      %s72 = sadd.s32 %s71, 1
      %p75 = scmp.eq.s32.totalorder %s16, 1
      %p76 = scmp.ne.s32.totalorder %s71, %s73
      %p77 = scmp.eq.s32.totalorder %s16, 0
      %p78 = por %p76, %p77
      %p79 = scmp.ne.s32.totalorder %s71, %s73
      %p80 = scmp.eq.s32.totalorder %s21, 1
      %p81 = por %p79, %p80
      %p82 = scmp.ne.s32.totalorder %s73, %s74
      %p83 = scmp.eq.s32.totalorder %s21, 0
      %p84 = por %p82, %p83
      %p85 = scmp.ne.s32.totalorder %s73, %s74
      %p86 = scmp.eq.s32.totalorder %s22, 1
      %p87 = por %p85, %p86
      %p89 = scmp.ne.s32.totalorder %s74, %s88
      %p90 = scmp.eq.s32.totalorder %s22, 0
      %p91 = por %p89, %p90
      %s93 = sadd.s32 %s92, 1
      %p96 = scmp.eq.s32.totalorder %s16, 1
      %p97 = scmp.ne.s32.totalorder %s92, %s94
      %p98 = scmp.eq.s32.totalorder %s16, 0
      %p99 = por %p97, %p98
      %p100 = scmp.ne.s32.totalorder %s92, %s94
      %p101 = scmp.eq.s32.totalorder %s21, 1
      %p102 = por %p100, %p101
      %p103 = scmp.ne.s32.totalorder %s94, %s95
      %p104 = scmp.eq.s32.totalorder %s21, 0
      %p105 = por %p103, %p104
      %p106 = scmp.ne.s32.totalorder %s94, %s95
      %p107 = scmp.eq.s32.totalorder %s22, 1
      %p108 = por %p106, %p107
      %p110 = scmp.ne.s32.totalorder %s95, %s109
      %p111 = scmp.eq.s32.totalorder %s22, 0
      %p112 = por %p110, %p111
      %s114 = sadd.s32 %s113, 1
      %p117 = scmp.eq.s32.totalorder %s16, 1
      %p118 = scmp.ne.s32.totalorder %s113, %s115
      %p119 = scmp.eq.s32.totalorder %s16, 0
      %p120 = por %p118, %p119
      %p121 = scmp.ne.s32.totalorder %s113, %s115
      %p122 = scmp.eq.s32.totalorder %s21, 1
      %p123 = por %p121, %p122
      %p124 = scmp.ne.s32.totalorder %s115, %s116
      %p125 = scmp.eq.s32.totalorder %s21, 0
      %p126 = por %p124, %p125
      %p127 = scmp.ne.s32.totalorder %s115, %s116
      %p128 = scmp.eq.s32.totalorder %s22, 1
      %p129 = por %p127, %p128
      %p131 = scmp.ne.s32.totalorder %s116, %s130
      %p132 = scmp.eq.s32.totalorder %s22, 0
      %p133 = por %p131, %p132
      %s135 = sadd.s32 %s134, 1
      %p138 = scmp.eq.s32.totalorder %s16, 1
      %p139 = scmp.ne.s32.totalorder %s134, %s136
      %p140 = scmp.eq.s32.totalorder %s16, 0
      %p141 = por %p139, %p140
      %p142 = scmp.ne.s32.totalorder %s134, %s136
      %p143 = scmp.eq.s32.totalorder %s21, 1
      %p144 = por %p142, %p143
      %p145 = scmp.ne.s32.totalorder %s136, %s137
      %p146 = scmp.eq.s32.totalorder %s21, 0
      %p147 = por %p145, %p146
      %p148 = scmp.ne.s32.totalorder %s136, %s137
      %p149 = scmp.eq.s32.totalorder %s22, 1
      %p150 = por %p148, %p149
      %p152 = scmp.ne.s32.totalorder %s137, %s151
      %p153 = scmp.eq.s32.totalorder %s22, 0
      %p154 = por %p152, %p153
      %s156 = sadd.s32 %s155, 1
      %p159 = scmp.eq.s32.totalorder %s16, 1
      %p160 = scmp.ne.s32.totalorder %s155, %s157
      %p161 = scmp.eq.s32.totalorder %s16, 0
      %p162 = por %p160, %p161
      %p163 = scmp.ne.s32.totalorder %s155, %s157
      %p164 = scmp.eq.s32.totalorder %s21, 1
      %p165 = por %p163, %p164
      %p166 = scmp.ne.s32.totalorder %s157, %s158
      %p167 = scmp.eq.s32.totalorder %s21, 0
      %p168 = por %p166, %p167
      %p169 = scmp.ne.s32.totalorder %s157, %s158
      %p170 = scmp.eq.s32.totalorder %s22, 1
      %p171 = por %p169, %p170
      %p173 = scmp.ne.s32.totalorder %s158, %s172
      %p174 = scmp.eq.s32.totalorder %s22, 0
      %p175 = por %p173, %p174
      %s176 = ssub.s32 %s16, %s23
      %p177 = scmp.eq.s32.totalorder %s176, 0
      %s179 = sadd.s32 %s178, 1
      %s180 = scalar_select %p177, %s178, %s179
      %p183 = pneg %p177
      %p184 = scmp.eq.s32.totalorder %s16, 1
      %p185 = por %p183, %p184
      %p186 = scmp.ne.s32.totalorder %s178, %s181
      %p187 = scmp.eq.s32.totalorder %s16, 0
      %p188 = por %p186, %p187
      %p189 = scmp.ne.s32.totalorder %s178, %s181
      %p190 = scmp.eq.s32.totalorder %s21, 1
      %p191 = por %p189, %p190
      %p192 = scmp.ne.s32.totalorder %s181, %s182
      %p193 = scmp.eq.s32.totalorder %s21, 0
      %p194 = por %p192, %p193
      %p195 = scmp.ne.s32.totalorder %s181, %s182
      %p196 = scmp.eq.s32.totalorder %s22, 1
      %p197 = por %p195, %p196
      %p199 = scmp.ne.s32.totalorder %s182, %s198
      %p200 = scmp.eq.s32.totalorder %s22, 0
      %p201 = por %p199, %p200
      %p202 = scmp.le.s32.totalorder 1, %s16
      %p203 = scmp.lt.s32.totalorder %s16, 3
      %p204 = pnand %p202, %p203
      %p205 = pneg %p204
      // Predicated region
      $region9: #{simple_cnn.1} parent=5 // pred_check
        _
      $region10: #{simple_cnn.1} parent=5 // pred_check_branch
        %207 = sbr.rel (%p204) target = $region12
      $region11: #{simple_cnn.1} parent=5 // pred_region
        %s208 = ssub.s32 %s16, 1
        // Predicated region
        $region13: #{simple_cnn.1} parent=11 // pred_check
          %p209 = pneg %p63
        $region14: #{simple_cnn.1} parent=11 // pred_check_branch
          %211 = sbr.rel (%p209) target = $region16
        $region15: #{simple_cnn.1} parent=11 // pred_region
          _
        $region16: #{simple_cnn.1} parent=11 // pred_fallthru
          _
        // Predicated region
        $region17: #{simple_cnn.1} parent=11 // pred_check
          %p212 = pneg %p84
        $region18: #{simple_cnn.1} parent=11 // pred_check_branch
          %214 = sbr.rel (%p212) target = $region20
        $region19: #{simple_cnn.1} parent=11 // pred_region
          _
        $region20: #{simple_cnn.1} parent=11 // pred_fallthru
          _
        // Predicated region
        $region21: #{simple_cnn.1} parent=11 // pred_check
          %p215 = pneg %p105
        $region22: #{simple_cnn.1} parent=11 // pred_check_branch
          %217 = sbr.rel (%p215) target = $region24
        $region23: #{simple_cnn.1} parent=11 // pred_region
          _
        $region24: #{simple_cnn.1} parent=11 // pred_fallthru
          _
        // Predicated region
        $region25: #{simple_cnn.1} parent=11 // pred_check
          %p218 = pneg %p126
        $region26: #{simple_cnn.1} parent=11 // pred_check_branch
          %220 = sbr.rel (%p218) target = $region28
        $region27: #{simple_cnn.1} parent=11 // pred_region
          _
        $region28: #{simple_cnn.1} parent=11 // pred_fallthru
          _
        // Predicated region
        $region29: #{simple_cnn.1} parent=11 // pred_check
          %p221 = pneg %p147
        $region30: #{simple_cnn.1} parent=11 // pred_check_branch
          %223 = sbr.rel (%p221) target = $region32
        $region31: #{simple_cnn.1} parent=11 // pred_region
          _
        $region32: #{simple_cnn.1} parent=11 // pred_fallthru
          _
        // Predicated region
        $region33: #{simple_cnn.1} parent=11 // pred_check
          %p224 = pneg %p168
        $region34: #{simple_cnn.1} parent=11 // pred_check_branch
          %226 = sbr.rel (%p224) target = $region36
        $region35: #{simple_cnn.1} parent=11 // pred_region
          _
        $region36: #{simple_cnn.1} parent=11 // pred_fallthru
          _
      $region12: #{simple_cnn.1} parent=5 // pred_fallthru
        _
      %p227 = scmp.lt.s32.totalorder %s16, 2
      // Predicated region
      $region37: #{simple_cnn.1} parent=5 // pred_check
        %p228 = pneg %p227
      $region38: #{simple_cnn.1} parent=5 // pred_check_branch
        %230 = sbr.rel (%p228) target = $region40
      $region39: #{simple_cnn.1} parent=5 // pred_region
        // Predicated region
        $region41: #{simple_cnn.1} parent=39 // pred_check
          %p231 = pneg %p36
        $region42: #{simple_cnn.1} parent=39 // pred_check_branch
          %233 = sbr.rel (%p231) target = $region44
        $region43: #{simple_cnn.1} parent=39 // pred_region
          %p234 = scmp.lt.s32.totalorder %s16, 1
          %s235 = scalar_select %p234, %s16, 1
          %s236 = smul.addr %s235, 32
          %s237 = smul.addr %s236, 4
          %s238 = scalar_lea.vmem %s0, %s237
        $region44: #{simple_cnn.1} parent=39 // pred_fallthru
          _
      $region40: #{simple_cnn.1} parent=5 // pred_fallthru
        _
      %p239 = scmp.le.s32.totalorder 1, %s16
      %p240 = scmp.lt.s32.totalorder %s16, 3
      %p241 = pnand %p239, %p240
      %p242 = pneg %p241
      // Predicated region
      $region45: #{simple_cnn.1} parent=5 // pred_check
        _
      $region46: #{simple_cnn.1} parent=5 // pred_check_branch
        %244 = sbr.rel (%p241) target = $region48
      $region47: #{simple_cnn.1} parent=5 // pred_region
        %s245 = ssub.s32 %s16, 1
        %p246 = scmp.lt.s32.totalorder %s21, 1
        %s247 = scalar_select %p246, %s21, 1
        %s248 = smul.addr %s247, 32
        %s249 = smul.addr %s248, 4
        %s250 = scalar_lea.vmem %s0, %s249
        %p251 = pneg %p42
        %p252 = pneg %p39
        %p253 = pneg %p63
        %p254 = pneg %p60
        %p255 = pneg %p84
        %p256 = pneg %p81
        %p257 = pneg %p105
        %p258 = pneg %p102
        %p259 = pneg %p126
        %p260 = pneg %p123
        %p261 = pneg %p147
        %p262 = pneg %p144
        %p263 = pneg %p168
        %p264 = pneg %p165
        %p265 = pneg %p194
        %p266 = pneg %p191
        %s267 = sand.u32 %s181, 1
        %s268 = scalar_lea.sflag [#allocation5], %s267
        %s269 = sand.u32 %s181, 1
        %s270 = scalar_lea.vmem [#allocation4], %s269
        %p271 = scmp.lt.s32.totalorder %s21, 1
        %s272 = scalar_select %p271, %s21, 1
        %s273 = smul.addr %s272, 32
        %s274 = smul.addr %s273, 4
        %s275 = scalar_lea.vmem %s0, %s274
        %v277 = vld [vmem:[%s275] sm:$0xf]
        %v278 = vld [vmem:[%s275 + $0x4] sm:$0xf]
        %v279 = vld [vmem:[%s275 + $0x8] sm:$0xf]
        %v280 = vld [vmem:[%s275 + $0xc] sm:$0xf]
        %v281 = vld [vmem:[%s275 + $0x10] sm:$0xf]
        %v282 = vld [vmem:[%s275 + $0x14] sm:$0xf]
        %v283 = vld [vmem:[%s275 + $0x18] sm:$0xf]
        %v284 = vld [vmem:[%s275 + $0x1c] sm:$0xf]
        %v285 = vld [vmem:[%s275 + $0x20] sm:$0xf]
        %v286 = vld [vmem:[%s275 + $0x24] sm:$0xf]
        %v287 = vld [vmem:[%s275 + $0x28] sm:$0xf]
        %v288 = vld [vmem:[%s275 + $0x2c] sm:$0xf]
        %v289 = vld [vmem:[%s275 + $0x30] sm:$0xf]
        %v290 = vld [vmem:[%s275 + $0x34] sm:$0xf]
        %v291 = vld [vmem:[%s275 + $0x38] sm:$0xf]
        %v292 = vld [vmem:[%s275 + $0x3c] sm:$0xf]
        %v293 = vld [vmem:[%s275 + $0x40] sm:$0xf]
        %v294 = vld [vmem:[%s275 + $0x44] sm:$0xf]
        %v295 = vld [vmem:[%s275 + $0x48] sm:$0xf]
        %v296 = vld [vmem:[%s275 + $0x4c] sm:$0xf]
        %v297 = vld [vmem:[%s275 + $0x50] sm:$0xf]
        %v298 = vld [vmem:[%s275 + $0x54] sm:$0xf]
        %v299 = vld [vmem:[%s275 + $0x58] sm:$0xf]
        %v300 = vld [vmem:[%s275 + $0x5c] sm:$0xf]
        %v301 = vld [vmem:[%s275 + $0x60] sm:$0xf]
        %v302 = vld [vmem:[%s275 + $0x64] sm:$0xf]
        %v303 = vld [vmem:[%s275 + $0x68] sm:$0xf]
        %v304 = vld [vmem:[%s275 + $0x6c] sm:$0xf]
        %v305 = vld [vmem:[%s275 + $0x70] sm:$0xf]
        %v306 = vld [vmem:[%s275 + $0x74] sm:$0xf]
        %v307 = vld [vmem:[%s275 + $0x78] sm:$0xf]
        %v308 = vld [vmem:[%s275 + $0x7c] sm:$0xf]
        %v309 = vld [vmem:[%s1] sm:$0xf]
        %v310 = vld [vmem:[%s1 + $0x4] sm:$0xf]
        %v311 = vld [vmem:[%s1 + $0x8] sm:$0xf]
        %v312 = vld [vmem:[%s1 + $0xc] sm:$0x3]
        %v313 = vld [vmem:[%s2] sm:$0x1]
        %v315 = vlaneseq
        %v316 = vshrl.u32 %v315, 7
        %v317 = vsub.s32 0, %v316
        %v318 = vrot.slane %v313, %v317
        %v352 = vunpack.c.l.b16 %v277
        %v353 = vunpack.c.l.b16 %v278
        %v354 = vunpack.c.l.b16 %v279
        %v355 = vunpack.c.l.b16 %v280
        %v356 = vunpack.c.l.b16 %v281
        %v357 = vunpack.c.l.b16 %v282
        %v358 = vunpack.c.l.b16 %v283
        %v359 = vunpack.c.l.b16 %v284
        %v360 = vunpack.c.l.b16 %v285
        %v361 = vunpack.c.l.b16 %v286
        %v362 = vunpack.c.l.b16 %v287
        %v363 = vunpack.c.l.b16 %v288
        %v364 = vunpack.c.l.b16 %v289
        %v365 = vunpack.c.l.b16 %v290
        %v366 = vunpack.c.l.b16 %v291
        %v367 = vunpack.c.l.b16 %v292
        %v368 = vunpack.c.l.b16 %v293
        %v369 = vunpack.c.l.b16 %v294
        %v370 = vunpack.c.l.b16 %v295
        %v371 = vunpack.c.l.b16 %v296
        %v372 = vunpack.c.l.b16 %v297
        %v373 = vunpack.c.l.b16 %v298
        %v374 = vunpack.c.l.b16 %v299
        %v375 = vunpack.c.l.b16 %v300
        %v376 = vunpack.c.l.b16 %v301
        %v377 = vunpack.c.l.b16 %v302
        %v378 = vunpack.c.l.b16 %v303
        %v379 = vunpack.c.l.b16 %v304
        %v380 = vunpack.c.l.b16 %v305
        %v381 = vunpack.c.l.b16 %v306
        %v382 = vunpack.c.l.b16 %v307
        %v383 = vunpack.c.l.b16 %v308
        %v384 = vpack.c.b16 %v353, %v352
        %v385 = vpack.c.b16 %v355, %v354
        %v386 = vpack.c.b16 %v357, %v356
        %v387 = vpack.c.b16 %v359, %v358
        %v388 = vpack.c.b16 %v361, %v360
        %v389 = vpack.c.b16 %v363, %v362
        %v390 = vpack.c.b16 %v365, %v364
        %v391 = vpack.c.b16 %v367, %v366
        %v392 = vpack.c.b16 %v369, %v368
        %v393 = vpack.c.b16 %v371, %v370
        %v394 = vpack.c.b16 %v373, %v372
        %v395 = vpack.c.b16 %v375, %v374
        %v396 = vpack.c.b16 %v377, %v376
        %v397 = vpack.c.b16 %v379, %v378
        %v398 = vpack.c.b16 %v381, %v380
        %v399 = vpack.c.b16 %v383, %v382
        %v404 = vunpack.c.l.b16 %v309
        %v405 = vunpack.c.l.b16 %v310
        %v406 = vunpack.c.l.b16 %v311
        %v407 = vunpack.c.l.b16 %v312
        %v408 = vpack.c.b16 %v405, %v404
        %v409 = vpack.c.b16 %v407, %v406
        %vm411 = vcmask 220160
        %v413 = vsel %vm411, %v384, 0
        %v416 = vsel %vm411, %v385, 0
        %v419 = vsel %vm411, %v386, 0
        %v422 = vsel %vm411, %v387, 0
        %v425 = vsel %vm411, %v388, 0
        %v428 = vsel %vm411, %v389, 0
        %v431 = vsel %vm411, %v390, 0
        %v434 = vsel %vm411, %v391, 0
        %v437 = vsel %vm411, %v392, 0
        %v440 = vsel %vm411, %v393, 0
        %v443 = vsel %vm411, %v394, 0
        %v446 = vsel %vm411, %v395, 0
        %v449 = vsel %vm411, %v396, 0
        %v452 = vsel %vm411, %v397, 0
        %v455 = vsel %vm411, %v398, 0
        %v458 = vsel %vm411, %v399, 0
        %vm460 = vcmask 1044480
        %vm461 = vcmask 1045504
        %v462 = vsel %vm460, 4294967295, 65535
        %v463 = vsel %vm461, %v462, 0
        %v465 = vand.u32 %v409, %v463
        %467 = vmatprep.subr.bf16.mxu0 0
        %468 = vmatpush1.bf16.msra.mxu0 0
        %469 = vmatprep.subr.bf16.mxu0 0
        %470 = vmatpush1.bf16.msra.mxu0 0
        %471 = vmatprep.subr.bf16.mxu0 0
        %472 = vmatpush1.bf16.msra.mxu0 0
        %473 = vmatprep.subr.bf16.mxu0 0
        %474 = vmatpush1.bf16.msra.mxu0 0
        %475 = vmatprep.subr.bf16.mxu0 0
        %476 = vmatpush1.bf16.msra.mxu0 0
        %477 = vmatprep.subr.bf16.mxu0 0
        %478 = vmatpush1.bf16.msra.mxu0 0
        %479 = vmatprep.subr.bf16.mxu0 0
        %480 = vmatpush1.bf16.msra.mxu0 %v465
        %481 = vmatprep.subr.bf16.mxu0 0
        %482 = vmatpush1.bf16.msra.mxu0 %v408
        %483 = vmatprep.subr.bf16.mxu0 0
        %484 = vmatpush2.bf16.msra.mxu0 0
        %485 = vmatprep.subr.bf16.mxu0 0
        %486 = vmatpush2.bf16.msra.mxu0 0
        %487 = vmatprep.subr.bf16.mxu0 0
        %488 = vmatpush2.bf16.msra.mxu0 0
        %489 = vmatprep.subr.bf16.mxu0 0
        %490 = vmatpush2.bf16.msra.mxu0 0
        %491 = vmatprep.subr.bf16.mxu0 0
        %492 = vmatpush2.bf16.msra.mxu0 0
        %493 = vmatprep.subr.bf16.mxu0 0
        %494 = vmatpush2.bf16.msra.mxu0 0
        %495 = vmatprep.subr.bf16.mxu0 0
        %496 = vmatpush2.bf16.msra.mxu0 0
        %497 = vmatprep.subr.bf16.mxu0 0
        %498 = vmatpush2.bf16.msra.mxu0 0
        %499 = vmatprep.mubr.bf16.mxu0 0
        %500 = vmatmul.mubr.bf16.gmra.mxu0 %v413
        %v501 = vpop.f32.mrf.mxu0
        %v502 = vadd.f32 %v318, %v501
        %v503 = vpop.f32.mrf.mxu0
        %v504 = vpop.f32.mrf.mxu0
        %v505 = vadd.f32 %v318, %v504
        %v506 = vpop.f32.mrf.mxu0
        %507 = vmatprep.mubr.bf16.mxu0 0
        %508 = vmatmul.mubr.bf16.gmra.mxu0 %v416
        %v509 = vpop.f32.mrf.mxu0
        %v510 = vadd.f32 %v318, %v509
        %v511 = vpop.f32.mrf.mxu0
        %v512 = vpop.f32.mrf.mxu0
        %v513 = vadd.f32 %v318, %v512
        %v514 = vpop.f32.mrf.mxu0
        %515 = vmatprep.mubr.bf16.mxu0 0
        %516 = vmatmul.mubr.bf16.gmra.mxu0 %v419
        %v517 = vpop.f32.mrf.mxu0
        %v518 = vadd.f32 %v318, %v517
        %v519 = vpop.f32.mrf.mxu0
        %v520 = vpop.f32.mrf.mxu0
        %v521 = vadd.f32 %v318, %v520
        %v522 = vpop.f32.mrf.mxu0
        %523 = vmatprep.mubr.bf16.mxu0 0
        %524 = vmatmul.mubr.bf16.gmra.mxu0 %v422
        %v525 = vpop.f32.mrf.mxu0
        %v526 = vadd.f32 %v318, %v525
        %v527 = vpop.f32.mrf.mxu0
        %v528 = vpop.f32.mrf.mxu0
        %v529 = vadd.f32 %v318, %v528
        %v530 = vpop.f32.mrf.mxu0
        %531 = vmatprep.mubr.bf16.mxu0 0
        %532 = vmatmul.mubr.bf16.gmra.mxu0 %v425
        %v533 = vpop.f32.mrf.mxu0
        %v534 = vadd.f32 %v318, %v533
        %v535 = vpop.f32.mrf.mxu0
        %v536 = vpop.f32.mrf.mxu0
        %v537 = vadd.f32 %v318, %v536
        %v538 = vpop.f32.mrf.mxu0
        %539 = vmatprep.mubr.bf16.mxu0 0
        %540 = vmatmul.mubr.bf16.gmra.mxu0 %v428
        %v541 = vpop.f32.mrf.mxu0
        %v542 = vadd.f32 %v318, %v541
        %v543 = vpop.f32.mrf.mxu0
        %v544 = vpop.f32.mrf.mxu0
        %v545 = vadd.f32 %v318, %v544
        %v546 = vpop.f32.mrf.mxu0
        %547 = vmatprep.mubr.bf16.mxu0 0
        %548 = vmatmul.mubr.bf16.gmra.mxu0 %v431
        %v549 = vpop.f32.mrf.mxu0
        %v550 = vadd.f32 %v318, %v549
        %v551 = vpop.f32.mrf.mxu0
        %v552 = vpop.f32.mrf.mxu0
        %v553 = vadd.f32 %v318, %v552
        %v554 = vpop.f32.mrf.mxu0
        %555 = vmatprep.mubr.bf16.mxu0 0
        %556 = vmatmul.mubr.bf16.gmra.mxu0 %v434
        %v557 = vpop.f32.mrf.mxu0
        %v558 = vadd.f32 %v318, %v557
        %v559 = vpop.f32.mrf.mxu0
        %v560 = vpop.f32.mrf.mxu0
        %v561 = vadd.f32 %v318, %v560
        %v562 = vpop.f32.mrf.mxu0
        %563 = vmatprep.mubr.bf16.mxu0 0
        %564 = vmatmul.mubr.bf16.gmra.mxu0 %v437
        %v565 = vpop.f32.mrf.mxu0
        %v566 = vadd.f32 %v318, %v565
        %v567 = vpop.f32.mrf.mxu0
        %v568 = vpop.f32.mrf.mxu0
        %v569 = vadd.f32 %v318, %v568
        %v570 = vpop.f32.mrf.mxu0
        %571 = vmatprep.mubr.bf16.mxu0 0
        %572 = vmatmul.mubr.bf16.gmra.mxu0 %v440
        %v573 = vpop.f32.mrf.mxu0
        %v574 = vadd.f32 %v318, %v573
        %v575 = vpop.f32.mrf.mxu0
        %v576 = vpop.f32.mrf.mxu0
        %v577 = vadd.f32 %v318, %v576
        %v578 = vpop.f32.mrf.mxu0
        %579 = vmatprep.mubr.bf16.mxu0 0
        %580 = vmatmul.mubr.bf16.gmra.mxu0 %v443
        %v581 = vpop.f32.mrf.mxu0
        %v582 = vadd.f32 %v318, %v581
        %v583 = vpop.f32.mrf.mxu0
        %v584 = vpop.f32.mrf.mxu0
        %v585 = vadd.f32 %v318, %v584
        %v586 = vpop.f32.mrf.mxu0
        %587 = vmatprep.mubr.bf16.mxu0 0
        %588 = vmatmul.mubr.bf16.gmra.mxu0 %v446
        %v589 = vpop.f32.mrf.mxu0
        %v590 = vadd.f32 %v318, %v589
        %v591 = vpop.f32.mrf.mxu0
        %v592 = vpop.f32.mrf.mxu0
        %v593 = vadd.f32 %v318, %v592
        %v594 = vpop.f32.mrf.mxu0
        %595 = vmatprep.mubr.bf16.mxu0 0
        %596 = vmatmul.mubr.bf16.gmra.mxu0 %v449
        %v597 = vpop.f32.mrf.mxu0
        %v598 = vadd.f32 %v318, %v597
        %v599 = vpop.f32.mrf.mxu0
        %v600 = vpop.f32.mrf.mxu0
        %v601 = vadd.f32 %v318, %v600
        %v602 = vpop.f32.mrf.mxu0
        %603 = vmatprep.mubr.bf16.mxu0 0
        %604 = vmatmul.mubr.bf16.gmra.mxu0 %v452
        %v605 = vpop.f32.mrf.mxu0
        %v606 = vadd.f32 %v318, %v605
        %v607 = vpop.f32.mrf.mxu0
        %v608 = vpop.f32.mrf.mxu0
        %v609 = vadd.f32 %v318, %v608
        %v610 = vpop.f32.mrf.mxu0
        %611 = vmatprep.mubr.bf16.mxu0 0
        %612 = vmatmul.mubr.bf16.gmra.mxu0 %v455
        %v613 = vpop.f32.mrf.mxu0
        %v614 = vadd.f32 %v318, %v613
        %v615 = vpop.f32.mrf.mxu0
        %v616 = vpop.f32.mrf.mxu0
        %v617 = vadd.f32 %v318, %v616
        %v618 = vpop.f32.mrf.mxu0
        %619 = vmatprep.mubr.bf16.mxu0 0
        %620 = vmatmul.mubr.bf16.gmra.mxu0 %v458
        %v621 = vpop.f32.mrf.mxu0
        %v622 = vadd.f32 %v318, %v621
        %v623 = vpop.f32.mrf.mxu0
        %v624 = vpop.f32.mrf.mxu0
        %v625 = vadd.f32 %v318, %v624
        %v626 = vpop.f32.mrf.mxu0
        %627 = vdwg.mxu0
        %v628 = vmax.f32 %v502, 0.0
        %v629 = vmax.f32 %v505, 0.0
        %v630 = vmax.f32 %v510, 0.0
        %v631 = vmax.f32 %v513, 0.0
        %v632 = vmax.f32 %v518, 0.0
        %v633 = vmax.f32 %v521, 0.0
        %v634 = vmax.f32 %v526, 0.0
        %v635 = vmax.f32 %v529, 0.0
        %v636 = vmax.f32 %v534, 0.0
        %v637 = vmax.f32 %v537, 0.0
        %v638 = vmax.f32 %v542, 0.0
        %v639 = vmax.f32 %v545, 0.0
        %v640 = vmax.f32 %v550, 0.0
        %v641 = vmax.f32 %v553, 0.0
        %v642 = vmax.f32 %v558, 0.0
        %v643 = vmax.f32 %v561, 0.0
        %v644 = vmax.f32 %v566, 0.0
        %v645 = vmax.f32 %v569, 0.0
        %v646 = vmax.f32 %v574, 0.0
        %v647 = vmax.f32 %v577, 0.0
        %v648 = vmax.f32 %v582, 0.0
        %v649 = vmax.f32 %v585, 0.0
        %v650 = vmax.f32 %v590, 0.0
        %v651 = vmax.f32 %v593, 0.0
        %v652 = vmax.f32 %v598, 0.0
        %v653 = vmax.f32 %v601, 0.0
        %v654 = vmax.f32 %v606, 0.0
        %v655 = vmax.f32 %v609, 0.0
        %v656 = vmax.f32 %v614, 0.0
        %v657 = vmax.f32 %v617, 0.0
        %v658 = vmax.f32 %v622, 0.0
        %v659 = vmax.f32 %v625, 0.0
        %v660 = vpack.c.bf16 %v629, %v628
        %v661 = vpack.c.bf16 %v631, %v630
        %v662 = vpack.c.bf16 %v633, %v632
        %v663 = vpack.c.bf16 %v635, %v634
        %v664 = vpack.c.bf16 %v637, %v636
        %v665 = vpack.c.bf16 %v639, %v638
        %v666 = vpack.c.bf16 %v641, %v640
        %v667 = vpack.c.bf16 %v643, %v642
        %v668 = vpack.c.bf16 %v645, %v644
        %v669 = vpack.c.bf16 %v647, %v646
        %v670 = vpack.c.bf16 %v649, %v648
        %v671 = vpack.c.bf16 %v651, %v650
        %v672 = vpack.c.bf16 %v653, %v652
        %v673 = vpack.c.bf16 %v655, %v654
        %v674 = vpack.c.bf16 %v657, %v656
        %v675 = vpack.c.bf16 %v659, %v658
        %vm676 = vcmask 519168
        %677 = vst.msk [vmem:[#allocation2] sm:$0xf] %vm676, 0
        %678 = vst.msk [vmem:[#allocation2 + $0x4] sm:$0xf] %vm676, 0
        %vm679 = vcmask 516096
        %680 = vst.msk [vmem:[#allocation2 + $0x8] sm:$0x1] %vm679, 0
        %s681 = scalar_lea.vmem [#allocation2], 204
        %682 = vst.msk [vmem:[%s681] sm:$0xf] %vm676, 0
        %683 = vst.msk [vmem:[%s681 + $0x4] sm:$0xf] %vm676, 0
        %684 = vst.msk [vmem:[%s681 + $0x8] sm:$0x1] %vm679, 0
        %s685 = scalar_lea.vmem [#allocation2], 12
        %vm686 = vcmask 516096
        %vm687 = vsmask.f32 256
        %vm688 = vmand %vm686, %vm687
        %v689 = vld [vmem:[%s685] sm:$0x1]
        %v690 = vsel %vm688, 0, %v689
        %691 = vst [vmem:[%s685] sm:$0x1] %v690
        %v692 = vld [vmem:[%s685 + $0xc] sm:$0x1]
        %v693 = vsel %vm688, 0, %v692
        %694 = vst [vmem:[%s685 + $0xc] sm:$0x1] %v693
        %v695 = vld [vmem:[%s685 + $0x18] sm:$0x1]
        %v696 = vsel %vm688, 0, %v695
        %697 = vst [vmem:[%s685 + $0x18] sm:$0x1] %v696
        %v698 = vld [vmem:[%s685 + $0x24] sm:$0x1]
        %v699 = vsel %vm688, 0, %v698
        %700 = vst [vmem:[%s685 + $0x24] sm:$0x1] %v699
        %v701 = vld [vmem:[%s685 + $0x30] sm:$0x1]
        %v702 = vsel %vm688, 0, %v701
        %703 = vst [vmem:[%s685 + $0x30] sm:$0x1] %v702
        %v704 = vld [vmem:[%s685 + $0x3c] sm:$0x1]
        %v705 = vsel %vm688, 0, %v704
        %706 = vst [vmem:[%s685 + $0x3c] sm:$0x1] %v705
        %v707 = vld [vmem:[%s685 + $0x48] sm:$0x1]
        %v708 = vsel %vm688, 0, %v707
        %709 = vst [vmem:[%s685 + $0x48] sm:$0x1] %v708
        %v710 = vld [vmem:[%s685 + $0x54] sm:$0x1]
        %v711 = vsel %vm688, 0, %v710
        %712 = vst [vmem:[%s685 + $0x54] sm:$0x1] %v711
        %v713 = vld [vmem:[%s685 + $0x60] sm:$0x1]
        %v714 = vsel %vm688, 0, %v713
        %715 = vst [vmem:[%s685 + $0x60] sm:$0x1] %v714
        %v716 = vld [vmem:[%s685 + $0x6c] sm:$0x1]
        %v717 = vsel %vm688, 0, %v716
        %718 = vst [vmem:[%s685 + $0x6c] sm:$0x1] %v717
        %v719 = vld [vmem:[%s685 + $0x78] sm:$0x1]
        %v720 = vsel %vm688, 0, %v719
        %721 = vst [vmem:[%s685 + $0x78] sm:$0x1] %v720
        %v722 = vld [vmem:[%s685 + $0x84] sm:$0x1]
        %v723 = vsel %vm688, 0, %v722
        %724 = vst [vmem:[%s685 + $0x84] sm:$0x1] %v723
        %v725 = vld [vmem:[%s685 + $0x90] sm:$0x1]
        %v726 = vsel %vm688, 0, %v725
        %727 = vst [vmem:[%s685 + $0x90] sm:$0x1] %v726
        %v728 = vld [vmem:[%s685 + $0x9c] sm:$0x1]
        %v729 = vsel %vm688, 0, %v728
        %730 = vst [vmem:[%s685 + $0x9c] sm:$0x1] %v729
        %v731 = vld [vmem:[%s685 + $0xa8] sm:$0x1]
        %v732 = vsel %vm688, 0, %v731
        %733 = vst [vmem:[%s685 + $0xa8] sm:$0x1] %v732
        %v734 = vld [vmem:[%s685 + $0xb4] sm:$0x1]
        %v735 = vsel %vm688, 0, %v734
        %736 = vst [vmem:[%s685 + $0xb4] sm:$0x1] %v735
        %vm737 = vsmask.f32 7938
        %vm738 = vmand %vm686, %vm737
        %v739 = vld [vmem:[%s685 + $0x8] sm:$0x1]
        %v740 = vsel %vm738, 0, %v739
        %741 = vst [vmem:[%s685 + $0x8] sm:$0x1] %v740
        %v742 = vld [vmem:[%s685 + $0x14] sm:$0x1]
        %v743 = vsel %vm738, 0, %v742
        %744 = vst [vmem:[%s685 + $0x14] sm:$0x1] %v743
        %v745 = vld [vmem:[%s685 + $0x20] sm:$0x1]
        %v746 = vsel %vm738, 0, %v745
        %747 = vst [vmem:[%s685 + $0x20] sm:$0x1] %v746
        %v748 = vld [vmem:[%s685 + $0x2c] sm:$0x1]
        %v749 = vsel %vm738, 0, %v748
        %750 = vst [vmem:[%s685 + $0x2c] sm:$0x1] %v749
        %v751 = vld [vmem:[%s685 + $0x38] sm:$0x1]
        %v752 = vsel %vm738, 0, %v751
        %753 = vst [vmem:[%s685 + $0x38] sm:$0x1] %v752
        %v754 = vld [vmem:[%s685 + $0x44] sm:$0x1]
        %v755 = vsel %vm738, 0, %v754
        %756 = vst [vmem:[%s685 + $0x44] sm:$0x1] %v755
        %v757 = vld [vmem:[%s685 + $0x50] sm:$0x1]
        %v758 = vsel %vm738, 0, %v757
        %759 = vst [vmem:[%s685 + $0x50] sm:$0x1] %v758
        %v760 = vld [vmem:[%s685 + $0x5c] sm:$0x1]
        %v761 = vsel %vm738, 0, %v760
        %762 = vst [vmem:[%s685 + $0x5c] sm:$0x1] %v761
        %v763 = vld [vmem:[%s685 + $0x68] sm:$0x1]
        %v764 = vsel %vm738, 0, %v763
        %765 = vst [vmem:[%s685 + $0x68] sm:$0x1] %v764
        %v766 = vld [vmem:[%s685 + $0x74] sm:$0x1]
        %v767 = vsel %vm738, 0, %v766
        %768 = vst [vmem:[%s685 + $0x74] sm:$0x1] %v767
        %v769 = vld [vmem:[%s685 + $0x80] sm:$0x1]
        %v770 = vsel %vm738, 0, %v769
        %771 = vst [vmem:[%s685 + $0x80] sm:$0x1] %v770
        %v772 = vld [vmem:[%s685 + $0x8c] sm:$0x1]
        %v773 = vsel %vm738, 0, %v772
        %774 = vst [vmem:[%s685 + $0x8c] sm:$0x1] %v773
        %v775 = vld [vmem:[%s685 + $0x98] sm:$0x1]
        %v776 = vsel %vm738, 0, %v775
        %777 = vst [vmem:[%s685 + $0x98] sm:$0x1] %v776
        %v778 = vld [vmem:[%s685 + $0xa4] sm:$0x1]
        %v779 = vsel %vm738, 0, %v778
        %780 = vst [vmem:[%s685 + $0xa4] sm:$0x1] %v779
        %v781 = vld [vmem:[%s685 + $0xb0] sm:$0x1]
        %v782 = vsel %vm738, 0, %v781
        %783 = vst [vmem:[%s685 + $0xb0] sm:$0x1] %v782
        %v784 = vld [vmem:[%s685 + $0xbc] sm:$0x1]
        %v785 = vsel %vm738, 0, %v784
        %786 = vst [vmem:[%s685 + $0xbc] sm:$0x1] %v785
        %v803 = vunpack.c.l.b16 %v660
        %v804 = vunpack.c.h.b16 %v660
        %v805 = vunpack.c.l.b16 %v661
        %v806 = vunpack.c.h.b16 %v661
        %v807 = vunpack.c.l.b16 %v662
        %v808 = vunpack.c.h.b16 %v662
        %v809 = vunpack.c.l.b16 %v663
        %v810 = vunpack.c.h.b16 %v663
        %v811 = vunpack.c.l.b16 %v664
        %v812 = vunpack.c.h.b16 %v664
        %v813 = vunpack.c.l.b16 %v665
        %v814 = vunpack.c.h.b16 %v665
        %v815 = vunpack.c.l.b16 %v666
        %v816 = vunpack.c.h.b16 %v666
        %v817 = vunpack.c.l.b16 %v667
        %v818 = vunpack.c.h.b16 %v667
        %v819 = vunpack.c.l.b16 %v668
        %v820 = vunpack.c.h.b16 %v668
        %v821 = vunpack.c.l.b16 %v669
        %v822 = vunpack.c.h.b16 %v669
        %v823 = vunpack.c.l.b16 %v670
        %v824 = vunpack.c.h.b16 %v670
        %v825 = vunpack.c.l.b16 %v671
        %v826 = vunpack.c.h.b16 %v671
        %v827 = vunpack.c.l.b16 %v672
        %v828 = vunpack.c.h.b16 %v672
        %v829 = vunpack.c.l.b16 %v673
        %v830 = vunpack.c.h.b16 %v673
        %v831 = vunpack.c.l.b16 %v674
        %v832 = vunpack.c.h.b16 %v674
        %v833 = vunpack.c.l.b16 %v675
        %v834 = vunpack.c.h.b16 %v675
        %v835 = vpack.c.b16 %v803, %v803
        %v836 = vpack.c.b16 %v804, %v804
        %v837 = vpack.c.b16 %v805, %v805
        %v838 = vpack.c.b16 %v806, %v806
        %v839 = vpack.c.b16 %v807, %v807
        %v840 = vpack.c.b16 %v808, %v808
        %v841 = vpack.c.b16 %v809, %v809
        %v842 = vpack.c.b16 %v810, %v810
        %v843 = vpack.c.b16 %v811, %v811
        %v844 = vpack.c.b16 %v812, %v812
        %v845 = vpack.c.b16 %v813, %v813
        %v846 = vpack.c.b16 %v814, %v814
        %v847 = vpack.c.b16 %v815, %v815
        %v848 = vpack.c.b16 %v816, %v816
        %v849 = vpack.c.b16 %v817, %v817
        %v850 = vpack.c.b16 %v818, %v818
        %v851 = vpack.c.b16 %v819, %v819
        %v852 = vpack.c.b16 %v820, %v820
        %v853 = vpack.c.b16 %v821, %v821
        %v854 = vpack.c.b16 %v822, %v822
        %v855 = vpack.c.b16 %v823, %v823
        %v856 = vpack.c.b16 %v824, %v824
        %v857 = vpack.c.b16 %v825, %v825
        %v858 = vpack.c.b16 %v826, %v826
        %v859 = vpack.c.b16 %v827, %v827
        %v860 = vpack.c.b16 %v828, %v828
        %v861 = vpack.c.b16 %v829, %v829
        %v862 = vpack.c.b16 %v830, %v830
        %v863 = vpack.c.b16 %v831, %v831
        %v864 = vpack.c.b16 %v832, %v832
        %v865 = vpack.c.b16 %v833, %v833
        %v866 = vpack.c.b16 %v834, %v834
        %vm867 = vsmask.f32 4368
        %vm868 = vmor %vm687, %vm867
        %v870 = vshrl.u32 %v835, 16
        %v872 = vrot.slane %v870, 7
        %v873 = vshll.u32 %v835, 16
        %v875 = vor.u32 %v872, %v873
        %v876 = vrot.slane %v872, 4
        %v878 = vshrl.u32 %v836, 16
        %v880 = vrot.slane %v878, 7
        %v881 = vshll.u32 %v836, 16
        %v883 = vor.u32 %v880, %v881
        %v884 = vsel %vm868, %v876, %v883
        %v885 = vrot.slane %v880, 4
        %v887 = vshrl.u32 %v837, 16
        %v889 = vrot.slane %v887, 7
        %v890 = vshll.u32 %v837, 16
        %v892 = vor.u32 %v889, %v890
        %v893 = vrot.slane %v889, 4
        %v895 = vshrl.u32 %v838, 16
        %v897 = vrot.slane %v895, 7
        %v898 = vshll.u32 %v838, 16
        %v900 = vor.u32 %v897, %v898
        %v901 = vsel %vm868, %v893, %v900
        %v902 = vrot.slane %v897, 4
        %v904 = vshrl.u32 %v839, 16
        %v906 = vrot.slane %v904, 7
        %v907 = vshll.u32 %v839, 16
        %v909 = vor.u32 %v906, %v907
        %v910 = vrot.slane %v906, 4
        %v912 = vshrl.u32 %v840, 16
        %v914 = vrot.slane %v912, 7
        %v915 = vshll.u32 %v840, 16
        %v917 = vor.u32 %v914, %v915
        %v918 = vsel %vm868, %v910, %v917
        %v919 = vrot.slane %v914, 4
        %v921 = vshrl.u32 %v841, 16
        %v923 = vrot.slane %v921, 7
        %v924 = vshll.u32 %v841, 16
        %v926 = vor.u32 %v923, %v924
        %v927 = vrot.slane %v923, 4
        %v929 = vshrl.u32 %v842, 16
        %v931 = vrot.slane %v929, 7
        %v932 = vshll.u32 %v842, 16
        %v934 = vor.u32 %v931, %v932
        %v935 = vsel %vm868, %v927, %v934
        %v936 = vrot.slane %v931, 4
        %v938 = vshrl.u32 %v843, 16
        %v940 = vrot.slane %v938, 7
        %v941 = vshll.u32 %v843, 16
        %v943 = vor.u32 %v940, %v941
        %v944 = vrot.slane %v940, 4
        %v946 = vshrl.u32 %v844, 16
        %v948 = vrot.slane %v946, 7
        %v949 = vshll.u32 %v844, 16
        %v951 = vor.u32 %v948, %v949
        %v952 = vsel %vm868, %v944, %v951
        %v953 = vrot.slane %v948, 4
        %v955 = vshrl.u32 %v845, 16
        %v957 = vrot.slane %v955, 7
        %v958 = vshll.u32 %v845, 16
        %v960 = vor.u32 %v957, %v958
        %v961 = vrot.slane %v957, 4
        %v963 = vshrl.u32 %v846, 16
        %v965 = vrot.slane %v963, 7
        %v966 = vshll.u32 %v846, 16
        %v968 = vor.u32 %v965, %v966
        %v969 = vsel %vm868, %v961, %v968
        %v970 = vrot.slane %v965, 4
        %v972 = vshrl.u32 %v847, 16
        %v974 = vrot.slane %v972, 7
        %v975 = vshll.u32 %v847, 16
        %v977 = vor.u32 %v974, %v975
        %v978 = vrot.slane %v974, 4
        %v980 = vshrl.u32 %v848, 16
        %v982 = vrot.slane %v980, 7
        %v983 = vshll.u32 %v848, 16
        %v985 = vor.u32 %v982, %v983
        %v986 = vsel %vm868, %v978, %v985
        %v987 = vrot.slane %v982, 4
        %v989 = vshrl.u32 %v849, 16
        %v991 = vrot.slane %v989, 7
        %v992 = vshll.u32 %v849, 16
        %v994 = vor.u32 %v991, %v992
        %v995 = vrot.slane %v991, 4
        %v997 = vshrl.u32 %v850, 16
        %v999 = vrot.slane %v997, 7
        %v1000 = vshll.u32 %v850, 16
        %v1002 = vor.u32 %v999, %v1000
        %v1003 = vsel %vm868, %v995, %v1002
        %v1004 = vrot.slane %v999, 4
        %v1006 = vshrl.u32 %v851, 16
        %v1008 = vrot.slane %v1006, 7
        %v1009 = vshll.u32 %v851, 16
        %v1011 = vor.u32 %v1008, %v1009
        %v1012 = vrot.slane %v1008, 4
        %v1014 = vshrl.u32 %v852, 16
        %v1016 = vrot.slane %v1014, 7
        %v1017 = vshll.u32 %v852, 16
        %v1019 = vor.u32 %v1016, %v1017
        %v1020 = vsel %vm868, %v1012, %v1019
        %v1021 = vrot.slane %v1016, 4
        %v1023 = vshrl.u32 %v853, 16
        %v1025 = vrot.slane %v1023, 7
        %v1026 = vshll.u32 %v853, 16
        %v1028 = vor.u32 %v1025, %v1026
        %v1029 = vrot.slane %v1025, 4
        %v1031 = vshrl.u32 %v854, 16
        %v1033 = vrot.slane %v1031, 7
        %v1034 = vshll.u32 %v854, 16
        %v1036 = vor.u32 %v1033, %v1034
        %v1037 = vsel %vm868, %v1029, %v1036
        %v1038 = vrot.slane %v1033, 4
        %v1040 = vshrl.u32 %v855, 16
        %v1042 = vrot.slane %v1040, 7
        %v1043 = vshll.u32 %v855, 16
        %v1045 = vor.u32 %v1042, %v1043
        %v1046 = vrot.slane %v1042, 4
        %v1048 = vshrl.u32 %v856, 16
        %v1050 = vrot.slane %v1048, 7
        %v1051 = vshll.u32 %v856, 16
        %v1053 = vor.u32 %v1050, %v1051
        %v1054 = vsel %vm868, %v1046, %v1053
        %v1055 = vrot.slane %v1050, 4
        %v1057 = vshrl.u32 %v857, 16
        %v1059 = vrot.slane %v1057, 7
        %v1060 = vshll.u32 %v857, 16
        %v1062 = vor.u32 %v1059, %v1060
        %v1063 = vrot.slane %v1059, 4
        %v1065 = vshrl.u32 %v858, 16
        %v1067 = vrot.slane %v1065, 7
        %v1068 = vshll.u32 %v858, 16
        %v1070 = vor.u32 %v1067, %v1068
        %v1071 = vsel %vm868, %v1063, %v1070
        %v1072 = vrot.slane %v1067, 4
        %v1074 = vshrl.u32 %v859, 16
        %v1076 = vrot.slane %v1074, 7
        %v1077 = vshll.u32 %v859, 16
        %v1079 = vor.u32 %v1076, %v1077
        %v1080 = vrot.slane %v1076, 4
        %v1082 = vshrl.u32 %v860, 16
        %v1084 = vrot.slane %v1082, 7
        %v1085 = vshll.u32 %v860, 16
        %v1087 = vor.u32 %v1084, %v1085
        %v1088 = vsel %vm868, %v1080, %v1087
        %v1089 = vrot.slane %v1084, 4
        %v1091 = vshrl.u32 %v861, 16
        %v1093 = vrot.slane %v1091, 7
        %v1094 = vshll.u32 %v861, 16
        %v1096 = vor.u32 %v1093, %v1094
        %v1097 = vrot.slane %v1093, 4
        %v1099 = vshrl.u32 %v862, 16
        %v1101 = vrot.slane %v1099, 7
        %v1102 = vshll.u32 %v862, 16
        %v1104 = vor.u32 %v1101, %v1102
        %v1105 = vsel %vm868, %v1097, %v1104
        %v1106 = vrot.slane %v1101, 4
        %v1108 = vshrl.u32 %v863, 16
        %v1110 = vrot.slane %v1108, 7
        %v1111 = vshll.u32 %v863, 16
        %v1113 = vor.u32 %v1110, %v1111
        %v1114 = vrot.slane %v1110, 4
        %v1116 = vshrl.u32 %v864, 16
        %v1118 = vrot.slane %v1116, 7
        %v1119 = vshll.u32 %v864, 16
        %v1121 = vor.u32 %v1118, %v1119
        %v1122 = vsel %vm868, %v1114, %v1121
        %v1123 = vrot.slane %v1118, 4
        %v1125 = vshrl.u32 %v865, 16
        %v1127 = vrot.slane %v1125, 7
        %v1128 = vshll.u32 %v865, 16
        %v1130 = vor.u32 %v1127, %v1128
        %v1131 = vrot.slane %v1127, 4
        %v1133 = vshrl.u32 %v866, 16
        %v1135 = vrot.slane %v1133, 7
        %v1136 = vshll.u32 %v866, 16
        %v1138 = vor.u32 %v1135, %v1136
        %v1139 = vsel %vm868, %v1131, %v1138
        %v1140 = vrot.slane %v1135, 4
        %vm1189 = vcmask 519168
        %vm1190 = vmand %vm1189, %vm737
        %v1191 = vld [vmem:[%s685] sm:$0xf]
        %v1192 = vsel %vm1190, %v875, %v1191
        %1193 = vst [vmem:[%s685] sm:$0xf] %v1192
        %1194 = vst.msk [vmem:[%s685 + $0x4] sm:$0xf] %vm676, %v884
        %v1195 = vld [vmem:[%s685 + $0x8] sm:$0x1]
        %v1196 = vsel %vm688, %v885, %v1195
        %1197 = vst [vmem:[%s685 + $0x8] sm:$0x1] %v1196
        %v1198 = vld [vmem:[%s685 + $0xc] sm:$0xf]
        %v1199 = vsel %vm1190, %v892, %v1198
        %1200 = vst [vmem:[%s685 + $0xc] sm:$0xf] %v1199
        %1201 = vst.msk [vmem:[%s685 + $0x10] sm:$0xf] %vm676, %v901
        %v1202 = vld [vmem:[%s685 + $0x14] sm:$0x1]
        %v1203 = vsel %vm688, %v902, %v1202
        %1204 = vst [vmem:[%s685 + $0x14] sm:$0x1] %v1203
        %v1205 = vld [vmem:[%s685 + $0x18] sm:$0xf]
        %v1206 = vsel %vm1190, %v909, %v1205
        %1207 = vst [vmem:[%s685 + $0x18] sm:$0xf] %v1206
        %1208 = vst.msk [vmem:[%s685 + $0x1c] sm:$0xf] %vm676, %v918
        %v1209 = vld [vmem:[%s685 + $0x20] sm:$0x1]
        %v1210 = vsel %vm688, %v919, %v1209
        %1211 = vst [vmem:[%s685 + $0x20] sm:$0x1] %v1210
        %v1212 = vld [vmem:[%s685 + $0x24] sm:$0xf]
        %v1213 = vsel %vm1190, %v926, %v1212
        %1214 = vst [vmem:[%s685 + $0x24] sm:$0xf] %v1213
        %1215 = vst.msk [vmem:[%s685 + $0x28] sm:$0xf] %vm676, %v935
        %v1216 = vld [vmem:[%s685 + $0x2c] sm:$0x1]
        %v1217 = vsel %vm688, %v936, %v1216
        %1218 = vst [vmem:[%s685 + $0x2c] sm:$0x1] %v1217
        %v1219 = vld [vmem:[%s685 + $0x30] sm:$0xf]
        %v1220 = vsel %vm1190, %v943, %v1219
        %1221 = vst [vmem:[%s685 + $0x30] sm:$0xf] %v1220
        %1222 = vst.msk [vmem:[%s685 + $0x34] sm:$0xf] %vm676, %v952
        %v1223 = vld [vmem:[%s685 + $0x38] sm:$0x1]
        %v1224 = vsel %vm688, %v953, %v1223
        %1225 = vst [vmem:[%s685 + $0x38] sm:$0x1] %v1224
        %v1226 = vld [vmem:[%s685 + $0x3c] sm:$0xf]
        %v1227 = vsel %vm1190, %v960, %v1226
        %1228 = vst [vmem:[%s685 + $0x3c] sm:$0xf] %v1227
        %1229 = vst.msk [vmem:[%s685 + $0x40] sm:$0xf] %vm676, %v969
        %v1230 = vld [vmem:[%s685 + $0x44] sm:$0x1]
        %v1231 = vsel %vm688, %v970, %v1230
        %1232 = vst [vmem:[%s685 + $0x44] sm:$0x1] %v1231
        %v1233 = vld [vmem:[%s685 + $0x48] sm:$0xf]
        %v1234 = vsel %vm1190, %v977, %v1233
        %1235 = vst [vmem:[%s685 + $0x48] sm:$0xf] %v1234
        %1236 = vst.msk [vmem:[%s685 + $0x4c] sm:$0xf] %vm676, %v986
        %v1237 = vld [vmem:[%s685 + $0x50] sm:$0x1]
        %v1238 = vsel %vm688, %v987, %v1237
        %1239 = vst [vmem:[%s685 + $0x50] sm:$0x1] %v1238
        %v1240 = vld [vmem:[%s685 + $0x54] sm:$0xf]
        %v1241 = vsel %vm1190, %v994, %v1240
        %1242 = vst [vmem:[%s685 + $0x54] sm:$0xf] %v1241
        %1243 = vst.msk [vmem:[%s685 + $0x58] sm:$0xf] %vm676, %v1003
        %v1244 = vld [vmem:[%s685 + $0x5c] sm:$0x1]
        %v1245 = vsel %vm688, %v1004, %v1244
        %1246 = vst [vmem:[%s685 + $0x5c] sm:$0x1] %v1245
        %v1247 = vld [vmem:[%s685 + $0x60] sm:$0xf]
        %v1248 = vsel %vm1190, %v1011, %v1247
        %1249 = vst [vmem:[%s685 + $0x60] sm:$0xf] %v1248
        %1250 = vst.msk [vmem:[%s685 + $0x64] sm:$0xf] %vm676, %v1020
        %v1251 = vld [vmem:[%s685 + $0x68] sm:$0x1]
        %v1252 = vsel %vm688, %v1021, %v1251
        %1253 = vst [vmem:[%s685 + $0x68] sm:$0x1] %v1252
        %v1254 = vld [vmem:[%s685 + $0x6c] sm:$0xf]
        %v1255 = vsel %vm1190, %v1028, %v1254
        %1256 = vst [vmem:[%s685 + $0x6c] sm:$0xf] %v1255
        %1257 = vst.msk [vmem:[%s685 + $0x70] sm:$0xf] %vm676, %v1037
        %v1258 = vld [vmem:[%s685 + $0x74] sm:$0x1]
        %v1259 = vsel %vm688, %v1038, %v1258
        %1260 = vst [vmem:[%s685 + $0x74] sm:$0x1] %v1259
        %v1261 = vld [vmem:[%s685 + $0x78] sm:$0xf]
        %v1262 = vsel %vm1190, %v1045, %v1261
        %1263 = vst [vmem:[%s685 + $0x78] sm:$0xf] %v1262
        %1264 = vst.msk [vmem:[%s685 + $0x7c] sm:$0xf] %vm676, %v1054
        %v1265 = vld [vmem:[%s685 + $0x80] sm:$0x1]
        %v1266 = vsel %vm688, %v1055, %v1265
        %1267 = vst [vmem:[%s685 + $0x80] sm:$0x1] %v1266
        %v1268 = vld [vmem:[%s685 + $0x84] sm:$0xf]
        %v1269 = vsel %vm1190, %v1062, %v1268
        %1270 = vst [vmem:[%s685 + $0x84] sm:$0xf] %v1269
        %1271 = vst.msk [vmem:[%s685 + $0x88] sm:$0xf] %vm676, %v1071
        %v1272 = vld [vmem:[%s685 + $0x8c] sm:$0x1]
        %v1273 = vsel %vm688, %v1072, %v1272
        %1274 = vst [vmem:[%s685 + $0x8c] sm:$0x1] %v1273
        %v1275 = vld [vmem:[%s685 + $0x90] sm:$0xf]
        %v1276 = vsel %vm1190, %v1079, %v1275
        %1277 = vst [vmem:[%s685 + $0x90] sm:$0xf] %v1276
        %1278 = vst.msk [vmem:[%s685 + $0x94] sm:$0xf] %vm676, %v1088
        %v1279 = vld [vmem:[%s685 + $0x98] sm:$0x1]
        %v1280 = vsel %vm688, %v1089, %v1279
        %1281 = vst [vmem:[%s685 + $0x98] sm:$0x1] %v1280
        %v1282 = vld [vmem:[%s685 + $0x9c] sm:$0xf]
        %v1283 = vsel %vm1190, %v1096, %v1282
        %1284 = vst [vmem:[%s685 + $0x9c] sm:$0xf] %v1283
        %1285 = vst.msk [vmem:[%s685 + $0xa0] sm:$0xf] %vm676, %v1105
        %v1286 = vld [vmem:[%s685 + $0xa4] sm:$0x1]
        %v1287 = vsel %vm688, %v1106, %v1286
        %1288 = vst [vmem:[%s685 + $0xa4] sm:$0x1] %v1287
        %v1289 = vld [vmem:[%s685 + $0xa8] sm:$0xf]
        %v1290 = vsel %vm1190, %v1113, %v1289
        %1291 = vst [vmem:[%s685 + $0xa8] sm:$0xf] %v1290
        %1292 = vst.msk [vmem:[%s685 + $0xac] sm:$0xf] %vm676, %v1122
        %v1293 = vld [vmem:[%s685 + $0xb0] sm:$0x1]
        %v1294 = vsel %vm688, %v1123, %v1293
        %1295 = vst [vmem:[%s685 + $0xb0] sm:$0x1] %v1294
        %v1296 = vld [vmem:[%s685 + $0xb4] sm:$0xf]
        %v1297 = vsel %vm1190, %v1130, %v1296
        %1298 = vst [vmem:[%s685 + $0xb4] sm:$0xf] %v1297
        %1299 = vst.msk [vmem:[%s685 + $0xb8] sm:$0xf] %vm676, %v1139
        %v1300 = vld [vmem:[%s685 + $0xbc] sm:$0x1]
        %v1301 = vsel %vm688, %v1140, %v1300
        %1302 = vst [vmem:[%s685 + $0xbc] sm:$0x1] %v1301
        %v1303 = vld [vmem:[#allocation2] sm:$0xf]
        %v1304 = vld [vmem:[#allocation2 + $0x4] sm:$0xf]
        %v1305 = vld [vmem:[#allocation2 + $0xc] sm:$0xf]
        %v1306 = vld [vmem:[#allocation2 + $0x10] sm:$0xf]
        %v1307 = vld [vmem:[#allocation2 + $0x18] sm:$0xf]
        %v1308 = vld [vmem:[#allocation2 + $0x1c] sm:$0xf]
        %v1309 = vld [vmem:[#allocation2 + $0x24] sm:$0xf]
        %v1310 = vld [vmem:[#allocation2 + $0x28] sm:$0xf]
        %v1311 = vld [vmem:[#allocation2 + $0x30] sm:$0xf]
        %v1312 = vld [vmem:[#allocation2 + $0x34] sm:$0xf]
        %v1313 = vld [vmem:[#allocation2 + $0x3c] sm:$0xf]
        %v1314 = vld [vmem:[#allocation2 + $0x40] sm:$0xf]
        %v1315 = vld [vmem:[#allocation2 + $0x48] sm:$0xf]
        %v1316 = vld [vmem:[#allocation2 + $0x4c] sm:$0xf]
        %v1317 = vld [vmem:[#allocation2 + $0x54] sm:$0xf]
        %v1318 = vld [vmem:[#allocation2 + $0x58] sm:$0xf]
        %v1319 = vld [vmem:[#allocation2 + $0x60] sm:$0xf]
        %v1320 = vld [vmem:[#allocation2 + $0x64] sm:$0xf]
        %v1321 = vld [vmem:[#allocation2 + $0x6c] sm:$0xf]
        %v1322 = vld [vmem:[#allocation2 + $0x70] sm:$0xf]
        %v1323 = vld [vmem:[#allocation2 + $0x78] sm:$0xf]
        %v1324 = vld [vmem:[#allocation2 + $0x7c] sm:$0xf]
        %v1325 = vld [vmem:[#allocation2 + $0x84] sm:$0xf]
        %v1326 = vld [vmem:[#allocation2 + $0x88] sm:$0xf]
        %v1327 = vld [vmem:[#allocation2 + $0x90] sm:$0xf]
        %v1328 = vld [vmem:[#allocation2 + $0x94] sm:$0xf]
        %v1329 = vld [vmem:[#allocation2 + $0x9c] sm:$0xf]
        %v1330 = vld [vmem:[#allocation2 + $0xa0] sm:$0xf]
        %v1331 = vld [vmem:[#allocation2 + $0xa8] sm:$0xf]
        %v1332 = vld [vmem:[#allocation2 + $0xac] sm:$0xf]
        %v1333 = vld [vmem:[#allocation2 + $0xb4] sm:$0xf]
        %v1334 = vld [vmem:[#allocation2 + $0xb8] sm:$0xf]
        %1335 = vst.msk [vmem:[#allocation3] sm:$0xf] %vm676, %v1303
        %1336 = vst.msk [vmem:[#allocation3 + $0x14] sm:$0xf] %vm676, %v1304
        %1337 = vst.msk [vmem:[#allocation3 + $0x28] sm:$0xf] %vm676, %v1305
        %1338 = vst.msk [vmem:[#allocation3 + $0x3c] sm:$0xf] %vm676, %v1306
        %1339 = vst.msk [vmem:[#allocation3 + $0x50] sm:$0xf] %vm676, %v1307
        %1340 = vst.msk [vmem:[#allocation3 + $0x64] sm:$0xf] %vm676, %v1308
        %1341 = vst.msk [vmem:[#allocation3 + $0x78] sm:$0xf] %vm676, %v1309
        %1342 = vst.msk [vmem:[#allocation3 + $0x8c] sm:$0xf] %vm676, %v1310
        %1343 = vst.msk [vmem:[#allocation3 + $0xa0] sm:$0xf] %vm676, %v1311
        %1344 = vst.msk [vmem:[#allocation3 + $0xb4] sm:$0xf] %vm676, %v1312
        %1345 = vst.msk [vmem:[#allocation3 + $0xc8] sm:$0xf] %vm676, %v1313
        %1346 = vst.msk [vmem:[#allocation3 + $0xdc] sm:$0xf] %vm676, %v1314
        %1347 = vst.msk [vmem:[#allocation3 + $0xf0] sm:$0xf] %vm676, %v1315
        %1348 = vst.msk [vmem:[#allocation3 + $0x104] sm:$0xf] %vm676, %v1316
        %1349 = vst.msk [vmem:[#allocation3 + $0x118] sm:$0xf] %vm676, %v1317
        %1350 = vst.msk [vmem:[#allocation3 + $0x12c] sm:$0xf] %vm676, %v1318
        %1351 = vst.msk [vmem:[#allocation3 + $0x140] sm:$0xf] %vm676, %v1319
        %1352 = vst.msk [vmem:[#allocation3 + $0x154] sm:$0xf] %vm676, %v1320
        %1353 = vst.msk [vmem:[#allocation3 + $0x168] sm:$0xf] %vm676, %v1321
        %1354 = vst.msk [vmem:[#allocation3 + $0x17c] sm:$0xf] %vm676, %v1322
        %1355 = vst.msk [vmem:[#allocation3 + $0x190] sm:$0xf] %vm676, %v1323
        %1356 = vst.msk [vmem:[#allocation3 + $0x1a4] sm:$0xf] %vm676, %v1324
        %1357 = vst.msk [vmem:[#allocation3 + $0x1b8] sm:$0xf] %vm676, %v1325
        %1358 = vst.msk [vmem:[#allocation3 + $0x1cc] sm:$0xf] %vm676, %v1326
        %1359 = vst.msk [vmem:[#allocation3 + $0x1e0] sm:$0xf] %vm676, %v1327
        %1360 = vst.msk [vmem:[#allocation3 + $0x1f4] sm:$0xf] %vm676, %v1328
        %1361 = vst.msk [vmem:[#allocation3 + $0x208] sm:$0xf] %vm676, %v1329
        %1362 = vst.msk [vmem:[#allocation3 + $0x21c] sm:$0xf] %vm676, %v1330
        %1363 = vst.msk [vmem:[#allocation3 + $0x230] sm:$0xf] %vm676, %v1331
        %1364 = vst.msk [vmem:[#allocation3 + $0x244] sm:$0xf] %vm676, %v1332
        %1365 = vst.msk [vmem:[#allocation3 + $0x258] sm:$0xf] %vm676, %v1333
        %1366 = vst.msk [vmem:[#allocation3 + $0x26c] sm:$0xf] %vm676, %v1334
        %v1367 = vld [vmem:[#allocation2] sm:$0xf]
        %v1368 = vld [vmem:[#allocation2 + $0x4] sm:$0xf]
        %v1369 = vld [vmem:[#allocation2 + $0x8] sm:$0x1]
        %v1370 = vld [vmem:[#allocation2 + $0xc] sm:$0xf]
        %v1371 = vld [vmem:[#allocation2 + $0x10] sm:$0xf]
        %v1372 = vld [vmem:[#allocation2 + $0x14] sm:$0x1]
        %v1373 = vld [vmem:[#allocation2 + $0x18] sm:$0xf]
        %v1374 = vld [vmem:[#allocation2 + $0x1c] sm:$0xf]
        %v1375 = vld [vmem:[#allocation2 + $0x20] sm:$0x1]
        %v1376 = vld [vmem:[#allocation2 + $0x24] sm:$0xf]
        %v1377 = vld [vmem:[#allocation2 + $0x28] sm:$0xf]
        %v1378 = vld [vmem:[#allocation2 + $0x2c] sm:$0x1]
        %v1379 = vld [vmem:[#allocation2 + $0x30] sm:$0xf]
        %v1380 = vld [vmem:[#allocation2 + $0x34] sm:$0xf]
        %v1381 = vld [vmem:[#allocation2 + $0x38] sm:$0x1]
        %v1382 = vld [vmem:[#allocation2 + $0x3c] sm:$0xf]
        %v1383 = vld [vmem:[#allocation2 + $0x40] sm:$0xf]
        %v1384 = vld [vmem:[#allocation2 + $0x44] sm:$0x1]
        %v1385 = vld [vmem:[#allocation2 + $0x48] sm:$0xf]
        %v1386 = vld [vmem:[#allocation2 + $0x4c] sm:$0xf]
        %v1387 = vld [vmem:[#allocation2 + $0x50] sm:$0x1]
        %v1388 = vld [vmem:[#allocation2 + $0x54] sm:$0xf]
        %v1389 = vld [vmem:[#allocation2 + $0x58] sm:$0xf]
        %v1390 = vld [vmem:[#allocation2 + $0x5c] sm:$0x1]
        %v1391 = vld [vmem:[#allocation2 + $0x60] sm:$0xf]
        %v1392 = vld [vmem:[#allocation2 + $0x64] sm:$0xf]
        %v1393 = vld [vmem:[#allocation2 + $0x68] sm:$0x1]
        %v1394 = vld [vmem:[#allocation2 + $0x6c] sm:$0xf]
        %v1395 = vld [vmem:[#allocation2 + $0x70] sm:$0xf]
        %v1396 = vld [vmem:[#allocation2 + $0x74] sm:$0x1]
        %v1397 = vld [vmem:[#allocation2 + $0x78] sm:$0xf]
        %v1398 = vld [vmem:[#allocation2 + $0x7c] sm:$0xf]
        %v1399 = vld [vmem:[#allocation2 + $0x80] sm:$0x1]
        %v1400 = vld [vmem:[#allocation2 + $0x84] sm:$0xf]
        %v1401 = vld [vmem:[#allocation2 + $0x88] sm:$0xf]
        %v1402 = vld [vmem:[#allocation2 + $0x8c] sm:$0x1]
        %v1403 = vld [vmem:[#allocation2 + $0x90] sm:$0xf]
        %v1404 = vld [vmem:[#allocation2 + $0x94] sm:$0xf]
        %v1405 = vld [vmem:[#allocation2 + $0x98] sm:$0x1]
        %v1406 = vld [vmem:[#allocation2 + $0x9c] sm:$0xf]
        %v1407 = vld [vmem:[#allocation2 + $0xa0] sm:$0xf]
        %v1408 = vld [vmem:[#allocation2 + $0xa4] sm:$0x1]
        %v1409 = vld [vmem:[#allocation2 + $0xa8] sm:$0xf]
        %v1410 = vld [vmem:[#allocation2 + $0xac] sm:$0xf]
        %v1411 = vld [vmem:[#allocation2 + $0xb0] sm:$0x1]
        %v1412 = vld [vmem:[#allocation2 + $0xb4] sm:$0xf]
        %v1413 = vld [vmem:[#allocation2 + $0xb8] sm:$0xf]
        %v1414 = vld [vmem:[#allocation2 + $0xbc] sm:$0x1]
        %vm1415 = vsmask.f32 3328
        %vm1416 = vsmask.f32 7440
        %vm1417 = vmor %vm1415, %vm1416
        %v1419 = vshrl.u32 %v1367, 16
        %v1421 = vrot.slane %v1419, 4
        %v1422 = vshll.u32 %v1367, 16
        %v1424 = vrot.slane %v1422, 5
        %v1425 = vor.u32 %v1421, %v1424
        %v1426 = vrot.slane %v1425, 4
        %v1428 = vshll.u32 %v1368, 16
        %v1430 = vrot.slane %v1428, 5
        %v1431 = vsel %vm1417, %v1426, %v1430
        %v1432 = vshrl.u32 %v1368, 16
        %v1434 = vrot.slane %v1432, 4
        %v1435 = vor.u32 %v1434, %v1430
        %v1436 = vrot.slane %v1435, 4
        %v1438 = vshll.u32 %v1369, 16
        %v1440 = vrot.slane %v1438, 5
        %v1441 = vsel %vm1417, %v1436, %v1440
        %v1443 = vshrl.u32 %v1370, 16
        %v1445 = vrot.slane %v1443, 4
        %v1446 = vshll.u32 %v1370, 16
        %v1448 = vrot.slane %v1446, 5
        %v1449 = vor.u32 %v1445, %v1448
        %v1450 = vrot.slane %v1449, 4
        %v1452 = vshll.u32 %v1371, 16
        %v1454 = vrot.slane %v1452, 5
        %v1455 = vsel %vm1417, %v1450, %v1454
        %v1456 = vshrl.u32 %v1371, 16
        %v1458 = vrot.slane %v1456, 4
        %v1459 = vor.u32 %v1458, %v1454
        %v1460 = vrot.slane %v1459, 4
        %v1462 = vshll.u32 %v1372, 16
        %v1464 = vrot.slane %v1462, 5
        %v1465 = vsel %vm1417, %v1460, %v1464
        %v1467 = vshrl.u32 %v1373, 16
        %v1469 = vrot.slane %v1467, 4
        %v1470 = vshll.u32 %v1373, 16
        %v1472 = vrot.slane %v1470, 5
        %v1473 = vor.u32 %v1469, %v1472
        %v1474 = vrot.slane %v1473, 4
        %v1476 = vshll.u32 %v1374, 16
        %v1478 = vrot.slane %v1476, 5
        %v1479 = vsel %vm1417, %v1474, %v1478
        %v1480 = vshrl.u32 %v1374, 16
        %v1482 = vrot.slane %v1480, 4
        %v1483 = vor.u32 %v1482, %v1478
        %v1484 = vrot.slane %v1483, 4
        %v1486 = vshll.u32 %v1375, 16
        %v1488 = vrot.slane %v1486, 5
        %v1489 = vsel %vm1417, %v1484, %v1488
        %v1491 = vshrl.u32 %v1376, 16
        %v1493 = vrot.slane %v1491, 4
        %v1494 = vshll.u32 %v1376, 16
        %v1496 = vrot.slane %v1494, 5
        %v1497 = vor.u32 %v1493, %v1496
        %v1498 = vrot.slane %v1497, 4
        %v1500 = vshll.u32 %v1377, 16
        %v1502 = vrot.slane %v1500, 5
        %v1503 = vsel %vm1417, %v1498, %v1502
        %v1504 = vshrl.u32 %v1377, 16
        %v1506 = vrot.slane %v1504, 4
        %v1507 = vor.u32 %v1506, %v1502
        %v1508 = vrot.slane %v1507, 4
        %v1510 = vshll.u32 %v1378, 16
        %v1512 = vrot.slane %v1510, 5
        %v1513 = vsel %vm1417, %v1508, %v1512
        %v1515 = vshrl.u32 %v1379, 16
        %v1517 = vrot.slane %v1515, 4
        %v1518 = vshll.u32 %v1379, 16
        %v1520 = vrot.slane %v1518, 5
        %v1521 = vor.u32 %v1517, %v1520
        %v1522 = vrot.slane %v1521, 4
        %v1524 = vshll.u32 %v1380, 16
        %v1526 = vrot.slane %v1524, 5
        %v1527 = vsel %vm1417, %v1522, %v1526
        %v1528 = vshrl.u32 %v1380, 16
        %v1530 = vrot.slane %v1528, 4
        %v1531 = vor.u32 %v1530, %v1526
        %v1532 = vrot.slane %v1531, 4
        %v1534 = vshll.u32 %v1381, 16
        %v1536 = vrot.slane %v1534, 5
        %v1537 = vsel %vm1417, %v1532, %v1536
        %v1539 = vshrl.u32 %v1382, 16
        %v1541 = vrot.slane %v1539, 4
        %v1542 = vshll.u32 %v1382, 16
        %v1544 = vrot.slane %v1542, 5
        %v1545 = vor.u32 %v1541, %v1544
        %v1546 = vrot.slane %v1545, 4
        %v1548 = vshll.u32 %v1383, 16
        %v1550 = vrot.slane %v1548, 5
        %v1551 = vsel %vm1417, %v1546, %v1550
        %v1552 = vshrl.u32 %v1383, 16
        %v1554 = vrot.slane %v1552, 4
        %v1555 = vor.u32 %v1554, %v1550
        %v1556 = vrot.slane %v1555, 4
        %v1558 = vshll.u32 %v1384, 16
        %v1560 = vrot.slane %v1558, 5
        %v1561 = vsel %vm1417, %v1556, %v1560
        %v1563 = vshrl.u32 %v1385, 16
        %v1565 = vrot.slane %v1563, 4
        %v1566 = vshll.u32 %v1385, 16
        %v1568 = vrot.slane %v1566, 5
        %v1569 = vor.u32 %v1565, %v1568
        %v1570 = vrot.slane %v1569, 4
        %v1572 = vshll.u32 %v1386, 16
        %v1574 = vrot.slane %v1572, 5
        %v1575 = vsel %vm1417, %v1570, %v1574
        %v1576 = vshrl.u32 %v1386, 16
        %v1578 = vrot.slane %v1576, 4
        %v1579 = vor.u32 %v1578, %v1574
        %v1580 = vrot.slane %v1579, 4
        %v1582 = vshll.u32 %v1387, 16
        %v1584 = vrot.slane %v1582, 5
        %v1585 = vsel %vm1417, %v1580, %v1584
        %v1587 = vshrl.u32 %v1388, 16
        %v1589 = vrot.slane %v1587, 4
        %v1590 = vshll.u32 %v1388, 16
        %v1592 = vrot.slane %v1590, 5
        %v1593 = vor.u32 %v1589, %v1592
        %v1594 = vrot.slane %v1593, 4
        %v1596 = vshll.u32 %v1389, 16
        %v1598 = vrot.slane %v1596, 5
        %v1599 = vsel %vm1417, %v1594, %v1598
        %v1600 = vshrl.u32 %v1389, 16
        %v1602 = vrot.slane %v1600, 4
        %v1603 = vor.u32 %v1602, %v1598
        %v1604 = vrot.slane %v1603, 4
        %v1606 = vshll.u32 %v1390, 16
        %v1608 = vrot.slane %v1606, 5
        %v1609 = vsel %vm1417, %v1604, %v1608
        %v1611 = vshrl.u32 %v1391, 16
        %v1613 = vrot.slane %v1611, 4
        %v1614 = vshll.u32 %v1391, 16
        %v1616 = vrot.slane %v1614, 5
        %v1617 = vor.u32 %v1613, %v1616
        %v1618 = vrot.slane %v1617, 4
        %v1620 = vshll.u32 %v1392, 16
        %v1622 = vrot.slane %v1620, 5
        %v1623 = vsel %vm1417, %v1618, %v1622
        %v1624 = vshrl.u32 %v1392, 16
        %v1626 = vrot.slane %v1624, 4
        %v1627 = vor.u32 %v1626, %v1622
        %v1628 = vrot.slane %v1627, 4
        %v1630 = vshll.u32 %v1393, 16
        %v1632 = vrot.slane %v1630, 5
        %v1633 = vsel %vm1417, %v1628, %v1632
        %v1635 = vshrl.u32 %v1394, 16
        %v1637 = vrot.slane %v1635, 4
        %v1638 = vshll.u32 %v1394, 16
        %v1640 = vrot.slane %v1638, 5
        %v1641 = vor.u32 %v1637, %v1640
        %v1642 = vrot.slane %v1641, 4
        %v1644 = vshll.u32 %v1395, 16
        %v1646 = vrot.slane %v1644, 5
        %v1647 = vsel %vm1417, %v1642, %v1646
        %v1648 = vshrl.u32 %v1395, 16
        %v1650 = vrot.slane %v1648, 4
        %v1651 = vor.u32 %v1650, %v1646
        %v1652 = vrot.slane %v1651, 4
        %v1654 = vshll.u32 %v1396, 16
        %v1656 = vrot.slane %v1654, 5
        %v1657 = vsel %vm1417, %v1652, %v1656
        %v1659 = vshrl.u32 %v1397, 16
        %v1661 = vrot.slane %v1659, 4
        %v1662 = vshll.u32 %v1397, 16
        %v1664 = vrot.slane %v1662, 5
        %v1665 = vor.u32 %v1661, %v1664
        %v1666 = vrot.slane %v1665, 4
        %v1668 = vshll.u32 %v1398, 16
        %v1670 = vrot.slane %v1668, 5
        %v1671 = vsel %vm1417, %v1666, %v1670
        %v1672 = vshrl.u32 %v1398, 16
        %v1674 = vrot.slane %v1672, 4
        %v1675 = vor.u32 %v1674, %v1670
        %v1676 = vrot.slane %v1675, 4
        %v1678 = vshll.u32 %v1399, 16
        %v1680 = vrot.slane %v1678, 5
        %v1681 = vsel %vm1417, %v1676, %v1680
        %v1683 = vshrl.u32 %v1400, 16
        %v1685 = vrot.slane %v1683, 4
        %v1686 = vshll.u32 %v1400, 16
        %v1688 = vrot.slane %v1686, 5
        %v1689 = vor.u32 %v1685, %v1688
        %v1690 = vrot.slane %v1689, 4
        %v1692 = vshll.u32 %v1401, 16
        %v1694 = vrot.slane %v1692, 5
        %v1695 = vsel %vm1417, %v1690, %v1694
        %v1696 = vshrl.u32 %v1401, 16
        %v1698 = vrot.slane %v1696, 4
        %v1699 = vor.u32 %v1698, %v1694
        %v1700 = vrot.slane %v1699, 4
        %v1702 = vshll.u32 %v1402, 16
        %v1704 = vrot.slane %v1702, 5
        %v1705 = vsel %vm1417, %v1700, %v1704
        %v1707 = vshrl.u32 %v1403, 16
        %v1709 = vrot.slane %v1707, 4
        %v1710 = vshll.u32 %v1403, 16
        %v1712 = vrot.slane %v1710, 5
        %v1713 = vor.u32 %v1709, %v1712
        %v1714 = vrot.slane %v1713, 4
        %v1716 = vshll.u32 %v1404, 16
        %v1718 = vrot.slane %v1716, 5
        %v1719 = vsel %vm1417, %v1714, %v1718
        %v1720 = vshrl.u32 %v1404, 16
        %v1722 = vrot.slane %v1720, 4
        %v1723 = vor.u32 %v1722, %v1718
        %v1724 = vrot.slane %v1723, 4
        %v1726 = vshll.u32 %v1405, 16
        %v1728 = vrot.slane %v1726, 5
        %v1729 = vsel %vm1417, %v1724, %v1728
        %v1731 = vshrl.u32 %v1406, 16
        %v1733 = vrot.slane %v1731, 4
        %v1734 = vshll.u32 %v1406, 16
        %v1736 = vrot.slane %v1734, 5
        %v1737 = vor.u32 %v1733, %v1736
        %v1738 = vrot.slane %v1737, 4
        %v1740 = vshll.u32 %v1407, 16
        %v1742 = vrot.slane %v1740, 5
        %v1743 = vsel %vm1417, %v1738, %v1742
        %v1744 = vshrl.u32 %v1407, 16
        %v1746 = vrot.slane %v1744, 4
        %v1747 = vor.u32 %v1746, %v1742
        %v1748 = vrot.slane %v1747, 4
        %v1750 = vshll.u32 %v1408, 16
        %v1752 = vrot.slane %v1750, 5
        %v1753 = vsel %vm1417, %v1748, %v1752
        %v1755 = vshrl.u32 %v1409, 16
        %v1757 = vrot.slane %v1755, 4
        %v1758 = vshll.u32 %v1409, 16
        %v1760 = vrot.slane %v1758, 5
        %v1761 = vor.u32 %v1757, %v1760
        %v1762 = vrot.slane %v1761, 4
        %v1764 = vshll.u32 %v1410, 16
        %v1766 = vrot.slane %v1764, 5
        %v1767 = vsel %vm1417, %v1762, %v1766
        %v1768 = vshrl.u32 %v1410, 16
        %v1770 = vrot.slane %v1768, 4
        %v1771 = vor.u32 %v1770, %v1766
        %v1772 = vrot.slane %v1771, 4
        %v1774 = vshll.u32 %v1411, 16
        %v1776 = vrot.slane %v1774, 5
        %v1777 = vsel %vm1417, %v1772, %v1776
        %v1779 = vshrl.u32 %v1412, 16
        %v1781 = vrot.slane %v1779, 4
        %v1782 = vshll.u32 %v1412, 16
        %v1784 = vrot.slane %v1782, 5
        %v1785 = vor.u32 %v1781, %v1784
        %v1786 = vrot.slane %v1785, 4
        %v1788 = vshll.u32 %v1413, 16
        %v1790 = vrot.slane %v1788, 5
        %v1791 = vsel %vm1417, %v1786, %v1790
        %v1792 = vshrl.u32 %v1413, 16
        %v1794 = vrot.slane %v1792, 4
        %v1795 = vor.u32 %v1794, %v1790
        %v1796 = vrot.slane %v1795, 4
        %v1798 = vshll.u32 %v1414, 16
        %v1800 = vrot.slane %v1798, 5
        %v1801 = vsel %vm1417, %v1796, %v1800
        %1802 = vrot.lane.b32.xlu0 %v1431, 64
        %v1803 = vpop.permute.xlu0 %1802
        %1804 = vrot.lane.b32.xlu0 %v1441, 64
        %v1805 = vpop.permute.xlu0 %1804
        %1806 = vrot.lane.b32.xlu0 %v1455, 64
        %v1807 = vpop.permute.xlu0 %1806
        %1808 = vrot.lane.b32.xlu0 %v1465, 64
        %v1809 = vpop.permute.xlu0 %1808
        %1810 = vrot.lane.b32.xlu0 %v1479, 64
        %v1811 = vpop.permute.xlu0 %1810
        %1812 = vrot.lane.b32.xlu0 %v1489, 64
        %v1813 = vpop.permute.xlu0 %1812
        %1814 = vrot.lane.b32.xlu0 %v1503, 64
        %v1815 = vpop.permute.xlu0 %1814
        %1816 = vrot.lane.b32.xlu0 %v1513, 64
        %v1817 = vpop.permute.xlu0 %1816
        %1818 = vrot.lane.b32.xlu0 %v1527, 64
        %v1819 = vpop.permute.xlu0 %1818
        %1820 = vrot.lane.b32.xlu0 %v1537, 64
        %v1821 = vpop.permute.xlu0 %1820
        %1822 = vrot.lane.b32.xlu0 %v1551, 64
        %v1823 = vpop.permute.xlu0 %1822
        %1824 = vrot.lane.b32.xlu0 %v1561, 64
        %v1825 = vpop.permute.xlu0 %1824
        %1826 = vrot.lane.b32.xlu0 %v1575, 64
        %v1827 = vpop.permute.xlu0 %1826
        %1828 = vrot.lane.b32.xlu0 %v1585, 64
        %v1829 = vpop.permute.xlu0 %1828
        %1830 = vrot.lane.b32.xlu0 %v1599, 64
        %v1831 = vpop.permute.xlu0 %1830
        %1832 = vrot.lane.b32.xlu0 %v1609, 64
        %v1833 = vpop.permute.xlu0 %1832
        %1834 = vrot.lane.b32.xlu0 %v1623, 64
        %v1835 = vpop.permute.xlu0 %1834
        %1836 = vrot.lane.b32.xlu0 %v1633, 64
        %v1837 = vpop.permute.xlu0 %1836
        %1838 = vrot.lane.b32.xlu0 %v1647, 64
        %v1839 = vpop.permute.xlu0 %1838
        %1840 = vrot.lane.b32.xlu0 %v1657, 64
        %v1841 = vpop.permute.xlu0 %1840
        %1842 = vrot.lane.b32.xlu0 %v1671, 64
        %v1843 = vpop.permute.xlu0 %1842
        %1844 = vrot.lane.b32.xlu0 %v1681, 64
        %v1845 = vpop.permute.xlu0 %1844
        %1846 = vrot.lane.b32.xlu0 %v1695, 64
        %v1847 = vpop.permute.xlu0 %1846
        %1848 = vrot.lane.b32.xlu0 %v1705, 64
        %v1849 = vpop.permute.xlu0 %1848
        %1850 = vrot.lane.b32.xlu0 %v1719, 64
        %v1851 = vpop.permute.xlu0 %1850
        %1852 = vrot.lane.b32.xlu0 %v1729, 64
        %v1853 = vpop.permute.xlu0 %1852
        %1854 = vrot.lane.b32.xlu0 %v1743, 64
        %v1855 = vpop.permute.xlu0 %1854
        %1856 = vrot.lane.b32.xlu0 %v1753, 64
        %v1857 = vpop.permute.xlu0 %1856
        %1858 = vrot.lane.b32.xlu0 %v1767, 64
        %v1859 = vpop.permute.xlu0 %1858
        %1860 = vrot.lane.b32.xlu0 %v1777, 64
        %v1861 = vpop.permute.xlu0 %1860
        %1862 = vrot.lane.b32.xlu0 %v1791, 64
        %v1863 = vpop.permute.xlu0 %1862
        %1864 = vrot.lane.b32.xlu0 %v1801, 64
        %v1865 = vpop.permute.xlu0 %1864
        %vm1898 = vcmask 1043968
        %1899 = vst.msk [vmem:[#allocation3] sm:$0xf] %vm1898, %v1803
        %1900 = vst.msk [vmem:[#allocation3 + $0x14] sm:$0xf] %vm1898, %v1805
        %1901 = vst.msk [vmem:[#allocation3 + $0x28] sm:$0xf] %vm1898, %v1807
        %1902 = vst.msk [vmem:[#allocation3 + $0x3c] sm:$0xf] %vm1898, %v1809
        %1903 = vst.msk [vmem:[#allocation3 + $0x50] sm:$0xf] %vm1898, %v1811
        %1904 = vst.msk [vmem:[#allocation3 + $0x64] sm:$0xf] %vm1898, %v1813
        %1905 = vst.msk [vmem:[#allocation3 + $0x78] sm:$0xf] %vm1898, %v1815
        %1906 = vst.msk [vmem:[#allocation3 + $0x8c] sm:$0xf] %vm1898, %v1817
        %1907 = vst.msk [vmem:[#allocation3 + $0xa0] sm:$0xf] %vm1898, %v1819
        %1908 = vst.msk [vmem:[#allocation3 + $0xb4] sm:$0xf] %vm1898, %v1821
        %1909 = vst.msk [vmem:[#allocation3 + $0xc8] sm:$0xf] %vm1898, %v1823
        %1910 = vst.msk [vmem:[#allocation3 + $0xdc] sm:$0xf] %vm1898, %v1825
        %1911 = vst.msk [vmem:[#allocation3 + $0xf0] sm:$0xf] %vm1898, %v1827
        %1912 = vst.msk [vmem:[#allocation3 + $0x104] sm:$0xf] %vm1898, %v1829
        %1913 = vst.msk [vmem:[#allocation3 + $0x118] sm:$0xf] %vm1898, %v1831
        %1914 = vst.msk [vmem:[#allocation3 + $0x12c] sm:$0xf] %vm1898, %v1833
        %1915 = vst.msk [vmem:[#allocation3 + $0x140] sm:$0xf] %vm1898, %v1835
        %1916 = vst.msk [vmem:[#allocation3 + $0x154] sm:$0xf] %vm1898, %v1837
        %1917 = vst.msk [vmem:[#allocation3 + $0x168] sm:$0xf] %vm1898, %v1839
        %1918 = vst.msk [vmem:[#allocation3 + $0x17c] sm:$0xf] %vm1898, %v1841
        %1919 = vst.msk [vmem:[#allocation3 + $0x190] sm:$0xf] %vm1898, %v1843
        %1920 = vst.msk [vmem:[#allocation3 + $0x1a4] sm:$0xf] %vm1898, %v1845
        %1921 = vst.msk [vmem:[#allocation3 + $0x1b8] sm:$0xf] %vm1898, %v1847
        %1922 = vst.msk [vmem:[#allocation3 + $0x1cc] sm:$0xf] %vm1898, %v1849
        %1923 = vst.msk [vmem:[#allocation3 + $0x1e0] sm:$0xf] %vm1898, %v1851
        %1924 = vst.msk [vmem:[#allocation3 + $0x1f4] sm:$0xf] %vm1898, %v1853
        %1925 = vst.msk [vmem:[#allocation3 + $0x208] sm:$0xf] %vm1898, %v1855
        %1926 = vst.msk [vmem:[#allocation3 + $0x21c] sm:$0xf] %vm1898, %v1857
        %1927 = vst.msk [vmem:[#allocation3 + $0x230] sm:$0xf] %vm1898, %v1859
        %1928 = vst.msk [vmem:[#allocation3 + $0x244] sm:$0xf] %vm1898, %v1861
        %1929 = vst.msk [vmem:[#allocation3 + $0x258] sm:$0xf] %vm1898, %v1863
        %1930 = vst.msk [vmem:[#allocation3 + $0x26c] sm:$0xf] %vm1898, %v1865
        %v1931 = vld [vmem:[#allocation2] sm:$0xe]
        %v1932 = vld [vmem:[#allocation2 + $0x4] sm:$0xf]
        %v1933 = vld [vmem:[#allocation2 + $0x8] sm:$0x1]
        %v1934 = vld [vmem:[#allocation2 + $0xc] sm:$0xe]
        %v1935 = vld [vmem:[#allocation2 + $0x10] sm:$0xf]
        %v1936 = vld [vmem:[#allocation2 + $0x14] sm:$0x1]
        %v1937 = vld [vmem:[#allocation2 + $0x18] sm:$0xe]
        %v1938 = vld [vmem:[#allocation2 + $0x1c] sm:$0xf]
        %v1939 = vld [vmem:[#allocation2 + $0x20] sm:$0x1]
        %v1940 = vld [vmem:[#allocation2 + $0x24] sm:$0xe]
        %v1941 = vld [vmem:[#allocation2 + $0x28] sm:$0xf]
        %v1942 = vld [vmem:[#allocation2 + $0x2c] sm:$0x1]
        %v1943 = vld [vmem:[#allocation2 + $0x30] sm:$0xe]
        %v1944 = vld [vmem:[#allocation2 + $0x34] sm:$0xf]
        %v1945 = vld [vmem:[#allocation2 + $0x38] sm:$0x1]
        %v1946 = vld [vmem:[#allocation2 + $0x3c] sm:$0xe]
        %v1947 = vld [vmem:[#allocation2 + $0x40] sm:$0xf]
        %v1948 = vld [vmem:[#allocation2 + $0x44] sm:$0x1]
        %v1949 = vld [vmem:[#allocation2 + $0x48] sm:$0xe]
        %v1950 = vld [vmem:[#allocation2 + $0x4c] sm:$0xf]
        %v1951 = vld [vmem:[#allocation2 + $0x50] sm:$0x1]
        %v1952 = vld [vmem:[#allocation2 + $0x54] sm:$0xe]
        %v1953 = vld [vmem:[#allocation2 + $0x58] sm:$0xf]
        %v1954 = vld [vmem:[#allocation2 + $0x5c] sm:$0x1]
        %v1955 = vld [vmem:[#allocation2 + $0x60] sm:$0xe]
        %v1956 = vld [vmem:[#allocation2 + $0x64] sm:$0xf]
        %v1957 = vld [vmem:[#allocation2 + $0x68] sm:$0x1]
        %v1958 = vld [vmem:[#allocation2 + $0x6c] sm:$0xe]
        %v1959 = vld [vmem:[#allocation2 + $0x70] sm:$0xf]
        %v1960 = vld [vmem:[#allocation2 + $0x74] sm:$0x1]
        %v1961 = vld [vmem:[#allocation2 + $0x78] sm:$0xe]
        %v1962 = vld [vmem:[#allocation2 + $0x7c] sm:$0xf]
        %v1963 = vld [vmem:[#allocation2 + $0x80] sm:$0x1]
        %v1964 = vld [vmem:[#allocation2 + $0x84] sm:$0xe]
        %v1965 = vld [vmem:[#allocation2 + $0x88] sm:$0xf]
        %v1966 = vld [vmem:[#allocation2 + $0x8c] sm:$0x1]
        %v1967 = vld [vmem:[#allocation2 + $0x90] sm:$0xe]
        %v1968 = vld [vmem:[#allocation2 + $0x94] sm:$0xf]
        %v1969 = vld [vmem:[#allocation2 + $0x98] sm:$0x1]
        %v1970 = vld [vmem:[#allocation2 + $0x9c] sm:$0xe]
        %v1971 = vld [vmem:[#allocation2 + $0xa0] sm:$0xf]
        %v1972 = vld [vmem:[#allocation2 + $0xa4] sm:$0x1]
        %v1973 = vld [vmem:[#allocation2 + $0xa8] sm:$0xe]
        %v1974 = vld [vmem:[#allocation2 + $0xac] sm:$0xf]
        %v1975 = vld [vmem:[#allocation2 + $0xb0] sm:$0x1]
        %v1976 = vld [vmem:[#allocation2 + $0xb4] sm:$0xe]
        %v1977 = vld [vmem:[#allocation2 + $0xb8] sm:$0xf]
        %v1978 = vld [vmem:[#allocation2 + $0xbc] sm:$0x1]
        %vm2027 = vcmask 1042432
        %vm2028 = vcmask 1046532
        %vm2029 = vmor %vm2027, %vm2028
        %v2030 = vrot.slane %v1931, 5
        %v2031 = vrot.slane %v2030, 4
        %v2032 = vrot.slane %v1932, 5
        %v2033 = vsel %vm2029, %v2031, %v2032
        %v2034 = vrot.slane %v2032, 4
        %v2035 = vrot.slane %v1933, 5
        %v2036 = vsel %vm2029, %v2034, %v2035
        %v2037 = vrot.slane %v1934, 5
        %v2038 = vrot.slane %v2037, 4
        %v2039 = vrot.slane %v1935, 5
        %v2040 = vsel %vm2029, %v2038, %v2039
        %v2041 = vrot.slane %v2039, 4
        %v2042 = vrot.slane %v1936, 5
        %v2043 = vsel %vm2029, %v2041, %v2042
        %v2044 = vrot.slane %v1937, 5
        %v2045 = vrot.slane %v2044, 4
        %v2046 = vrot.slane %v1938, 5
        %v2047 = vsel %vm2029, %v2045, %v2046
        %v2048 = vrot.slane %v2046, 4
        %v2049 = vrot.slane %v1939, 5
        %v2050 = vsel %vm2029, %v2048, %v2049
        %v2051 = vrot.slane %v1940, 5
        %v2052 = vrot.slane %v2051, 4
        %v2053 = vrot.slane %v1941, 5
        %v2054 = vsel %vm2029, %v2052, %v2053
        %v2055 = vrot.slane %v2053, 4
        %v2056 = vrot.slane %v1942, 5
        %v2057 = vsel %vm2029, %v2055, %v2056
        %v2058 = vrot.slane %v1943, 5
        %v2059 = vrot.slane %v2058, 4
        %v2060 = vrot.slane %v1944, 5
        %v2061 = vsel %vm2029, %v2059, %v2060
        %v2062 = vrot.slane %v2060, 4
        %v2063 = vrot.slane %v1945, 5
        %v2064 = vsel %vm2029, %v2062, %v2063
        %v2065 = vrot.slane %v1946, 5
        %v2066 = vrot.slane %v2065, 4
        %v2067 = vrot.slane %v1947, 5
        %v2068 = vsel %vm2029, %v2066, %v2067
        %v2069 = vrot.slane %v2067, 4
        %v2070 = vrot.slane %v1948, 5
        %v2071 = vsel %vm2029, %v2069, %v2070
        %v2072 = vrot.slane %v1949, 5
        %v2073 = vrot.slane %v2072, 4
        %v2074 = vrot.slane %v1950, 5
        %v2075 = vsel %vm2029, %v2073, %v2074
        %v2076 = vrot.slane %v2074, 4
        %v2077 = vrot.slane %v1951, 5
        %v2078 = vsel %vm2029, %v2076, %v2077
        %v2079 = vrot.slane %v1952, 5
        %v2080 = vrot.slane %v2079, 4
        %v2081 = vrot.slane %v1953, 5
        %v2082 = vsel %vm2029, %v2080, %v2081
        %v2083 = vrot.slane %v2081, 4
        %v2084 = vrot.slane %v1954, 5
        %v2085 = vsel %vm2029, %v2083, %v2084
        %v2086 = vrot.slane %v1955, 5
        %v2087 = vrot.slane %v2086, 4
        %v2088 = vrot.slane %v1956, 5
        %v2089 = vsel %vm2029, %v2087, %v2088
        %v2090 = vrot.slane %v2088, 4
        %v2091 = vrot.slane %v1957, 5
        %v2092 = vsel %vm2029, %v2090, %v2091
        %v2093 = vrot.slane %v1958, 5
        %v2094 = vrot.slane %v2093, 4
        %v2095 = vrot.slane %v1959, 5
        %v2096 = vsel %vm2029, %v2094, %v2095
        %v2097 = vrot.slane %v2095, 4
        %v2098 = vrot.slane %v1960, 5
        %v2099 = vsel %vm2029, %v2097, %v2098
        %v2100 = vrot.slane %v1961, 5
        %v2101 = vrot.slane %v2100, 4
        %v2102 = vrot.slane %v1962, 5
        %v2103 = vsel %vm2029, %v2101, %v2102
        %v2104 = vrot.slane %v2102, 4
        %v2105 = vrot.slane %v1963, 5
        %v2106 = vsel %vm2029, %v2104, %v2105
        %v2107 = vrot.slane %v1964, 5
        %v2108 = vrot.slane %v2107, 4
        %v2109 = vrot.slane %v1965, 5
        %v2110 = vsel %vm2029, %v2108, %v2109
        %v2111 = vrot.slane %v2109, 4
        %v2112 = vrot.slane %v1966, 5
        %v2113 = vsel %vm2029, %v2111, %v2112
        %v2114 = vrot.slane %v1967, 5
        %v2115 = vrot.slane %v2114, 4
        %v2116 = vrot.slane %v1968, 5
        %v2117 = vsel %vm2029, %v2115, %v2116
        %v2118 = vrot.slane %v2116, 4
        %v2119 = vrot.slane %v1969, 5
        %v2120 = vsel %vm2029, %v2118, %v2119
        %v2121 = vrot.slane %v1970, 5
        %v2122 = vrot.slane %v2121, 4
        %v2123 = vrot.slane %v1971, 5
        %v2124 = vsel %vm2029, %v2122, %v2123
        %v2125 = vrot.slane %v2123, 4
        %v2126 = vrot.slane %v1972, 5
        %v2127 = vsel %vm2029, %v2125, %v2126
        %v2128 = vrot.slane %v1973, 5
        %v2129 = vrot.slane %v2128, 4
        %v2130 = vrot.slane %v1974, 5
        %v2131 = vsel %vm2029, %v2129, %v2130
        %v2132 = vrot.slane %v2130, 4
        %v2133 = vrot.slane %v1975, 5
        %v2134 = vsel %vm2029, %v2132, %v2133
        %v2135 = vrot.slane %v1976, 5
        %v2136 = vrot.slane %v2135, 4
        %v2137 = vrot.slane %v1977, 5
        %v2138 = vsel %vm2029, %v2136, %v2137
        %v2139 = vrot.slane %v2137, 4
        %v2140 = vrot.slane %v1978, 5
        %v2141 = vsel %vm2029, %v2139, %v2140
        %2174 = vst.msk [vmem:[#allocation3 + $0x4] sm:$0xf] %vm676, %v2033
        %2175 = vst.msk [vmem:[#allocation3 + $0x18] sm:$0xf] %vm676, %v2036
        %2176 = vst.msk [vmem:[#allocation3 + $0x2c] sm:$0xf] %vm676, %v2040
        %2177 = vst.msk [vmem:[#allocation3 + $0x40] sm:$0xf] %vm676, %v2043
        %2178 = vst.msk [vmem:[#allocation3 + $0x54] sm:$0xf] %vm676, %v2047
        %2179 = vst.msk [vmem:[#allocation3 + $0x68] sm:$0xf] %vm676, %v2050
        %2180 = vst.msk [vmem:[#allocation3 + $0x7c] sm:$0xf] %vm676, %v2054
        %2181 = vst.msk [vmem:[#allocation3 + $0x90] sm:$0xf] %vm676, %v2057
        %2182 = vst.msk [vmem:[#allocation3 + $0xa4] sm:$0xf] %vm676, %v2061
        %2183 = vst.msk [vmem:[#allocation3 + $0xb8] sm:$0xf] %vm676, %v2064
        %2184 = vst.msk [vmem:[#allocation3 + $0xcc] sm:$0xf] %vm676, %v2068
        %2185 = vst.msk [vmem:[#allocation3 + $0xe0] sm:$0xf] %vm676, %v2071
        %2186 = vst.msk [vmem:[#allocation3 + $0xf4] sm:$0xf] %vm676, %v2075
        %2187 = vst.msk [vmem:[#allocation3 + $0x108] sm:$0xf] %vm676, %v2078
        %2188 = vst.msk [vmem:[#allocation3 + $0x11c] sm:$0xf] %vm676, %v2082
        %2189 = vst.msk [vmem:[#allocation3 + $0x130] sm:$0xf] %vm676, %v2085
        %2190 = vst.msk [vmem:[#allocation3 + $0x144] sm:$0xf] %vm676, %v2089
        %2191 = vst.msk [vmem:[#allocation3 + $0x158] sm:$0xf] %vm676, %v2092
        %2192 = vst.msk [vmem:[#allocation3 + $0x16c] sm:$0xf] %vm676, %v2096
        %2193 = vst.msk [vmem:[#allocation3 + $0x180] sm:$0xf] %vm676, %v2099
        %2194 = vst.msk [vmem:[#allocation3 + $0x194] sm:$0xf] %vm676, %v2103
        %2195 = vst.msk [vmem:[#allocation3 + $0x1a8] sm:$0xf] %vm676, %v2106
        %2196 = vst.msk [vmem:[#allocation3 + $0x1bc] sm:$0xf] %vm676, %v2110
        %2197 = vst.msk [vmem:[#allocation3 + $0x1d0] sm:$0xf] %vm676, %v2113
        %2198 = vst.msk [vmem:[#allocation3 + $0x1e4] sm:$0xf] %vm676, %v2117
        %2199 = vst.msk [vmem:[#allocation3 + $0x1f8] sm:$0xf] %vm676, %v2120
        %2200 = vst.msk [vmem:[#allocation3 + $0x20c] sm:$0xf] %vm676, %v2124
        %2201 = vst.msk [vmem:[#allocation3 + $0x220] sm:$0xf] %vm676, %v2127
        %2202 = vst.msk [vmem:[#allocation3 + $0x234] sm:$0xf] %vm676, %v2131
        %2203 = vst.msk [vmem:[#allocation3 + $0x248] sm:$0xf] %vm676, %v2134
        %2204 = vst.msk [vmem:[#allocation3 + $0x25c] sm:$0xf] %vm676, %v2138
        %2205 = vst.msk [vmem:[#allocation3 + $0x270] sm:$0xf] %vm676, %v2141
        %v2206 = vld [vmem:[%s685] sm:$0xf]
        %v2207 = vld [vmem:[%s685 + $0x4] sm:$0xf]
        %v2208 = vld [vmem:[%s685 + $0xc] sm:$0xf]
        %v2209 = vld [vmem:[%s685 + $0x10] sm:$0xf]
        %v2210 = vld [vmem:[%s685 + $0x18] sm:$0xf]
        %v2211 = vld [vmem:[%s685 + $0x1c] sm:$0xf]
        %v2212 = vld [vmem:[%s685 + $0x24] sm:$0xf]
        %v2213 = vld [vmem:[%s685 + $0x28] sm:$0xf]
        %v2214 = vld [vmem:[%s685 + $0x30] sm:$0xf]
        %v2215 = vld [vmem:[%s685 + $0x34] sm:$0xf]
        %v2216 = vld [vmem:[%s685 + $0x3c] sm:$0xf]
        %v2217 = vld [vmem:[%s685 + $0x40] sm:$0xf]
        %v2218 = vld [vmem:[%s685 + $0x48] sm:$0xf]
        %v2219 = vld [vmem:[%s685 + $0x4c] sm:$0xf]
        %v2220 = vld [vmem:[%s685 + $0x54] sm:$0xf]
        %v2221 = vld [vmem:[%s685 + $0x58] sm:$0xf]
        %v2222 = vld [vmem:[%s685 + $0x60] sm:$0xf]
        %v2223 = vld [vmem:[%s685 + $0x64] sm:$0xf]
        %v2224 = vld [vmem:[%s685 + $0x6c] sm:$0xf]
        %v2225 = vld [vmem:[%s685 + $0x70] sm:$0xf]
        %v2226 = vld [vmem:[%s685 + $0x78] sm:$0xf]
        %v2227 = vld [vmem:[%s685 + $0x7c] sm:$0xf]
        %v2228 = vld [vmem:[%s685 + $0x84] sm:$0xf]
        %v2229 = vld [vmem:[%s685 + $0x88] sm:$0xf]
        %v2230 = vld [vmem:[%s685 + $0x90] sm:$0xf]
        %v2231 = vld [vmem:[%s685 + $0x94] sm:$0xf]
        %v2232 = vld [vmem:[%s685 + $0x9c] sm:$0xf]
        %v2233 = vld [vmem:[%s685 + $0xa0] sm:$0xf]
        %v2234 = vld [vmem:[%s685 + $0xa8] sm:$0xf]
        %v2235 = vld [vmem:[%s685 + $0xac] sm:$0xf]
        %v2236 = vld [vmem:[%s685 + $0xb4] sm:$0xf]
        %v2237 = vld [vmem:[%s685 + $0xb8] sm:$0xf]
        %2270 = vrot.lane.b32.xlu0 %v2206, 64
        %v2271 = vpop.permute.xlu0 %2270
        %2272 = vrot.lane.b32.xlu0 %v2207, 64
        %v2273 = vpop.permute.xlu0 %2272
        %2274 = vrot.lane.b32.xlu0 %v2208, 64
        %v2275 = vpop.permute.xlu0 %2274
        %2276 = vrot.lane.b32.xlu0 %v2209, 64
        %v2277 = vpop.permute.xlu0 %2276
        %2278 = vrot.lane.b32.xlu0 %v2210, 64
        %v2279 = vpop.permute.xlu0 %2278
        %2280 = vrot.lane.b32.xlu0 %v2211, 64
        %v2281 = vpop.permute.xlu0 %2280
        %2282 = vrot.lane.b32.xlu0 %v2212, 64
        %v2283 = vpop.permute.xlu0 %2282
        %2284 = vrot.lane.b32.xlu0 %v2213, 64
        %v2285 = vpop.permute.xlu0 %2284
        %2286 = vrot.lane.b32.xlu0 %v2214, 64
        %v2287 = vpop.permute.xlu0 %2286
        %2288 = vrot.lane.b32.xlu0 %v2215, 64
        %v2289 = vpop.permute.xlu0 %2288
        %2290 = vrot.lane.b32.xlu0 %v2216, 64
        %v2291 = vpop.permute.xlu0 %2290
        %2292 = vrot.lane.b32.xlu0 %v2217, 64
        %v2293 = vpop.permute.xlu0 %2292
        %2294 = vrot.lane.b32.xlu0 %v2218, 64
        %v2295 = vpop.permute.xlu0 %2294
        %2296 = vrot.lane.b32.xlu0 %v2219, 64
        %v2297 = vpop.permute.xlu0 %2296
        %2298 = vrot.lane.b32.xlu0 %v2220, 64
        %v2299 = vpop.permute.xlu0 %2298
        %2300 = vrot.lane.b32.xlu0 %v2221, 64
        %v2301 = vpop.permute.xlu0 %2300
        %2302 = vrot.lane.b32.xlu0 %v2222, 64
        %v2303 = vpop.permute.xlu0 %2302
        %2304 = vrot.lane.b32.xlu0 %v2223, 64
        %v2305 = vpop.permute.xlu0 %2304
        %2306 = vrot.lane.b32.xlu0 %v2224, 64
        %v2307 = vpop.permute.xlu0 %2306
        %2308 = vrot.lane.b32.xlu0 %v2225, 64
        %v2309 = vpop.permute.xlu0 %2308
        %2310 = vrot.lane.b32.xlu0 %v2226, 64
        %v2311 = vpop.permute.xlu0 %2310
        %2312 = vrot.lane.b32.xlu0 %v2227, 64
        %v2313 = vpop.permute.xlu0 %2312
        %2314 = vrot.lane.b32.xlu0 %v2228, 64
        %v2315 = vpop.permute.xlu0 %2314
        %2316 = vrot.lane.b32.xlu0 %v2229, 64
        %v2317 = vpop.permute.xlu0 %2316
        %2318 = vrot.lane.b32.xlu0 %v2230, 64
        %v2319 = vpop.permute.xlu0 %2318
        %2320 = vrot.lane.b32.xlu0 %v2231, 64
        %v2321 = vpop.permute.xlu0 %2320
        %2322 = vrot.lane.b32.xlu0 %v2232, 64
        %v2323 = vpop.permute.xlu0 %2322
        %2324 = vrot.lane.b32.xlu0 %v2233, 64
        %v2325 = vpop.permute.xlu0 %2324
        %2326 = vrot.lane.b32.xlu0 %v2234, 64
        %v2327 = vpop.permute.xlu0 %2326
        %2328 = vrot.lane.b32.xlu0 %v2235, 64
        %v2329 = vpop.permute.xlu0 %2328
        %2330 = vrot.lane.b32.xlu0 %v2236, 64
        %v2331 = vpop.permute.xlu0 %2330
        %2332 = vrot.lane.b32.xlu0 %v2237, 64
        %v2333 = vpop.permute.xlu0 %2332
        %2366 = vst.msk [vmem:[#allocation3 + $0x4] sm:$0xf] %vm1898, %v2271
        %2367 = vst.msk [vmem:[#allocation3 + $0x18] sm:$0xf] %vm1898, %v2273
        %2368 = vst.msk [vmem:[#allocation3 + $0x2c] sm:$0xf] %vm1898, %v2275
        %2369 = vst.msk [vmem:[#allocation3 + $0x40] sm:$0xf] %vm1898, %v2277
        %2370 = vst.msk [vmem:[#allocation3 + $0x54] sm:$0xf] %vm1898, %v2279
        %2371 = vst.msk [vmem:[#allocation3 + $0x68] sm:$0xf] %vm1898, %v2281
        %2372 = vst.msk [vmem:[#allocation3 + $0x7c] sm:$0xf] %vm1898, %v2283
        %2373 = vst.msk [vmem:[#allocation3 + $0x90] sm:$0xf] %vm1898, %v2285
        %2374 = vst.msk [vmem:[#allocation3 + $0xa4] sm:$0xf] %vm1898, %v2287
        %2375 = vst.msk [vmem:[#allocation3 + $0xb8] sm:$0xf] %vm1898, %v2289
        %2376 = vst.msk [vmem:[#allocation3 + $0xcc] sm:$0xf] %vm1898, %v2291
        %2377 = vst.msk [vmem:[#allocation3 + $0xe0] sm:$0xf] %vm1898, %v2293
        %2378 = vst.msk [vmem:[#allocation3 + $0xf4] sm:$0xf] %vm1898, %v2295
        %2379 = vst.msk [vmem:[#allocation3 + $0x108] sm:$0xf] %vm1898, %v2297
        %2380 = vst.msk [vmem:[#allocation3 + $0x11c] sm:$0xf] %vm1898, %v2299
        %2381 = vst.msk [vmem:[#allocation3 + $0x130] sm:$0xf] %vm1898, %v2301
        %2382 = vst.msk [vmem:[#allocation3 + $0x144] sm:$0xf] %vm1898, %v2303
        %2383 = vst.msk [vmem:[#allocation3 + $0x158] sm:$0xf] %vm1898, %v2305
        %2384 = vst.msk [vmem:[#allocation3 + $0x16c] sm:$0xf] %vm1898, %v2307
        %2385 = vst.msk [vmem:[#allocation3 + $0x180] sm:$0xf] %vm1898, %v2309
        %2386 = vst.msk [vmem:[#allocation3 + $0x194] sm:$0xf] %vm1898, %v2311
        %2387 = vst.msk [vmem:[#allocation3 + $0x1a8] sm:$0xf] %vm1898, %v2313
        %2388 = vst.msk [vmem:[#allocation3 + $0x1bc] sm:$0xf] %vm1898, %v2315
        %2389 = vst.msk [vmem:[#allocation3 + $0x1d0] sm:$0xf] %vm1898, %v2317
        %2390 = vst.msk [vmem:[#allocation3 + $0x1e4] sm:$0xf] %vm1898, %v2319
        %2391 = vst.msk [vmem:[#allocation3 + $0x1f8] sm:$0xf] %vm1898, %v2321
        %2392 = vst.msk [vmem:[#allocation3 + $0x20c] sm:$0xf] %vm1898, %v2323
        %2393 = vst.msk [vmem:[#allocation3 + $0x220] sm:$0xf] %vm1898, %v2325
        %2394 = vst.msk [vmem:[#allocation3 + $0x234] sm:$0xf] %vm1898, %v2327
        %2395 = vst.msk [vmem:[#allocation3 + $0x248] sm:$0xf] %vm1898, %v2329
        %2396 = vst.msk [vmem:[#allocation3 + $0x25c] sm:$0xf] %vm1898, %v2331
        %2397 = vst.msk [vmem:[#allocation3 + $0x270] sm:$0xf] %vm1898, %v2333
        %v2398 = vld [vmem:[%s685] sm:$0xf]
        %v2399 = vld [vmem:[%s685 + $0x4] sm:$0xf]
        %v2400 = vld [vmem:[%s685 + $0x8] sm:$0x1]
        %v2401 = vld [vmem:[%s685 + $0xc] sm:$0xf]
        %v2402 = vld [vmem:[%s685 + $0x10] sm:$0xf]
        %v2403 = vld [vmem:[%s685 + $0x14] sm:$0x1]
        %v2404 = vld [vmem:[%s685 + $0x18] sm:$0xf]
        %v2405 = vld [vmem:[%s685 + $0x1c] sm:$0xf]
        %v2406 = vld [vmem:[%s685 + $0x20] sm:$0x1]
        %v2407 = vld [vmem:[%s685 + $0x24] sm:$0xf]
        %v2408 = vld [vmem:[%s685 + $0x28] sm:$0xf]
        %v2409 = vld [vmem:[%s685 + $0x2c] sm:$0x1]
        %v2410 = vld [vmem:[%s685 + $0x30] sm:$0xf]
        %v2411 = vld [vmem:[%s685 + $0x34] sm:$0xf]
        %v2412 = vld [vmem:[%s685 + $0x38] sm:$0x1]
        %v2413 = vld [vmem:[%s685 + $0x3c] sm:$0xf]
        %v2414 = vld [vmem:[%s685 + $0x40] sm:$0xf]
        %v2415 = vld [vmem:[%s685 + $0x44] sm:$0x1]
        %v2416 = vld [vmem:[%s685 + $0x48] sm:$0xf]
        %v2417 = vld [vmem:[%s685 + $0x4c] sm:$0xf]
        %v2418 = vld [vmem:[%s685 + $0x50] sm:$0x1]
        %v2419 = vld [vmem:[%s685 + $0x54] sm:$0xf]
        %v2420 = vld [vmem:[%s685 + $0x58] sm:$0xf]
        %v2421 = vld [vmem:[%s685 + $0x5c] sm:$0x1]
        %v2422 = vld [vmem:[%s685 + $0x60] sm:$0xf]
        %v2423 = vld [vmem:[%s685 + $0x64] sm:$0xf]
        %v2424 = vld [vmem:[%s685 + $0x68] sm:$0x1]
        %v2425 = vld [vmem:[%s685 + $0x6c] sm:$0xf]
        %v2426 = vld [vmem:[%s685 + $0x70] sm:$0xf]
        %v2427 = vld [vmem:[%s685 + $0x74] sm:$0x1]
        %v2428 = vld [vmem:[%s685 + $0x78] sm:$0xf]
        %v2429 = vld [vmem:[%s685 + $0x7c] sm:$0xf]
        %v2430 = vld [vmem:[%s685 + $0x80] sm:$0x1]
        %v2431 = vld [vmem:[%s685 + $0x84] sm:$0xf]
        %v2432 = vld [vmem:[%s685 + $0x88] sm:$0xf]
        %v2433 = vld [vmem:[%s685 + $0x8c] sm:$0x1]
        %v2434 = vld [vmem:[%s685 + $0x90] sm:$0xf]
        %v2435 = vld [vmem:[%s685 + $0x94] sm:$0xf]
        %v2436 = vld [vmem:[%s685 + $0x98] sm:$0x1]
        %v2437 = vld [vmem:[%s685 + $0x9c] sm:$0xf]
        %v2438 = vld [vmem:[%s685 + $0xa0] sm:$0xf]
        %v2439 = vld [vmem:[%s685 + $0xa4] sm:$0x1]
        %v2440 = vld [vmem:[%s685 + $0xa8] sm:$0xf]
        %v2441 = vld [vmem:[%s685 + $0xac] sm:$0xf]
        %v2442 = vld [vmem:[%s685 + $0xb0] sm:$0x1]
        %v2443 = vld [vmem:[%s685 + $0xb4] sm:$0xf]
        %v2444 = vld [vmem:[%s685 + $0xb8] sm:$0xf]
        %v2445 = vld [vmem:[%s685 + $0xbc] sm:$0x1]
        %v2447 = vshrl.u32 %v2398, 16
        %v2449 = vrot.slane %v2447, 4
        %v2450 = vshll.u32 %v2398, 16
        %v2452 = vrot.slane %v2450, 5
        %v2453 = vor.u32 %v2449, %v2452
        %v2454 = vrot.slane %v2453, 4
        %v2456 = vshll.u32 %v2399, 16
        %v2458 = vrot.slane %v2456, 5
        %v2459 = vsel %vm1417, %v2454, %v2458
        %v2460 = vshrl.u32 %v2399, 16
        %v2462 = vrot.slane %v2460, 4
        %v2463 = vor.u32 %v2462, %v2458
        %v2464 = vrot.slane %v2463, 4
        %v2466 = vshll.u32 %v2400, 16
        %v2468 = vrot.slane %v2466, 5
        %v2469 = vsel %vm1417, %v2464, %v2468
        %v2471 = vshrl.u32 %v2401, 16
        %v2473 = vrot.slane %v2471, 4
        %v2474 = vshll.u32 %v2401, 16
        %v2476 = vrot.slane %v2474, 5
        %v2477 = vor.u32 %v2473, %v2476
        %v2478 = vrot.slane %v2477, 4
        %v2480 = vshll.u32 %v2402, 16
        %v2482 = vrot.slane %v2480, 5
        %v2483 = vsel %vm1417, %v2478, %v2482
        %v2484 = vshrl.u32 %v2402, 16
        %v2486 = vrot.slane %v2484, 4
        %v2487 = vor.u32 %v2486, %v2482
        %v2488 = vrot.slane %v2487, 4
        %v2490 = vshll.u32 %v2403, 16
        %v2492 = vrot.slane %v2490, 5
        %v2493 = vsel %vm1417, %v2488, %v2492
        %v2495 = vshrl.u32 %v2404, 16
        %v2497 = vrot.slane %v2495, 4
        %v2498 = vshll.u32 %v2404, 16
        %v2500 = vrot.slane %v2498, 5
        %v2501 = vor.u32 %v2497, %v2500
        %v2502 = vrot.slane %v2501, 4
        %v2504 = vshll.u32 %v2405, 16
        %v2506 = vrot.slane %v2504, 5
        %v2507 = vsel %vm1417, %v2502, %v2506
        %v2508 = vshrl.u32 %v2405, 16
        %v2510 = vrot.slane %v2508, 4
        %v2511 = vor.u32 %v2510, %v2506
        %v2512 = vrot.slane %v2511, 4
        %v2514 = vshll.u32 %v2406, 16
        %v2516 = vrot.slane %v2514, 5
        %v2517 = vsel %vm1417, %v2512, %v2516
        %v2519 = vshrl.u32 %v2407, 16
        %v2521 = vrot.slane %v2519, 4
        %v2522 = vshll.u32 %v2407, 16
        %v2524 = vrot.slane %v2522, 5
        %v2525 = vor.u32 %v2521, %v2524
        %v2526 = vrot.slane %v2525, 4
        %v2528 = vshll.u32 %v2408, 16
        %v2530 = vrot.slane %v2528, 5
        %v2531 = vsel %vm1417, %v2526, %v2530
        %v2532 = vshrl.u32 %v2408, 16
        %v2534 = vrot.slane %v2532, 4
        %v2535 = vor.u32 %v2534, %v2530
        %v2536 = vrot.slane %v2535, 4
        %v2538 = vshll.u32 %v2409, 16
        %v2540 = vrot.slane %v2538, 5
        %v2541 = vsel %vm1417, %v2536, %v2540
        %v2543 = vshrl.u32 %v2410, 16
        %v2545 = vrot.slane %v2543, 4
        %v2546 = vshll.u32 %v2410, 16
        %v2548 = vrot.slane %v2546, 5
        %v2549 = vor.u32 %v2545, %v2548
        %v2550 = vrot.slane %v2549, 4
        %v2552 = vshll.u32 %v2411, 16
        %v2554 = vrot.slane %v2552, 5
        %v2555 = vsel %vm1417, %v2550, %v2554
        %v2556 = vshrl.u32 %v2411, 16
        %v2558 = vrot.slane %v2556, 4
        %v2559 = vor.u32 %v2558, %v2554
        %v2560 = vrot.slane %v2559, 4
        %v2562 = vshll.u32 %v2412, 16
        %v2564 = vrot.slane %v2562, 5
        %v2565 = vsel %vm1417, %v2560, %v2564
        %v2567 = vshrl.u32 %v2413, 16
        %v2569 = vrot.slane %v2567, 4
        %v2570 = vshll.u32 %v2413, 16
        %v2572 = vrot.slane %v2570, 5
        %v2573 = vor.u32 %v2569, %v2572
        %v2574 = vrot.slane %v2573, 4
        %v2576 = vshll.u32 %v2414, 16
        %v2578 = vrot.slane %v2576, 5
        %v2579 = vsel %vm1417, %v2574, %v2578
        %v2580 = vshrl.u32 %v2414, 16
        %v2582 = vrot.slane %v2580, 4
        %v2583 = vor.u32 %v2582, %v2578
        %v2584 = vrot.slane %v2583, 4
        %v2586 = vshll.u32 %v2415, 16
        %v2588 = vrot.slane %v2586, 5
        %v2589 = vsel %vm1417, %v2584, %v2588
        %v2591 = vshrl.u32 %v2416, 16
        %v2593 = vrot.slane %v2591, 4
        %v2594 = vshll.u32 %v2416, 16
        %v2596 = vrot.slane %v2594, 5
        %v2597 = vor.u32 %v2593, %v2596
        %v2598 = vrot.slane %v2597, 4
        %v2600 = vshll.u32 %v2417, 16
        %v2602 = vrot.slane %v2600, 5
        %v2603 = vsel %vm1417, %v2598, %v2602
        %v2604 = vshrl.u32 %v2417, 16
        %v2606 = vrot.slane %v2604, 4
        %v2607 = vor.u32 %v2606, %v2602
        %v2608 = vrot.slane %v2607, 4
        %v2610 = vshll.u32 %v2418, 16
        %v2612 = vrot.slane %v2610, 5
        %v2613 = vsel %vm1417, %v2608, %v2612
        %v2615 = vshrl.u32 %v2419, 16
        %v2617 = vrot.slane %v2615, 4
        %v2618 = vshll.u32 %v2419, 16
        %v2620 = vrot.slane %v2618, 5
        %v2621 = vor.u32 %v2617, %v2620
        %v2622 = vrot.slane %v2621, 4
        %v2624 = vshll.u32 %v2420, 16
        %v2626 = vrot.slane %v2624, 5
        %v2627 = vsel %vm1417, %v2622, %v2626
        %v2628 = vshrl.u32 %v2420, 16
        %v2630 = vrot.slane %v2628, 4
        %v2631 = vor.u32 %v2630, %v2626
        %v2632 = vrot.slane %v2631, 4
        %v2634 = vshll.u32 %v2421, 16
        %v2636 = vrot.slane %v2634, 5
        %v2637 = vsel %vm1417, %v2632, %v2636
        %v2639 = vshrl.u32 %v2422, 16
        %v2641 = vrot.slane %v2639, 4
        %v2642 = vshll.u32 %v2422, 16
        %v2644 = vrot.slane %v2642, 5
        %v2645 = vor.u32 %v2641, %v2644
        %v2646 = vrot.slane %v2645, 4
        %v2648 = vshll.u32 %v2423, 16
        %v2650 = vrot.slane %v2648, 5
        %v2651 = vsel %vm1417, %v2646, %v2650
        %v2652 = vshrl.u32 %v2423, 16
        %v2654 = vrot.slane %v2652, 4
        %v2655 = vor.u32 %v2654, %v2650
        %v2656 = vrot.slane %v2655, 4
        %v2658 = vshll.u32 %v2424, 16
        %v2660 = vrot.slane %v2658, 5
        %v2661 = vsel %vm1417, %v2656, %v2660
        %v2663 = vshrl.u32 %v2425, 16
        %v2665 = vrot.slane %v2663, 4
        %v2666 = vshll.u32 %v2425, 16
        %v2668 = vrot.slane %v2666, 5
        %v2669 = vor.u32 %v2665, %v2668
        %v2670 = vrot.slane %v2669, 4
        %v2672 = vshll.u32 %v2426, 16
        %v2674 = vrot.slane %v2672, 5
        %v2675 = vsel %vm1417, %v2670, %v2674
        %v2676 = vshrl.u32 %v2426, 16
        %v2678 = vrot.slane %v2676, 4
        %v2679 = vor.u32 %v2678, %v2674
        %v2680 = vrot.slane %v2679, 4
        %v2682 = vshll.u32 %v2427, 16
        %v2684 = vrot.slane %v2682, 5
        %v2685 = vsel %vm1417, %v2680, %v2684
        %v2687 = vshrl.u32 %v2428, 16
        %v2689 = vrot.slane %v2687, 4
        %v2690 = vshll.u32 %v2428, 16
        %v2692 = vrot.slane %v2690, 5
        %v2693 = vor.u32 %v2689, %v2692
        %v2694 = vrot.slane %v2693, 4
        %v2696 = vshll.u32 %v2429, 16
        %v2698 = vrot.slane %v2696, 5
        %v2699 = vsel %vm1417, %v2694, %v2698
        %v2700 = vshrl.u32 %v2429, 16
        %v2702 = vrot.slane %v2700, 4
        %v2703 = vor.u32 %v2702, %v2698
        %v2704 = vrot.slane %v2703, 4
        %v2706 = vshll.u32 %v2430, 16
        %v2708 = vrot.slane %v2706, 5
        %v2709 = vsel %vm1417, %v2704, %v2708
        %v2711 = vshrl.u32 %v2431, 16
        %v2713 = vrot.slane %v2711, 4
        %v2714 = vshll.u32 %v2431, 16
        %v2716 = vrot.slane %v2714, 5
        %v2717 = vor.u32 %v2713, %v2716
        %v2718 = vrot.slane %v2717, 4
        %v2720 = vshll.u32 %v2432, 16
        %v2722 = vrot.slane %v2720, 5
        %v2723 = vsel %vm1417, %v2718, %v2722
        %v2724 = vshrl.u32 %v2432, 16
        %v2726 = vrot.slane %v2724, 4
        %v2727 = vor.u32 %v2726, %v2722
        %v2728 = vrot.slane %v2727, 4
        %v2730 = vshll.u32 %v2433, 16
        %v2732 = vrot.slane %v2730, 5
        %v2733 = vsel %vm1417, %v2728, %v2732
        %v2735 = vshrl.u32 %v2434, 16
        %v2737 = vrot.slane %v2735, 4
        %v2738 = vshll.u32 %v2434, 16
        %v2740 = vrot.slane %v2738, 5
        %v2741 = vor.u32 %v2737, %v2740
        %v2742 = vrot.slane %v2741, 4
        %v2744 = vshll.u32 %v2435, 16
        %v2746 = vrot.slane %v2744, 5
        %v2747 = vsel %vm1417, %v2742, %v2746
        %v2748 = vshrl.u32 %v2435, 16
        %v2750 = vrot.slane %v2748, 4
        %v2751 = vor.u32 %v2750, %v2746
        %v2752 = vrot.slane %v2751, 4
        %v2754 = vshll.u32 %v2436, 16
        %v2756 = vrot.slane %v2754, 5
        %v2757 = vsel %vm1417, %v2752, %v2756
        %v2759 = vshrl.u32 %v2437, 16
        %v2761 = vrot.slane %v2759, 4
        %v2762 = vshll.u32 %v2437, 16
        %v2764 = vrot.slane %v2762, 5
        %v2765 = vor.u32 %v2761, %v2764
        %v2766 = vrot.slane %v2765, 4
        %v2768 = vshll.u32 %v2438, 16
        %v2770 = vrot.slane %v2768, 5
        %v2771 = vsel %vm1417, %v2766, %v2770
        %v2772 = vshrl.u32 %v2438, 16
        %v2774 = vrot.slane %v2772, 4
        %v2775 = vor.u32 %v2774, %v2770
        %v2776 = vrot.slane %v2775, 4
        %v2778 = vshll.u32 %v2439, 16
        %v2780 = vrot.slane %v2778, 5
        %v2781 = vsel %vm1417, %v2776, %v2780
        %v2783 = vshrl.u32 %v2440, 16
        %v2785 = vrot.slane %v2783, 4
        %v2786 = vshll.u32 %v2440, 16
        %v2788 = vrot.slane %v2786, 5
        %v2789 = vor.u32 %v2785, %v2788
        %v2790 = vrot.slane %v2789, 4
        %v2792 = vshll.u32 %v2441, 16
        %v2794 = vrot.slane %v2792, 5
        %v2795 = vsel %vm1417, %v2790, %v2794
        %v2796 = vshrl.u32 %v2441, 16
        %v2798 = vrot.slane %v2796, 4
        %v2799 = vor.u32 %v2798, %v2794
        %v2800 = vrot.slane %v2799, 4
        %v2802 = vshll.u32 %v2442, 16
        %v2804 = vrot.slane %v2802, 5
        %v2805 = vsel %vm1417, %v2800, %v2804
        %v2807 = vshrl.u32 %v2443, 16
        %v2809 = vrot.slane %v2807, 4
        %v2810 = vshll.u32 %v2443, 16
        %v2812 = vrot.slane %v2810, 5
        %v2813 = vor.u32 %v2809, %v2812
        %v2814 = vrot.slane %v2813, 4
        %v2816 = vshll.u32 %v2444, 16
        %v2818 = vrot.slane %v2816, 5
        %v2819 = vsel %vm1417, %v2814, %v2818
        %v2820 = vshrl.u32 %v2444, 16
        %v2822 = vrot.slane %v2820, 4
        %v2823 = vor.u32 %v2822, %v2818
        %v2824 = vrot.slane %v2823, 4
        %v2826 = vshll.u32 %v2445, 16
        %v2828 = vrot.slane %v2826, 5
        %v2829 = vsel %vm1417, %v2824, %v2828
        %2862 = vst.msk [vmem:[#allocation3 + $0x8] sm:$0xf] %vm676, %v2459
        %2863 = vst.msk [vmem:[#allocation3 + $0x1c] sm:$0xf] %vm676, %v2469
        %2864 = vst.msk [vmem:[#allocation3 + $0x30] sm:$0xf] %vm676, %v2483
        %2865 = vst.msk [vmem:[#allocation3 + $0x44] sm:$0xf] %vm676, %v2493
        %2866 = vst.msk [vmem:[#allocation3 + $0x58] sm:$0xf] %vm676, %v2507
        %2867 = vst.msk [vmem:[#allocation3 + $0x6c] sm:$0xf] %vm676, %v2517
        %2868 = vst.msk [vmem:[#allocation3 + $0x80] sm:$0xf] %vm676, %v2531
        %2869 = vst.msk [vmem:[#allocation3 + $0x94] sm:$0xf] %vm676, %v2541
        %2870 = vst.msk [vmem:[#allocation3 + $0xa8] sm:$0xf] %vm676, %v2555
        %2871 = vst.msk [vmem:[#allocation3 + $0xbc] sm:$0xf] %vm676, %v2565
        %2872 = vst.msk [vmem:[#allocation3 + $0xd0] sm:$0xf] %vm676, %v2579
        %2873 = vst.msk [vmem:[#allocation3 + $0xe4] sm:$0xf] %vm676, %v2589
        %2874 = vst.msk [vmem:[#allocation3 + $0xf8] sm:$0xf] %vm676, %v2603
        %2875 = vst.msk [vmem:[#allocation3 + $0x10c] sm:$0xf] %vm676, %v2613
        %2876 = vst.msk [vmem:[#allocation3 + $0x120] sm:$0xf] %vm676, %v2627
        %2877 = vst.msk [vmem:[#allocation3 + $0x134] sm:$0xf] %vm676, %v2637
        %2878 = vst.msk [vmem:[#allocation3 + $0x148] sm:$0xf] %vm676, %v2651
        %2879 = vst.msk [vmem:[#allocation3 + $0x15c] sm:$0xf] %vm676, %v2661
        %2880 = vst.msk [vmem:[#allocation3 + $0x170] sm:$0xf] %vm676, %v2675
        %2881 = vst.msk [vmem:[#allocation3 + $0x184] sm:$0xf] %vm676, %v2685
        %2882 = vst.msk [vmem:[#allocation3 + $0x198] sm:$0xf] %vm676, %v2699
        %2883 = vst.msk [vmem:[#allocation3 + $0x1ac] sm:$0xf] %vm676, %v2709
        %2884 = vst.msk [vmem:[#allocation3 + $0x1c0] sm:$0xf] %vm676, %v2723
        %2885 = vst.msk [vmem:[#allocation3 + $0x1d4] sm:$0xf] %vm676, %v2733
        %2886 = vst.msk [vmem:[#allocation3 + $0x1e8] sm:$0xf] %vm676, %v2747
        %2887 = vst.msk [vmem:[#allocation3 + $0x1fc] sm:$0xf] %vm676, %v2757
        %2888 = vst.msk [vmem:[#allocation3 + $0x210] sm:$0xf] %vm676, %v2771
        %2889 = vst.msk [vmem:[#allocation3 + $0x224] sm:$0xf] %vm676, %v2781
        %2890 = vst.msk [vmem:[#allocation3 + $0x238] sm:$0xf] %vm676, %v2795
        %2891 = vst.msk [vmem:[#allocation3 + $0x24c] sm:$0xf] %vm676, %v2805
        %2892 = vst.msk [vmem:[#allocation3 + $0x260] sm:$0xf] %vm676, %v2819
        %2893 = vst.msk [vmem:[#allocation3 + $0x274] sm:$0xf] %vm676, %v2829
        %v2894 = vld [vmem:[%s685] sm:$0xe]
        %v2895 = vld [vmem:[%s685 + $0x4] sm:$0xf]
        %v2896 = vld [vmem:[%s685 + $0x8] sm:$0x1]
        %v2897 = vld [vmem:[%s685 + $0xc] sm:$0xe]
        %v2898 = vld [vmem:[%s685 + $0x10] sm:$0xf]
        %v2899 = vld [vmem:[%s685 + $0x14] sm:$0x1]
        %v2900 = vld [vmem:[%s685 + $0x18] sm:$0xe]
        %v2901 = vld [vmem:[%s685 + $0x1c] sm:$0xf]
        %v2902 = vld [vmem:[%s685 + $0x20] sm:$0x1]
        %v2903 = vld [vmem:[%s685 + $0x24] sm:$0xe]
        %v2904 = vld [vmem:[%s685 + $0x28] sm:$0xf]
        %v2905 = vld [vmem:[%s685 + $0x2c] sm:$0x1]
        %v2906 = vld [vmem:[%s685 + $0x30] sm:$0xe]
        %v2907 = vld [vmem:[%s685 + $0x34] sm:$0xf]
        %v2908 = vld [vmem:[%s685 + $0x38] sm:$0x1]
        %v2909 = vld [vmem:[%s685 + $0x3c] sm:$0xe]
        %v2910 = vld [vmem:[%s685 + $0x40] sm:$0xf]
        %v2911 = vld [vmem:[%s685 + $0x44] sm:$0x1]
        %v2912 = vld [vmem:[%s685 + $0x48] sm:$0xe]
        %v2913 = vld [vmem:[%s685 + $0x4c] sm:$0xf]
        %v2914 = vld [vmem:[%s685 + $0x50] sm:$0x1]
        %v2915 = vld [vmem:[%s685 + $0x54] sm:$0xe]
        %v2916 = vld [vmem:[%s685 + $0x58] sm:$0xf]
        %v2917 = vld [vmem:[%s685 + $0x5c] sm:$0x1]
        %v2918 = vld [vmem:[%s685 + $0x60] sm:$0xe]
        %v2919 = vld [vmem:[%s685 + $0x64] sm:$0xf]
        %v2920 = vld [vmem:[%s685 + $0x68] sm:$0x1]
        %v2921 = vld [vmem:[%s685 + $0x6c] sm:$0xe]
        %v2922 = vld [vmem:[%s685 + $0x70] sm:$0xf]
        %v2923 = vld [vmem:[%s685 + $0x74] sm:$0x1]
        %v2924 = vld [vmem:[%s685 + $0x78] sm:$0xe]
        %v2925 = vld [vmem:[%s685 + $0x7c] sm:$0xf]
        %v2926 = vld [vmem:[%s685 + $0x80] sm:$0x1]
        %v2927 = vld [vmem:[%s685 + $0x84] sm:$0xe]
        %v2928 = vld [vmem:[%s685 + $0x88] sm:$0xf]
        %v2929 = vld [vmem:[%s685 + $0x8c] sm:$0x1]
        %v2930 = vld [vmem:[%s685 + $0x90] sm:$0xe]
        %v2931 = vld [vmem:[%s685 + $0x94] sm:$0xf]
        %v2932 = vld [vmem:[%s685 + $0x98] sm:$0x1]
        %v2933 = vld [vmem:[%s685 + $0x9c] sm:$0xe]
        %v2934 = vld [vmem:[%s685 + $0xa0] sm:$0xf]
        %v2935 = vld [vmem:[%s685 + $0xa4] sm:$0x1]
        %v2936 = vld [vmem:[%s685 + $0xa8] sm:$0xe]
        %v2937 = vld [vmem:[%s685 + $0xac] sm:$0xf]
        %v2938 = vld [vmem:[%s685 + $0xb0] sm:$0x1]
        %v2939 = vld [vmem:[%s685 + $0xb4] sm:$0xe]
        %v2940 = vld [vmem:[%s685 + $0xb8] sm:$0xf]
        %v2941 = vld [vmem:[%s685 + $0xbc] sm:$0x1]
        %v2990 = vrot.slane %v2894, 5
        %v2991 = vrot.slane %v2990, 4
        %v2992 = vrot.slane %v2895, 5
        %v2993 = vsel %vm2029, %v2991, %v2992
        %v2994 = vrot.slane %v2992, 4
        %v2995 = vrot.slane %v2896, 5
        %v2996 = vsel %vm2029, %v2994, %v2995
        %v2997 = vrot.slane %v2897, 5
        %v2998 = vrot.slane %v2997, 4
        %v2999 = vrot.slane %v2898, 5
        %v3000 = vsel %vm2029, %v2998, %v2999
        %v3001 = vrot.slane %v2999, 4
        %v3002 = vrot.slane %v2899, 5
        %v3003 = vsel %vm2029, %v3001, %v3002
        %v3004 = vrot.slane %v2900, 5
        %v3005 = vrot.slane %v3004, 4
        %v3006 = vrot.slane %v2901, 5
        %v3007 = vsel %vm2029, %v3005, %v3006
        %v3008 = vrot.slane %v3006, 4
        %v3009 = vrot.slane %v2902, 5
        %v3010 = vsel %vm2029, %v3008, %v3009
        %v3011 = vrot.slane %v2903, 5
        %v3012 = vrot.slane %v3011, 4
        %v3013 = vrot.slane %v2904, 5
        %v3014 = vsel %vm2029, %v3012, %v3013
        %v3015 = vrot.slane %v3013, 4
        %v3016 = vrot.slane %v2905, 5
        %v3017 = vsel %vm2029, %v3015, %v3016
        %v3018 = vrot.slane %v2906, 5
        %v3019 = vrot.slane %v3018, 4
        %v3020 = vrot.slane %v2907, 5
        %v3021 = vsel %vm2029, %v3019, %v3020
        %v3022 = vrot.slane %v3020, 4
        %v3023 = vrot.slane %v2908, 5
        %v3024 = vsel %vm2029, %v3022, %v3023
        %v3025 = vrot.slane %v2909, 5
        %v3026 = vrot.slane %v3025, 4
        %v3027 = vrot.slane %v2910, 5
        %v3028 = vsel %vm2029, %v3026, %v3027
        %v3029 = vrot.slane %v3027, 4
        %v3030 = vrot.slane %v2911, 5
        %v3031 = vsel %vm2029, %v3029, %v3030
        %v3032 = vrot.slane %v2912, 5
        %v3033 = vrot.slane %v3032, 4
        %v3034 = vrot.slane %v2913, 5
        %v3035 = vsel %vm2029, %v3033, %v3034
        %v3036 = vrot.slane %v3034, 4
        %v3037 = vrot.slane %v2914, 5
        %v3038 = vsel %vm2029, %v3036, %v3037
        %v3039 = vrot.slane %v2915, 5
        %v3040 = vrot.slane %v3039, 4
        %v3041 = vrot.slane %v2916, 5
        %v3042 = vsel %vm2029, %v3040, %v3041
        %v3043 = vrot.slane %v3041, 4
        %v3044 = vrot.slane %v2917, 5
        %v3045 = vsel %vm2029, %v3043, %v3044
        %v3046 = vrot.slane %v2918, 5
        %v3047 = vrot.slane %v3046, 4
        %v3048 = vrot.slane %v2919, 5
        %v3049 = vsel %vm2029, %v3047, %v3048
        %v3050 = vrot.slane %v3048, 4
        %v3051 = vrot.slane %v2920, 5
        %v3052 = vsel %vm2029, %v3050, %v3051
        %v3053 = vrot.slane %v2921, 5
        %v3054 = vrot.slane %v3053, 4
        %v3055 = vrot.slane %v2922, 5
        %v3056 = vsel %vm2029, %v3054, %v3055
        %v3057 = vrot.slane %v3055, 4
        %v3058 = vrot.slane %v2923, 5
        %v3059 = vsel %vm2029, %v3057, %v3058
        %v3060 = vrot.slane %v2924, 5
        %v3061 = vrot.slane %v3060, 4
        %v3062 = vrot.slane %v2925, 5
        %v3063 = vsel %vm2029, %v3061, %v3062
        %v3064 = vrot.slane %v3062, 4
        %v3065 = vrot.slane %v2926, 5
        %v3066 = vsel %vm2029, %v3064, %v3065
        %v3067 = vrot.slane %v2927, 5
        %v3068 = vrot.slane %v3067, 4
        %v3069 = vrot.slane %v2928, 5
        %v3070 = vsel %vm2029, %v3068, %v3069
        %v3071 = vrot.slane %v3069, 4
        %v3072 = vrot.slane %v2929, 5
        %v3073 = vsel %vm2029, %v3071, %v3072
        %v3074 = vrot.slane %v2930, 5
        %v3075 = vrot.slane %v3074, 4
        %v3076 = vrot.slane %v2931, 5
        %v3077 = vsel %vm2029, %v3075, %v3076
        %v3078 = vrot.slane %v3076, 4
        %v3079 = vrot.slane %v2932, 5
        %v3080 = vsel %vm2029, %v3078, %v3079
        %v3081 = vrot.slane %v2933, 5
        %v3082 = vrot.slane %v3081, 4
        %v3083 = vrot.slane %v2934, 5
        %v3084 = vsel %vm2029, %v3082, %v3083
        %v3085 = vrot.slane %v3083, 4
        %v3086 = vrot.slane %v2935, 5
        %v3087 = vsel %vm2029, %v3085, %v3086
        %v3088 = vrot.slane %v2936, 5
        %v3089 = vrot.slane %v3088, 4
        %v3090 = vrot.slane %v2937, 5
        %v3091 = vsel %vm2029, %v3089, %v3090
        %v3092 = vrot.slane %v3090, 4
        %v3093 = vrot.slane %v2938, 5
        %v3094 = vsel %vm2029, %v3092, %v3093
        %v3095 = vrot.slane %v2939, 5
        %v3096 = vrot.slane %v3095, 4
        %v3097 = vrot.slane %v2940, 5
        %v3098 = vsel %vm2029, %v3096, %v3097
        %v3099 = vrot.slane %v3097, 4
        %v3100 = vrot.slane %v2941, 5
        %v3101 = vsel %vm2029, %v3099, %v3100
        %3102 = vrot.lane.b32.xlu0 %v2993, 64
        %v3103 = vpop.permute.xlu0 %3102
        %3104 = vrot.lane.b32.xlu0 %v2996, 64
        %v3105 = vpop.permute.xlu0 %3104
        %3106 = vrot.lane.b32.xlu0 %v3000, 64
        %v3107 = vpop.permute.xlu0 %3106
        %3108 = vrot.lane.b32.xlu0 %v3003, 64
        %v3109 = vpop.permute.xlu0 %3108
        %3110 = vrot.lane.b32.xlu0 %v3007, 64
        %v3111 = vpop.permute.xlu0 %3110
        %3112 = vrot.lane.b32.xlu0 %v3010, 64
        %v3113 = vpop.permute.xlu0 %3112
        %3114 = vrot.lane.b32.xlu0 %v3014, 64
        %v3115 = vpop.permute.xlu0 %3114
        %3116 = vrot.lane.b32.xlu0 %v3017, 64
        %v3117 = vpop.permute.xlu0 %3116
        %3118 = vrot.lane.b32.xlu0 %v3021, 64
        %v3119 = vpop.permute.xlu0 %3118
        %3120 = vrot.lane.b32.xlu0 %v3024, 64
        %v3121 = vpop.permute.xlu0 %3120
        %3122 = vrot.lane.b32.xlu0 %v3028, 64
        %v3123 = vpop.permute.xlu0 %3122
        %3124 = vrot.lane.b32.xlu0 %v3031, 64
        %v3125 = vpop.permute.xlu0 %3124
        %3126 = vrot.lane.b32.xlu0 %v3035, 64
        %v3127 = vpop.permute.xlu0 %3126
        %3128 = vrot.lane.b32.xlu0 %v3038, 64
        %v3129 = vpop.permute.xlu0 %3128
        %3130 = vrot.lane.b32.xlu0 %v3042, 64
        %v3131 = vpop.permute.xlu0 %3130
        %3132 = vrot.lane.b32.xlu0 %v3045, 64
        %v3133 = vpop.permute.xlu0 %3132
        %3134 = vrot.lane.b32.xlu0 %v3049, 64
        %v3135 = vpop.permute.xlu0 %3134
        %3136 = vrot.lane.b32.xlu0 %v3052, 64
        %v3137 = vpop.permute.xlu0 %3136
        %3138 = vrot.lane.b32.xlu0 %v3056, 64
        %v3139 = vpop.permute.xlu0 %3138
        %3140 = vrot.lane.b32.xlu0 %v3059, 64
        %v3141 = vpop.permute.xlu0 %3140
        %3142 = vrot.lane.b32.xlu0 %v3063, 64
        %v3143 = vpop.permute.xlu0 %3142
        %3144 = vrot.lane.b32.xlu0 %v3066, 64
        %v3145 = vpop.permute.xlu0 %3144
        %3146 = vrot.lane.b32.xlu0 %v3070, 64
        %v3147 = vpop.permute.xlu0 %3146
        %3148 = vrot.lane.b32.xlu0 %v3073, 64
        %v3149 = vpop.permute.xlu0 %3148
        %3150 = vrot.lane.b32.xlu0 %v3077, 64
        %v3151 = vpop.permute.xlu0 %3150
        %3152 = vrot.lane.b32.xlu0 %v3080, 64
        %v3153 = vpop.permute.xlu0 %3152
        %3154 = vrot.lane.b32.xlu0 %v3084, 64
        %v3155 = vpop.permute.xlu0 %3154
        %3156 = vrot.lane.b32.xlu0 %v3087, 64
        %v3157 = vpop.permute.xlu0 %3156
        %3158 = vrot.lane.b32.xlu0 %v3091, 64
        %v3159 = vpop.permute.xlu0 %3158
        %3160 = vrot.lane.b32.xlu0 %v3094, 64
        %v3161 = vpop.permute.xlu0 %3160
        %3162 = vrot.lane.b32.xlu0 %v3098, 64
        %v3163 = vpop.permute.xlu0 %3162
        %3164 = vrot.lane.b32.xlu0 %v3101, 64
        %v3165 = vpop.permute.xlu0 %3164
        %3198 = vst.msk [vmem:[#allocation3 + $0x8] sm:$0xf] %vm1898, %v3103
        %3199 = vst.msk [vmem:[#allocation3 + $0x1c] sm:$0xf] %vm1898, %v3105
        %3200 = vst.msk [vmem:[#allocation3 + $0x30] sm:$0xf] %vm1898, %v3107
        %3201 = vst.msk [vmem:[#allocation3 + $0x44] sm:$0xf] %vm1898, %v3109
        %3202 = vst.msk [vmem:[#allocation3 + $0x58] sm:$0xf] %vm1898, %v3111
        %3203 = vst.msk [vmem:[#allocation3 + $0x6c] sm:$0xf] %vm1898, %v3113
        %3204 = vst.msk [vmem:[#allocation3 + $0x80] sm:$0xf] %vm1898, %v3115
        %3205 = vst.msk [vmem:[#allocation3 + $0x94] sm:$0xf] %vm1898, %v3117
        %3206 = vst.msk [vmem:[#allocation3 + $0xa8] sm:$0xf] %vm1898, %v3119
        %3207 = vst.msk [vmem:[#allocation3 + $0xbc] sm:$0xf] %vm1898, %v3121
        %3208 = vst.msk [vmem:[#allocation3 + $0xd0] sm:$0xf] %vm1898, %v3123
        %3209 = vst.msk [vmem:[#allocation3 + $0xe4] sm:$0xf] %vm1898, %v3125
        %3210 = vst.msk [vmem:[#allocation3 + $0xf8] sm:$0xf] %vm1898, %v3127
        %3211 = vst.msk [vmem:[#allocation3 + $0x10c] sm:$0xf] %vm1898, %v3129
        %3212 = vst.msk [vmem:[#allocation3 + $0x120] sm:$0xf] %vm1898, %v3131
        %3213 = vst.msk [vmem:[#allocation3 + $0x134] sm:$0xf] %vm1898, %v3133
        %3214 = vst.msk [vmem:[#allocation3 + $0x148] sm:$0xf] %vm1898, %v3135
        %3215 = vst.msk [vmem:[#allocation3 + $0x15c] sm:$0xf] %vm1898, %v3137
        %3216 = vst.msk [vmem:[#allocation3 + $0x170] sm:$0xf] %vm1898, %v3139
        %3217 = vst.msk [vmem:[#allocation3 + $0x184] sm:$0xf] %vm1898, %v3141
        %3218 = vst.msk [vmem:[#allocation3 + $0x198] sm:$0xf] %vm1898, %v3143
        %3219 = vst.msk [vmem:[#allocation3 + $0x1ac] sm:$0xf] %vm1898, %v3145
        %3220 = vst.msk [vmem:[#allocation3 + $0x1c0] sm:$0xf] %vm1898, %v3147
        %3221 = vst.msk [vmem:[#allocation3 + $0x1d4] sm:$0xf] %vm1898, %v3149
        %3222 = vst.msk [vmem:[#allocation3 + $0x1e8] sm:$0xf] %vm1898, %v3151
        %3223 = vst.msk [vmem:[#allocation3 + $0x1fc] sm:$0xf] %vm1898, %v3153
        %3224 = vst.msk [vmem:[#allocation3 + $0x210] sm:$0xf] %vm1898, %v3155
        %3225 = vst.msk [vmem:[#allocation3 + $0x224] sm:$0xf] %vm1898, %v3157
        %3226 = vst.msk [vmem:[#allocation3 + $0x238] sm:$0xf] %vm1898, %v3159
        %3227 = vst.msk [vmem:[#allocation3 + $0x24c] sm:$0xf] %vm1898, %v3161
        %3228 = vst.msk [vmem:[#allocation3 + $0x260] sm:$0xf] %vm1898, %v3163
        %3229 = vst.msk [vmem:[#allocation3 + $0x274] sm:$0xf] %vm1898, %v3165
        %s3230 = scalar_lea.vmem [#allocation2], 24
        %v3231 = vld [vmem:[%s3230] sm:$0xf]
        %v3232 = vld [vmem:[%s3230 + $0x4] sm:$0xf]
        %v3233 = vld [vmem:[%s3230 + $0xc] sm:$0xf]
        %v3234 = vld [vmem:[%s3230 + $0x10] sm:$0xf]
        %v3235 = vld [vmem:[%s3230 + $0x18] sm:$0xf]
        %v3236 = vld [vmem:[%s3230 + $0x1c] sm:$0xf]
        %v3237 = vld [vmem:[%s3230 + $0x24] sm:$0xf]
        %v3238 = vld [vmem:[%s3230 + $0x28] sm:$0xf]
        %v3239 = vld [vmem:[%s3230 + $0x30] sm:$0xf]
        %v3240 = vld [vmem:[%s3230 + $0x34] sm:$0xf]
        %v3241 = vld [vmem:[%s3230 + $0x3c] sm:$0xf]
        %v3242 = vld [vmem:[%s3230 + $0x40] sm:$0xf]
        %v3243 = vld [vmem:[%s3230 + $0x48] sm:$0xf]
        %v3244 = vld [vmem:[%s3230 + $0x4c] sm:$0xf]
        %v3245 = vld [vmem:[%s3230 + $0x54] sm:$0xf]
        %v3246 = vld [vmem:[%s3230 + $0x58] sm:$0xf]
        %v3247 = vld [vmem:[%s3230 + $0x60] sm:$0xf]
        %v3248 = vld [vmem:[%s3230 + $0x64] sm:$0xf]
        %v3249 = vld [vmem:[%s3230 + $0x6c] sm:$0xf]
        %v3250 = vld [vmem:[%s3230 + $0x70] sm:$0xf]
        %v3251 = vld [vmem:[%s3230 + $0x78] sm:$0xf]
        %v3252 = vld [vmem:[%s3230 + $0x7c] sm:$0xf]
        %v3253 = vld [vmem:[%s3230 + $0x84] sm:$0xf]
        %v3254 = vld [vmem:[%s3230 + $0x88] sm:$0xf]
        %v3255 = vld [vmem:[%s3230 + $0x90] sm:$0xf]
        %v3256 = vld [vmem:[%s3230 + $0x94] sm:$0xf]
        %v3257 = vld [vmem:[%s3230 + $0x9c] sm:$0xf]
        %v3258 = vld [vmem:[%s3230 + $0xa0] sm:$0xf]
        %v3259 = vld [vmem:[%s3230 + $0xa8] sm:$0xf]
        %v3260 = vld [vmem:[%s3230 + $0xac] sm:$0xf]
        %v3261 = vld [vmem:[%s3230 + $0xb4] sm:$0xf]
        %v3262 = vld [vmem:[%s3230 + $0xb8] sm:$0xf]
        %3263 = vst.msk [vmem:[#allocation3 + $0xc] sm:$0xf] %vm676, %v3231
        %3264 = vst.msk [vmem:[#allocation3 + $0x20] sm:$0xf] %vm676, %v3232
        %3265 = vst.msk [vmem:[#allocation3 + $0x34] sm:$0xf] %vm676, %v3233
        %3266 = vst.msk [vmem:[#allocation3 + $0x48] sm:$0xf] %vm676, %v3234
        %3267 = vst.msk [vmem:[#allocation3 + $0x5c] sm:$0xf] %vm676, %v3235
        %3268 = vst.msk [vmem:[#allocation3 + $0x70] sm:$0xf] %vm676, %v3236
        %3269 = vst.msk [vmem:[#allocation3 + $0x84] sm:$0xf] %vm676, %v3237
        %3270 = vst.msk [vmem:[#allocation3 + $0x98] sm:$0xf] %vm676, %v3238
        %3271 = vst.msk [vmem:[#allocation3 + $0xac] sm:$0xf] %vm676, %v3239
        %3272 = vst.msk [vmem:[#allocation3 + $0xc0] sm:$0xf] %vm676, %v3240
        %3273 = vst.msk [vmem:[#allocation3 + $0xd4] sm:$0xf] %vm676, %v3241
        %3274 = vst.msk [vmem:[#allocation3 + $0xe8] sm:$0xf] %vm676, %v3242
        %3275 = vst.msk [vmem:[#allocation3 + $0xfc] sm:$0xf] %vm676, %v3243
        %3276 = vst.msk [vmem:[#allocation3 + $0x110] sm:$0xf] %vm676, %v3244
        %3277 = vst.msk [vmem:[#allocation3 + $0x124] sm:$0xf] %vm676, %v3245
        %3278 = vst.msk [vmem:[#allocation3 + $0x138] sm:$0xf] %vm676, %v3246
        %3279 = vst.msk [vmem:[#allocation3 + $0x14c] sm:$0xf] %vm676, %v3247
        %3280 = vst.msk [vmem:[#allocation3 + $0x160] sm:$0xf] %vm676, %v3248
        %3281 = vst.msk [vmem:[#allocation3 + $0x174] sm:$0xf] %vm676, %v3249
        %3282 = vst.msk [vmem:[#allocation3 + $0x188] sm:$0xf] %vm676, %v3250
        %3283 = vst.msk [vmem:[#allocation3 + $0x19c] sm:$0xf] %vm676, %v3251
        %3284 = vst.msk [vmem:[#allocation3 + $0x1b0] sm:$0xf] %vm676, %v3252
        %3285 = vst.msk [vmem:[#allocation3 + $0x1c4] sm:$0xf] %vm676, %v3253
        %3286 = vst.msk [vmem:[#allocation3 + $0x1d8] sm:$0xf] %vm676, %v3254
        %3287 = vst.msk [vmem:[#allocation3 + $0x1ec] sm:$0xf] %vm676, %v3255
        %3288 = vst.msk [vmem:[#allocation3 + $0x200] sm:$0xf] %vm676, %v3256
        %3289 = vst.msk [vmem:[#allocation3 + $0x214] sm:$0xf] %vm676, %v3257
        %3290 = vst.msk [vmem:[#allocation3 + $0x228] sm:$0xf] %vm676, %v3258
        %3291 = vst.msk [vmem:[#allocation3 + $0x23c] sm:$0xf] %vm676, %v3259
        %3292 = vst.msk [vmem:[#allocation3 + $0x250] sm:$0xf] %vm676, %v3260
        %3293 = vst.msk [vmem:[#allocation3 + $0x264] sm:$0xf] %vm676, %v3261
        %3294 = vst.msk [vmem:[#allocation3 + $0x278] sm:$0xf] %vm676, %v3262
        %v3295 = vld [vmem:[%s3230] sm:$0xf]
        %v3296 = vld [vmem:[%s3230 + $0x4] sm:$0xf]
        %v3297 = vld [vmem:[%s3230 + $0x8] sm:$0x1]
        %v3298 = vld [vmem:[%s3230 + $0xc] sm:$0xf]
        %v3299 = vld [vmem:[%s3230 + $0x10] sm:$0xf]
        %v3300 = vld [vmem:[%s3230 + $0x14] sm:$0x1]
        %v3301 = vld [vmem:[%s3230 + $0x18] sm:$0xf]
        %v3302 = vld [vmem:[%s3230 + $0x1c] sm:$0xf]
        %v3303 = vld [vmem:[%s3230 + $0x20] sm:$0x1]
        %v3304 = vld [vmem:[%s3230 + $0x24] sm:$0xf]
        %v3305 = vld [vmem:[%s3230 + $0x28] sm:$0xf]
        %v3306 = vld [vmem:[%s3230 + $0x2c] sm:$0x1]
        %v3307 = vld [vmem:[%s3230 + $0x30] sm:$0xf]
        %v3308 = vld [vmem:[%s3230 + $0x34] sm:$0xf]
        %v3309 = vld [vmem:[%s3230 + $0x38] sm:$0x1]
        %v3310 = vld [vmem:[%s3230 + $0x3c] sm:$0xf]
        %v3311 = vld [vmem:[%s3230 + $0x40] sm:$0xf]
        %v3312 = vld [vmem:[%s3230 + $0x44] sm:$0x1]
        %v3313 = vld [vmem:[%s3230 + $0x48] sm:$0xf]
        %v3314 = vld [vmem:[%s3230 + $0x4c] sm:$0xf]
        %v3315 = vld [vmem:[%s3230 + $0x50] sm:$0x1]
        %v3316 = vld [vmem:[%s3230 + $0x54] sm:$0xf]
        %v3317 = vld [vmem:[%s3230 + $0x58] sm:$0xf]
        %v3318 = vld [vmem:[%s3230 + $0x5c] sm:$0x1]
        %v3319 = vld [vmem:[%s3230 + $0x60] sm:$0xf]
        %v3320 = vld [vmem:[%s3230 + $0x64] sm:$0xf]
        %v3321 = vld [vmem:[%s3230 + $0x68] sm:$0x1]
        %v3322 = vld [vmem:[%s3230 + $0x6c] sm:$0xf]
        %v3323 = vld [vmem:[%s3230 + $0x70] sm:$0xf]
        %v3324 = vld [vmem:[%s3230 + $0x74] sm:$0x1]
        %v3325 = vld [vmem:[%s3230 + $0x78] sm:$0xf]
        %v3326 = vld [vmem:[%s3230 + $0x7c] sm:$0xf]
        %v3327 = vld [vmem:[%s3230 + $0x80] sm:$0x1]
        %v3328 = vld [vmem:[%s3230 + $0x84] sm:$0xf]
        %v3329 = vld [vmem:[%s3230 + $0x88] sm:$0xf]
        %v3330 = vld [vmem:[%s3230 + $0x8c] sm:$0x1]
        %v3331 = vld [vmem:[%s3230 + $0x90] sm:$0xf]
        %v3332 = vld [vmem:[%s3230 + $0x94] sm:$0xf]
        %v3333 = vld [vmem:[%s3230 + $0x98] sm:$0x1]
        %v3334 = vld [vmem:[%s3230 + $0x9c] sm:$0xf]
        %v3335 = vld [vmem:[%s3230 + $0xa0] sm:$0xf]
        %v3336 = vld [vmem:[%s3230 + $0xa4] sm:$0x1]
        %v3337 = vld [vmem:[%s3230 + $0xa8] sm:$0xf]
        %v3338 = vld [vmem:[%s3230 + $0xac] sm:$0xf]
        %v3339 = vld [vmem:[%s3230 + $0xb0] sm:$0x1]
        %v3340 = vld [vmem:[%s3230 + $0xb4] sm:$0xf]
        %v3341 = vld [vmem:[%s3230 + $0xb8] sm:$0xf]
        %v3342 = vld [vmem:[%s3230 + $0xbc] sm:$0x1]
        %v3344 = vshrl.u32 %v3295, 16
        %v3346 = vrot.slane %v3344, 4
        %v3347 = vshll.u32 %v3295, 16
        %v3349 = vrot.slane %v3347, 5
        %v3350 = vor.u32 %v3346, %v3349
        %v3351 = vrot.slane %v3350, 4
        %v3353 = vshll.u32 %v3296, 16
        %v3355 = vrot.slane %v3353, 5
        %v3356 = vsel %vm1417, %v3351, %v3355
        %v3357 = vshrl.u32 %v3296, 16
        %v3359 = vrot.slane %v3357, 4
        %v3360 = vor.u32 %v3359, %v3355
        %v3361 = vrot.slane %v3360, 4
        %v3363 = vshll.u32 %v3297, 16
        %v3365 = vrot.slane %v3363, 5
        %v3366 = vsel %vm1417, %v3361, %v3365
        %v3368 = vshrl.u32 %v3298, 16
        %v3370 = vrot.slane %v3368, 4
        %v3371 = vshll.u32 %v3298, 16
        %v3373 = vrot.slane %v3371, 5
        %v3374 = vor.u32 %v3370, %v3373
        %v3375 = vrot.slane %v3374, 4
        %v3377 = vshll.u32 %v3299, 16
        %v3379 = vrot.slane %v3377, 5
        %v3380 = vsel %vm1417, %v3375, %v3379
        %v3381 = vshrl.u32 %v3299, 16
        %v3383 = vrot.slane %v3381, 4
        %v3384 = vor.u32 %v3383, %v3379
        %v3385 = vrot.slane %v3384, 4
        %v3387 = vshll.u32 %v3300, 16
        %v3389 = vrot.slane %v3387, 5
        %v3390 = vsel %vm1417, %v3385, %v3389
        %v3392 = vshrl.u32 %v3301, 16
        %v3394 = vrot.slane %v3392, 4
        %v3395 = vshll.u32 %v3301, 16
        %v3397 = vrot.slane %v3395, 5
        %v3398 = vor.u32 %v3394, %v3397
        %v3399 = vrot.slane %v3398, 4
        %v3401 = vshll.u32 %v3302, 16
        %v3403 = vrot.slane %v3401, 5
        %v3404 = vsel %vm1417, %v3399, %v3403
        %v3405 = vshrl.u32 %v3302, 16
        %v3407 = vrot.slane %v3405, 4
        %v3408 = vor.u32 %v3407, %v3403
        %v3409 = vrot.slane %v3408, 4
        %v3411 = vshll.u32 %v3303, 16
        %v3413 = vrot.slane %v3411, 5
        %v3414 = vsel %vm1417, %v3409, %v3413
        %v3416 = vshrl.u32 %v3304, 16
        %v3418 = vrot.slane %v3416, 4
        %v3419 = vshll.u32 %v3304, 16
        %v3421 = vrot.slane %v3419, 5
        %v3422 = vor.u32 %v3418, %v3421
        %v3423 = vrot.slane %v3422, 4
        %v3425 = vshll.u32 %v3305, 16
        %v3427 = vrot.slane %v3425, 5
        %v3428 = vsel %vm1417, %v3423, %v3427
        %v3429 = vshrl.u32 %v3305, 16
        %v3431 = vrot.slane %v3429, 4
        %v3432 = vor.u32 %v3431, %v3427
        %v3433 = vrot.slane %v3432, 4
        %v3435 = vshll.u32 %v3306, 16
        %v3437 = vrot.slane %v3435, 5
        %v3438 = vsel %vm1417, %v3433, %v3437
        %v3440 = vshrl.u32 %v3307, 16
        %v3442 = vrot.slane %v3440, 4
        %v3443 = vshll.u32 %v3307, 16
        %v3445 = vrot.slane %v3443, 5
        %v3446 = vor.u32 %v3442, %v3445
        %v3447 = vrot.slane %v3446, 4
        %v3449 = vshll.u32 %v3308, 16
        %v3451 = vrot.slane %v3449, 5
        %v3452 = vsel %vm1417, %v3447, %v3451
        %v3453 = vshrl.u32 %v3308, 16
        %v3455 = vrot.slane %v3453, 4
        %v3456 = vor.u32 %v3455, %v3451
        %v3457 = vrot.slane %v3456, 4
        %v3459 = vshll.u32 %v3309, 16
        %v3461 = vrot.slane %v3459, 5
        %v3462 = vsel %vm1417, %v3457, %v3461
        %v3464 = vshrl.u32 %v3310, 16
        %v3466 = vrot.slane %v3464, 4
        %v3467 = vshll.u32 %v3310, 16
        %v3469 = vrot.slane %v3467, 5
        %v3470 = vor.u32 %v3466, %v3469
        %v3471 = vrot.slane %v3470, 4
        %v3473 = vshll.u32 %v3311, 16
        %v3475 = vrot.slane %v3473, 5
        %v3476 = vsel %vm1417, %v3471, %v3475
        %v3477 = vshrl.u32 %v3311, 16
        %v3479 = vrot.slane %v3477, 4
        %v3480 = vor.u32 %v3479, %v3475
        %v3481 = vrot.slane %v3480, 4
        %v3483 = vshll.u32 %v3312, 16
        %v3485 = vrot.slane %v3483, 5
        %v3486 = vsel %vm1417, %v3481, %v3485
        %v3488 = vshrl.u32 %v3313, 16
        %v3490 = vrot.slane %v3488, 4
        %v3491 = vshll.u32 %v3313, 16
        %v3493 = vrot.slane %v3491, 5
        %v3494 = vor.u32 %v3490, %v3493
        %v3495 = vrot.slane %v3494, 4
        %v3497 = vshll.u32 %v3314, 16
        %v3499 = vrot.slane %v3497, 5
        %v3500 = vsel %vm1417, %v3495, %v3499
        %v3501 = vshrl.u32 %v3314, 16
        %v3503 = vrot.slane %v3501, 4
        %v3504 = vor.u32 %v3503, %v3499
        %v3505 = vrot.slane %v3504, 4
        %v3507 = vshll.u32 %v3315, 16
        %v3509 = vrot.slane %v3507, 5
        %v3510 = vsel %vm1417, %v3505, %v3509
        %v3512 = vshrl.u32 %v3316, 16
        %v3514 = vrot.slane %v3512, 4
        %v3515 = vshll.u32 %v3316, 16
        %v3517 = vrot.slane %v3515, 5
        %v3518 = vor.u32 %v3514, %v3517
        %v3519 = vrot.slane %v3518, 4
        %v3521 = vshll.u32 %v3317, 16
        %v3523 = vrot.slane %v3521, 5
        %v3524 = vsel %vm1417, %v3519, %v3523
        %v3525 = vshrl.u32 %v3317, 16
        %v3527 = vrot.slane %v3525, 4
        %v3528 = vor.u32 %v3527, %v3523
        %v3529 = vrot.slane %v3528, 4
        %v3531 = vshll.u32 %v3318, 16
        %v3533 = vrot.slane %v3531, 5
        %v3534 = vsel %vm1417, %v3529, %v3533
        %v3536 = vshrl.u32 %v3319, 16
        %v3538 = vrot.slane %v3536, 4
        %v3539 = vshll.u32 %v3319, 16
        %v3541 = vrot.slane %v3539, 5
        %v3542 = vor.u32 %v3538, %v3541
        %v3543 = vrot.slane %v3542, 4
        %v3545 = vshll.u32 %v3320, 16
        %v3547 = vrot.slane %v3545, 5
        %v3548 = vsel %vm1417, %v3543, %v3547
        %v3549 = vshrl.u32 %v3320, 16
        %v3551 = vrot.slane %v3549, 4
        %v3552 = vor.u32 %v3551, %v3547
        %v3553 = vrot.slane %v3552, 4
        %v3555 = vshll.u32 %v3321, 16
        %v3557 = vrot.slane %v3555, 5
        %v3558 = vsel %vm1417, %v3553, %v3557
        %v3560 = vshrl.u32 %v3322, 16
        %v3562 = vrot.slane %v3560, 4
        %v3563 = vshll.u32 %v3322, 16
        %v3565 = vrot.slane %v3563, 5
        %v3566 = vor.u32 %v3562, %v3565
        %v3567 = vrot.slane %v3566, 4
        %v3569 = vshll.u32 %v3323, 16
        %v3571 = vrot.slane %v3569, 5
        %v3572 = vsel %vm1417, %v3567, %v3571
        %v3573 = vshrl.u32 %v3323, 16
        %v3575 = vrot.slane %v3573, 4
        %v3576 = vor.u32 %v3575, %v3571
        %v3577 = vrot.slane %v3576, 4
        %v3579 = vshll.u32 %v3324, 16
        %v3581 = vrot.slane %v3579, 5
        %v3582 = vsel %vm1417, %v3577, %v3581
        %v3584 = vshrl.u32 %v3325, 16
        %v3586 = vrot.slane %v3584, 4
        %v3587 = vshll.u32 %v3325, 16
        %v3589 = vrot.slane %v3587, 5
        %v3590 = vor.u32 %v3586, %v3589
        %v3591 = vrot.slane %v3590, 4
        %v3593 = vshll.u32 %v3326, 16
        %v3595 = vrot.slane %v3593, 5
        %v3596 = vsel %vm1417, %v3591, %v3595
        %v3597 = vshrl.u32 %v3326, 16
        %v3599 = vrot.slane %v3597, 4
        %v3600 = vor.u32 %v3599, %v3595
        %v3601 = vrot.slane %v3600, 4
        %v3603 = vshll.u32 %v3327, 16
        %v3605 = vrot.slane %v3603, 5
        %v3606 = vsel %vm1417, %v3601, %v3605
        %v3608 = vshrl.u32 %v3328, 16
        %v3610 = vrot.slane %v3608, 4
        %v3611 = vshll.u32 %v3328, 16
        %v3613 = vrot.slane %v3611, 5
        %v3614 = vor.u32 %v3610, %v3613
        %v3615 = vrot.slane %v3614, 4
        %v3617 = vshll.u32 %v3329, 16
        %v3619 = vrot.slane %v3617, 5
        %v3620 = vsel %vm1417, %v3615, %v3619
        %v3621 = vshrl.u32 %v3329, 16
        %v3623 = vrot.slane %v3621, 4
        %v3624 = vor.u32 %v3623, %v3619
        %v3625 = vrot.slane %v3624, 4
        %v3627 = vshll.u32 %v3330, 16
        %v3629 = vrot.slane %v3627, 5
        %v3630 = vsel %vm1417, %v3625, %v3629
        %v3632 = vshrl.u32 %v3331, 16
        %v3634 = vrot.slane %v3632, 4
        %v3635 = vshll.u32 %v3331, 16
        %v3637 = vrot.slane %v3635, 5
        %v3638 = vor.u32 %v3634, %v3637
        %v3639 = vrot.slane %v3638, 4
        %v3641 = vshll.u32 %v3332, 16
        %v3643 = vrot.slane %v3641, 5
        %v3644 = vsel %vm1417, %v3639, %v3643
        %v3645 = vshrl.u32 %v3332, 16
        %v3647 = vrot.slane %v3645, 4
        %v3648 = vor.u32 %v3647, %v3643
        %v3649 = vrot.slane %v3648, 4
        %v3651 = vshll.u32 %v3333, 16
        %v3653 = vrot.slane %v3651, 5
        %v3654 = vsel %vm1417, %v3649, %v3653
        %v3656 = vshrl.u32 %v3334, 16
        %v3658 = vrot.slane %v3656, 4
        %v3659 = vshll.u32 %v3334, 16
        %v3661 = vrot.slane %v3659, 5
        %v3662 = vor.u32 %v3658, %v3661
        %v3663 = vrot.slane %v3662, 4
        %v3665 = vshll.u32 %v3335, 16
        %v3667 = vrot.slane %v3665, 5
        %v3668 = vsel %vm1417, %v3663, %v3667
        %v3669 = vshrl.u32 %v3335, 16
        %v3671 = vrot.slane %v3669, 4
        %v3672 = vor.u32 %v3671, %v3667
        %v3673 = vrot.slane %v3672, 4
        %v3675 = vshll.u32 %v3336, 16
        %v3677 = vrot.slane %v3675, 5
        %v3678 = vsel %vm1417, %v3673, %v3677
        %v3680 = vshrl.u32 %v3337, 16
        %v3682 = vrot.slane %v3680, 4
        %v3683 = vshll.u32 %v3337, 16
        %v3685 = vrot.slane %v3683, 5
        %v3686 = vor.u32 %v3682, %v3685
        %v3687 = vrot.slane %v3686, 4
        %v3689 = vshll.u32 %v3338, 16
        %v3691 = vrot.slane %v3689, 5
        %v3692 = vsel %vm1417, %v3687, %v3691
        %v3693 = vshrl.u32 %v3338, 16
        %v3695 = vrot.slane %v3693, 4
        %v3696 = vor.u32 %v3695, %v3691
        %v3697 = vrot.slane %v3696, 4
        %v3699 = vshll.u32 %v3339, 16
        %v3701 = vrot.slane %v3699, 5
        %v3702 = vsel %vm1417, %v3697, %v3701
        %v3704 = vshrl.u32 %v3340, 16
        %v3706 = vrot.slane %v3704, 4
        %v3707 = vshll.u32 %v3340, 16
        %v3709 = vrot.slane %v3707, 5
        %v3710 = vor.u32 %v3706, %v3709
        %v3711 = vrot.slane %v3710, 4
        %v3713 = vshll.u32 %v3341, 16
        %v3715 = vrot.slane %v3713, 5
        %v3716 = vsel %vm1417, %v3711, %v3715
        %v3717 = vshrl.u32 %v3341, 16
        %v3719 = vrot.slane %v3717, 4
        %v3720 = vor.u32 %v3719, %v3715
        %v3721 = vrot.slane %v3720, 4
        %v3723 = vshll.u32 %v3342, 16
        %v3725 = vrot.slane %v3723, 5
        %v3726 = vsel %vm1417, %v3721, %v3725
        %3727 = vrot.lane.b32.xlu0 %v3356, 64
        %v3728 = vpop.permute.xlu0 %3727
        %3729 = vrot.lane.b32.xlu0 %v3366, 64
        %v3730 = vpop.permute.xlu0 %3729
        %3731 = vrot.lane.b32.xlu0 %v3380, 64
        %v3732 = vpop.permute.xlu0 %3731
        %3733 = vrot.lane.b32.xlu0 %v3390, 64
        %v3734 = vpop.permute.xlu0 %3733
        %3735 = vrot.lane.b32.xlu0 %v3404, 64
        %v3736 = vpop.permute.xlu0 %3735
        %3737 = vrot.lane.b32.xlu0 %v3414, 64
        %v3738 = vpop.permute.xlu0 %3737
        %3739 = vrot.lane.b32.xlu0 %v3428, 64
        %v3740 = vpop.permute.xlu0 %3739
        %3741 = vrot.lane.b32.xlu0 %v3438, 64
        %v3742 = vpop.permute.xlu0 %3741
        %3743 = vrot.lane.b32.xlu0 %v3452, 64
        %v3744 = vpop.permute.xlu0 %3743
        %3745 = vrot.lane.b32.xlu0 %v3462, 64
        %v3746 = vpop.permute.xlu0 %3745
        %3747 = vrot.lane.b32.xlu0 %v3476, 64
        %v3748 = vpop.permute.xlu0 %3747
        %3749 = vrot.lane.b32.xlu0 %v3486, 64
        %v3750 = vpop.permute.xlu0 %3749
        %3751 = vrot.lane.b32.xlu0 %v3500, 64
        %v3752 = vpop.permute.xlu0 %3751
        %3753 = vrot.lane.b32.xlu0 %v3510, 64
        %v3754 = vpop.permute.xlu0 %3753
        %3755 = vrot.lane.b32.xlu0 %v3524, 64
        %v3756 = vpop.permute.xlu0 %3755
        %3757 = vrot.lane.b32.xlu0 %v3534, 64
        %v3758 = vpop.permute.xlu0 %3757
        %3759 = vrot.lane.b32.xlu0 %v3548, 64
        %v3760 = vpop.permute.xlu0 %3759
        %3761 = vrot.lane.b32.xlu0 %v3558, 64
        %v3762 = vpop.permute.xlu0 %3761
        %3763 = vrot.lane.b32.xlu0 %v3572, 64
        %v3764 = vpop.permute.xlu0 %3763
        %3765 = vrot.lane.b32.xlu0 %v3582, 64
        %v3766 = vpop.permute.xlu0 %3765
        %3767 = vrot.lane.b32.xlu0 %v3596, 64
        %v3768 = vpop.permute.xlu0 %3767
        %3769 = vrot.lane.b32.xlu0 %v3606, 64
        %v3770 = vpop.permute.xlu0 %3769
        %3771 = vrot.lane.b32.xlu0 %v3620, 64
        %v3772 = vpop.permute.xlu0 %3771
        %3773 = vrot.lane.b32.xlu0 %v3630, 64
        %v3774 = vpop.permute.xlu0 %3773
        %3775 = vrot.lane.b32.xlu0 %v3644, 64
        %v3776 = vpop.permute.xlu0 %3775
        %3777 = vrot.lane.b32.xlu0 %v3654, 64
        %v3778 = vpop.permute.xlu0 %3777
        %3779 = vrot.lane.b32.xlu0 %v3668, 64
        %v3780 = vpop.permute.xlu0 %3779
        %3781 = vrot.lane.b32.xlu0 %v3678, 64
        %v3782 = vpop.permute.xlu0 %3781
        %3783 = vrot.lane.b32.xlu0 %v3692, 64
        %v3784 = vpop.permute.xlu0 %3783
        %3785 = vrot.lane.b32.xlu0 %v3702, 64
        %v3786 = vpop.permute.xlu0 %3785
        %3787 = vrot.lane.b32.xlu0 %v3716, 64
        %v3788 = vpop.permute.xlu0 %3787
        %3789 = vrot.lane.b32.xlu0 %v3726, 64
        %v3790 = vpop.permute.xlu0 %3789
        %3823 = vst.msk [vmem:[#allocation3 + $0xc] sm:$0xf] %vm1898, %v3728
        %3824 = vst.msk [vmem:[#allocation3 + $0x20] sm:$0xf] %vm1898, %v3730
        %3825 = vst.msk [vmem:[#allocation3 + $0x34] sm:$0xf] %vm1898, %v3732
        %3826 = vst.msk [vmem:[#allocation3 + $0x48] sm:$0xf] %vm1898, %v3734
        %3827 = vst.msk [vmem:[#allocation3 + $0x5c] sm:$0xf] %vm1898, %v3736
        %3828 = vst.msk [vmem:[#allocation3 + $0x70] sm:$0xf] %vm1898, %v3738
        %3829 = vst.msk [vmem:[#allocation3 + $0x84] sm:$0xf] %vm1898, %v3740
        %3830 = vst.msk [vmem:[#allocation3 + $0x98] sm:$0xf] %vm1898, %v3742
        %3831 = vst.msk [vmem:[#allocation3 + $0xac] sm:$0xf] %vm1898, %v3744
        %3832 = vst.msk [vmem:[#allocation3 + $0xc0] sm:$0xf] %vm1898, %v3746
        %3833 = vst.msk [vmem:[#allocation3 + $0xd4] sm:$0xf] %vm1898, %v3748
        %3834 = vst.msk [vmem:[#allocation3 + $0xe8] sm:$0xf] %vm1898, %v3750
        %3835 = vst.msk [vmem:[#allocation3 + $0xfc] sm:$0xf] %vm1898, %v3752
        %3836 = vst.msk [vmem:[#allocation3 + $0x110] sm:$0xf] %vm1898, %v3754
        %3837 = vst.msk [vmem:[#allocation3 + $0x124] sm:$0xf] %vm1898, %v3756
        %3838 = vst.msk [vmem:[#allocation3 + $0x138] sm:$0xf] %vm1898, %v3758
        %3839 = vst.msk [vmem:[#allocation3 + $0x14c] sm:$0xf] %vm1898, %v3760
        %3840 = vst.msk [vmem:[#allocation3 + $0x160] sm:$0xf] %vm1898, %v3762
        %3841 = vst.msk [vmem:[#allocation3 + $0x174] sm:$0xf] %vm1898, %v3764
        %3842 = vst.msk [vmem:[#allocation3 + $0x188] sm:$0xf] %vm1898, %v3766
        %3843 = vst.msk [vmem:[#allocation3 + $0x19c] sm:$0xf] %vm1898, %v3768
        %3844 = vst.msk [vmem:[#allocation3 + $0x1b0] sm:$0xf] %vm1898, %v3770
        %3845 = vst.msk [vmem:[#allocation3 + $0x1c4] sm:$0xf] %vm1898, %v3772
        %3846 = vst.msk [vmem:[#allocation3 + $0x1d8] sm:$0xf] %vm1898, %v3774
        %3847 = vst.msk [vmem:[#allocation3 + $0x1ec] sm:$0xf] %vm1898, %v3776
        %3848 = vst.msk [vmem:[#allocation3 + $0x200] sm:$0xf] %vm1898, %v3778
        %3849 = vst.msk [vmem:[#allocation3 + $0x214] sm:$0xf] %vm1898, %v3780
        %3850 = vst.msk [vmem:[#allocation3 + $0x228] sm:$0xf] %vm1898, %v3782
        %3851 = vst.msk [vmem:[#allocation3 + $0x23c] sm:$0xf] %vm1898, %v3784
        %3852 = vst.msk [vmem:[#allocation3 + $0x250] sm:$0xf] %vm1898, %v3786
        %3853 = vst.msk [vmem:[#allocation3 + $0x264] sm:$0xf] %vm1898, %v3788
        %3854 = vst.msk [vmem:[#allocation3 + $0x278] sm:$0xf] %vm1898, %v3790
        %v3855 = vld [vmem:[%s3230] sm:$0xe]
        %v3856 = vld [vmem:[%s3230 + $0x4] sm:$0xf]
        %v3857 = vld [vmem:[%s3230 + $0x8] sm:$0x1]
        %v3858 = vld [vmem:[%s3230 + $0xc] sm:$0xe]
        %v3859 = vld [vmem:[%s3230 + $0x10] sm:$0xf]
        %v3860 = vld [vmem:[%s3230 + $0x14] sm:$0x1]
        %v3861 = vld [vmem:[%s3230 + $0x18] sm:$0xe]
        %v3862 = vld [vmem:[%s3230 + $0x1c] sm:$0xf]
        %v3863 = vld [vmem:[%s3230 + $0x20] sm:$0x1]
        %v3864 = vld [vmem:[%s3230 + $0x24] sm:$0xe]
        %v3865 = vld [vmem:[%s3230 + $0x28] sm:$0xf]
        %v3866 = vld [vmem:[%s3230 + $0x2c] sm:$0x1]
        %v3867 = vld [vmem:[%s3230 + $0x30] sm:$0xe]
        %v3868 = vld [vmem:[%s3230 + $0x34] sm:$0xf]
        %v3869 = vld [vmem:[%s3230 + $0x38] sm:$0x1]
        %v3870 = vld [vmem:[%s3230 + $0x3c] sm:$0xe]
        %v3871 = vld [vmem:[%s3230 + $0x40] sm:$0xf]
        %v3872 = vld [vmem:[%s3230 + $0x44] sm:$0x1]
        %v3873 = vld [vmem:[%s3230 + $0x48] sm:$0xe]
        %v3874 = vld [vmem:[%s3230 + $0x4c] sm:$0xf]
        %v3875 = vld [vmem:[%s3230 + $0x50] sm:$0x1]
        %v3876 = vld [vmem:[%s3230 + $0x54] sm:$0xe]
        %v3877 = vld [vmem:[%s3230 + $0x58] sm:$0xf]
        %v3878 = vld [vmem:[%s3230 + $0x5c] sm:$0x1]
        %v3879 = vld [vmem:[%s3230 + $0x60] sm:$0xe]
        %v3880 = vld [vmem:[%s3230 + $0x64] sm:$0xf]
        %v3881 = vld [vmem:[%s3230 + $0x68] sm:$0x1]
        %v3882 = vld [vmem:[%s3230 + $0x6c] sm:$0xe]
        %v3883 = vld [vmem:[%s3230 + $0x70] sm:$0xf]
        %v3884 = vld [vmem:[%s3230 + $0x74] sm:$0x1]
        %v3885 = vld [vmem:[%s3230 + $0x78] sm:$0xe]
        %v3886 = vld [vmem:[%s3230 + $0x7c] sm:$0xf]
        %v3887 = vld [vmem:[%s3230 + $0x80] sm:$0x1]
        %v3888 = vld [vmem:[%s3230 + $0x84] sm:$0xe]
        %v3889 = vld [vmem:[%s3230 + $0x88] sm:$0xf]
        %v3890 = vld [vmem:[%s3230 + $0x8c] sm:$0x1]
        %v3891 = vld [vmem:[%s3230 + $0x90] sm:$0xe]
        %v3892 = vld [vmem:[%s3230 + $0x94] sm:$0xf]
        %v3893 = vld [vmem:[%s3230 + $0x98] sm:$0x1]
        %v3894 = vld [vmem:[%s3230 + $0x9c] sm:$0xe]
        %v3895 = vld [vmem:[%s3230 + $0xa0] sm:$0xf]
        %v3896 = vld [vmem:[%s3230 + $0xa4] sm:$0x1]
        %v3897 = vld [vmem:[%s3230 + $0xa8] sm:$0xe]
        %v3898 = vld [vmem:[%s3230 + $0xac] sm:$0xf]
        %v3899 = vld [vmem:[%s3230 + $0xb0] sm:$0x1]
        %v3900 = vld [vmem:[%s3230 + $0xb4] sm:$0xe]
        %v3901 = vld [vmem:[%s3230 + $0xb8] sm:$0xf]
        %v3902 = vld [vmem:[%s3230 + $0xbc] sm:$0x1]
        %v3951 = vrot.slane %v3855, 5
        %v3952 = vrot.slane %v3951, 4
        %v3953 = vrot.slane %v3856, 5
        %v3954 = vsel %vm2029, %v3952, %v3953
        %v3955 = vrot.slane %v3953, 4
        %v3956 = vrot.slane %v3857, 5
        %v3957 = vsel %vm2029, %v3955, %v3956
        %v3958 = vrot.slane %v3858, 5
        %v3959 = vrot.slane %v3958, 4
        %v3960 = vrot.slane %v3859, 5
        %v3961 = vsel %vm2029, %v3959, %v3960
        %v3962 = vrot.slane %v3960, 4
        %v3963 = vrot.slane %v3860, 5
        %v3964 = vsel %vm2029, %v3962, %v3963
        %v3965 = vrot.slane %v3861, 5
        %v3966 = vrot.slane %v3965, 4
        %v3967 = vrot.slane %v3862, 5
        %v3968 = vsel %vm2029, %v3966, %v3967
        %v3969 = vrot.slane %v3967, 4
        %v3970 = vrot.slane %v3863, 5
        %v3971 = vsel %vm2029, %v3969, %v3970
        %v3972 = vrot.slane %v3864, 5
        %v3973 = vrot.slane %v3972, 4
        %v3974 = vrot.slane %v3865, 5
        %v3975 = vsel %vm2029, %v3973, %v3974
        %v3976 = vrot.slane %v3974, 4
        %v3977 = vrot.slane %v3866, 5
        %v3978 = vsel %vm2029, %v3976, %v3977
        %v3979 = vrot.slane %v3867, 5
        %v3980 = vrot.slane %v3979, 4
        %v3981 = vrot.slane %v3868, 5
        %v3982 = vsel %vm2029, %v3980, %v3981
        %v3983 = vrot.slane %v3981, 4
        %v3984 = vrot.slane %v3869, 5
        %v3985 = vsel %vm2029, %v3983, %v3984
        %v3986 = vrot.slane %v3870, 5
        %v3987 = vrot.slane %v3986, 4
        %v3988 = vrot.slane %v3871, 5
        %v3989 = vsel %vm2029, %v3987, %v3988
        %v3990 = vrot.slane %v3988, 4
        %v3991 = vrot.slane %v3872, 5
        %v3992 = vsel %vm2029, %v3990, %v3991
        %v3993 = vrot.slane %v3873, 5
        %v3994 = vrot.slane %v3993, 4
        %v3995 = vrot.slane %v3874, 5
        %v3996 = vsel %vm2029, %v3994, %v3995
        %v3997 = vrot.slane %v3995, 4
        %v3998 = vrot.slane %v3875, 5
        %v3999 = vsel %vm2029, %v3997, %v3998
        %v4000 = vrot.slane %v3876, 5
        %v4001 = vrot.slane %v4000, 4
        %v4002 = vrot.slane %v3877, 5
        %v4003 = vsel %vm2029, %v4001, %v4002
        %v4004 = vrot.slane %v4002, 4
        %v4005 = vrot.slane %v3878, 5
        %v4006 = vsel %vm2029, %v4004, %v4005
        %v4007 = vrot.slane %v3879, 5
        %v4008 = vrot.slane %v4007, 4
        %v4009 = vrot.slane %v3880, 5
        %v4010 = vsel %vm2029, %v4008, %v4009
        %v4011 = vrot.slane %v4009, 4
        %v4012 = vrot.slane %v3881, 5
        %v4013 = vsel %vm2029, %v4011, %v4012
        %v4014 = vrot.slane %v3882, 5
        %v4015 = vrot.slane %v4014, 4
        %v4016 = vrot.slane %v3883, 5
        %v4017 = vsel %vm2029, %v4015, %v4016
        %v4018 = vrot.slane %v4016, 4
        %v4019 = vrot.slane %v3884, 5
        %v4020 = vsel %vm2029, %v4018, %v4019
        %v4021 = vrot.slane %v3885, 5
        %v4022 = vrot.slane %v4021, 4
        %v4023 = vrot.slane %v3886, 5
        %v4024 = vsel %vm2029, %v4022, %v4023
        %v4025 = vrot.slane %v4023, 4
        %v4026 = vrot.slane %v3887, 5
        %v4027 = vsel %vm2029, %v4025, %v4026
        %v4028 = vrot.slane %v3888, 5
        %v4029 = vrot.slane %v4028, 4
        %v4030 = vrot.slane %v3889, 5
        %v4031 = vsel %vm2029, %v4029, %v4030
        %v4032 = vrot.slane %v4030, 4
        %v4033 = vrot.slane %v3890, 5
        %v4034 = vsel %vm2029, %v4032, %v4033
        %v4035 = vrot.slane %v3891, 5
        %v4036 = vrot.slane %v4035, 4
        %v4037 = vrot.slane %v3892, 5
        %v4038 = vsel %vm2029, %v4036, %v4037
        %v4039 = vrot.slane %v4037, 4
        %v4040 = vrot.slane %v3893, 5
        %v4041 = vsel %vm2029, %v4039, %v4040
        %v4042 = vrot.slane %v3894, 5
        %v4043 = vrot.slane %v4042, 4
        %v4044 = vrot.slane %v3895, 5
        %v4045 = vsel %vm2029, %v4043, %v4044
        %v4046 = vrot.slane %v4044, 4
        %v4047 = vrot.slane %v3896, 5
        %v4048 = vsel %vm2029, %v4046, %v4047
        %v4049 = vrot.slane %v3897, 5
        %v4050 = vrot.slane %v4049, 4
        %v4051 = vrot.slane %v3898, 5
        %v4052 = vsel %vm2029, %v4050, %v4051
        %v4053 = vrot.slane %v4051, 4
        %v4054 = vrot.slane %v3899, 5
        %v4055 = vsel %vm2029, %v4053, %v4054
        %v4056 = vrot.slane %v3900, 5
        %v4057 = vrot.slane %v4056, 4
        %v4058 = vrot.slane %v3901, 5
        %v4059 = vsel %vm2029, %v4057, %v4058
        %v4060 = vrot.slane %v4058, 4
        %v4061 = vrot.slane %v3902, 5
        %v4062 = vsel %vm2029, %v4060, %v4061
        %4095 = vst.msk [vmem:[#allocation3 + $0x10] sm:$0xf] %vm676, %v3954
        %4096 = vst.msk [vmem:[#allocation3 + $0x24] sm:$0xf] %vm676, %v3957
        %4097 = vst.msk [vmem:[#allocation3 + $0x38] sm:$0xf] %vm676, %v3961
        %4098 = vst.msk [vmem:[#allocation3 + $0x4c] sm:$0xf] %vm676, %v3964
        %4099 = vst.msk [vmem:[#allocation3 + $0x60] sm:$0xf] %vm676, %v3968
        %4100 = vst.msk [vmem:[#allocation3 + $0x74] sm:$0xf] %vm676, %v3971
        %4101 = vst.msk [vmem:[#allocation3 + $0x88] sm:$0xf] %vm676, %v3975
        %4102 = vst.msk [vmem:[#allocation3 + $0x9c] sm:$0xf] %vm676, %v3978
        %4103 = vst.msk [vmem:[#allocation3 + $0xb0] sm:$0xf] %vm676, %v3982
        %4104 = vst.msk [vmem:[#allocation3 + $0xc4] sm:$0xf] %vm676, %v3985
        %4105 = vst.msk [vmem:[#allocation3 + $0xd8] sm:$0xf] %vm676, %v3989
        %4106 = vst.msk [vmem:[#allocation3 + $0xec] sm:$0xf] %vm676, %v3992
        %4107 = vst.msk [vmem:[#allocation3 + $0x100] sm:$0xf] %vm676, %v3996
        %4108 = vst.msk [vmem:[#allocation3 + $0x114] sm:$0xf] %vm676, %v3999
        %4109 = vst.msk [vmem:[#allocation3 + $0x128] sm:$0xf] %vm676, %v4003
        %4110 = vst.msk [vmem:[#allocation3 + $0x13c] sm:$0xf] %vm676, %v4006
        %4111 = vst.msk [vmem:[#allocation3 + $0x150] sm:$0xf] %vm676, %v4010
        %4112 = vst.msk [vmem:[#allocation3 + $0x164] sm:$0xf] %vm676, %v4013
        %4113 = vst.msk [vmem:[#allocation3 + $0x178] sm:$0xf] %vm676, %v4017
        %4114 = vst.msk [vmem:[#allocation3 + $0x18c] sm:$0xf] %vm676, %v4020
        %4115 = vst.msk [vmem:[#allocation3 + $0x1a0] sm:$0xf] %vm676, %v4024
        %4116 = vst.msk [vmem:[#allocation3 + $0x1b4] sm:$0xf] %vm676, %v4027
        %4117 = vst.msk [vmem:[#allocation3 + $0x1c8] sm:$0xf] %vm676, %v4031
        %4118 = vst.msk [vmem:[#allocation3 + $0x1dc] sm:$0xf] %vm676, %v4034
        %4119 = vst.msk [vmem:[#allocation3 + $0x1f0] sm:$0xf] %vm676, %v4038
        %4120 = vst.msk [vmem:[#allocation3 + $0x204] sm:$0xf] %vm676, %v4041
        %4121 = vst.msk [vmem:[#allocation3 + $0x218] sm:$0xf] %vm676, %v4045
        %4122 = vst.msk [vmem:[#allocation3 + $0x22c] sm:$0xf] %vm676, %v4048
        %4123 = vst.msk [vmem:[#allocation3 + $0x240] sm:$0xf] %vm676, %v4052
        %4124 = vst.msk [vmem:[#allocation3 + $0x254] sm:$0xf] %vm676, %v4055
        %4125 = vst.msk [vmem:[#allocation3 + $0x268] sm:$0xf] %vm676, %v4059
        %4126 = vst.msk [vmem:[#allocation3 + $0x27c] sm:$0xf] %vm676, %v4062
        %v4127 = vld [vmem:[#allocation3] sm:$0xff]
        %v4128 = vld [vmem:[#allocation3 + $0x8] sm:$0xff]
        %v4129 = vld [vmem:[#allocation3 + $0x10] sm:$0xf]
        %v4130 = vld [vmem:[#allocation3 + $0x14] sm:$0xff]
        %v4131 = vld [vmem:[#allocation3 + $0x1c] sm:$0xff]
        %v4132 = vld [vmem:[#allocation3 + $0x24] sm:$0xf]
        %v4133 = vld [vmem:[#allocation3 + $0x28] sm:$0xff]
        %v4134 = vld [vmem:[#allocation3 + $0x30] sm:$0xff]
        %v4135 = vld [vmem:[#allocation3 + $0x38] sm:$0xf]
        %v4136 = vld [vmem:[#allocation3 + $0x3c] sm:$0xff]
        %v4137 = vld [vmem:[#allocation3 + $0x44] sm:$0xff]
        %v4138 = vld [vmem:[#allocation3 + $0x4c] sm:$0xf]
        %v4139 = vld [vmem:[#allocation3 + $0x50] sm:$0xff]
        %v4140 = vld [vmem:[#allocation3 + $0x58] sm:$0xff]
        %v4141 = vld [vmem:[#allocation3 + $0x60] sm:$0xf]
        %v4142 = vld [vmem:[#allocation3 + $0x64] sm:$0xff]
        %v4143 = vld [vmem:[#allocation3 + $0x6c] sm:$0xff]
        %v4144 = vld [vmem:[#allocation3 + $0x74] sm:$0xf]
        %v4145 = vld [vmem:[#allocation3 + $0x78] sm:$0xff]
        %v4146 = vld [vmem:[#allocation3 + $0x80] sm:$0xff]
        %v4147 = vld [vmem:[#allocation3 + $0x88] sm:$0xf]
        %v4148 = vld [vmem:[#allocation3 + $0x8c] sm:$0xff]
        %v4149 = vld [vmem:[#allocation3 + $0x94] sm:$0xff]
        %v4150 = vld [vmem:[#allocation3 + $0x9c] sm:$0xf]
        %v4151 = vld [vmem:[#allocation3 + $0xa0] sm:$0xff]
        %v4152 = vld [vmem:[#allocation3 + $0xa8] sm:$0xff]
        %v4153 = vld [vmem:[#allocation3 + $0xb0] sm:$0xf]
        %v4154 = vld [vmem:[#allocation3 + $0xb4] sm:$0xff]
        %v4155 = vld [vmem:[#allocation3 + $0xbc] sm:$0xff]
        %v4156 = vld [vmem:[#allocation3 + $0xc4] sm:$0xf]
        %v4157 = vld [vmem:[#allocation3 + $0xc8] sm:$0xff]
        %v4158 = vld [vmem:[#allocation3 + $0xd0] sm:$0xff]
        %v4159 = vld [vmem:[#allocation3 + $0xd8] sm:$0xf]
        %v4160 = vld [vmem:[#allocation3 + $0xdc] sm:$0xff]
        %v4161 = vld [vmem:[#allocation3 + $0xe4] sm:$0xff]
        %v4162 = vld [vmem:[#allocation3 + $0xec] sm:$0xf]
        %v4163 = vld [vmem:[#allocation3 + $0xf0] sm:$0xff]
        %v4164 = vld [vmem:[#allocation3 + $0xf8] sm:$0xff]
        %v4165 = vld [vmem:[#allocation3 + $0x100] sm:$0xf]
        %v4166 = vld [vmem:[#allocation3 + $0x104] sm:$0xff]
        %v4167 = vld [vmem:[#allocation3 + $0x10c] sm:$0xff]
        %v4168 = vld [vmem:[#allocation3 + $0x114] sm:$0xf]
        %v4169 = vld [vmem:[#allocation3 + $0x118] sm:$0xff]
        %v4170 = vld [vmem:[#allocation3 + $0x120] sm:$0xff]
        %v4171 = vld [vmem:[#allocation3 + $0x128] sm:$0xf]
        %v4172 = vld [vmem:[#allocation3 + $0x12c] sm:$0xff]
        %v4173 = vld [vmem:[#allocation3 + $0x134] sm:$0xff]
        %v4174 = vld [vmem:[#allocation3 + $0x13c] sm:$0xf]
        %v4175 = vld [vmem:[#allocation3 + $0x140] sm:$0xff]
        %v4176 = vld [vmem:[#allocation3 + $0x148] sm:$0xff]
        %v4177 = vld [vmem:[#allocation3 + $0x150] sm:$0xf]
        %v4178 = vld [vmem:[#allocation3 + $0x154] sm:$0xff]
        %v4179 = vld [vmem:[#allocation3 + $0x15c] sm:$0xff]
        %v4180 = vld [vmem:[#allocation3 + $0x164] sm:$0xf]
        %v4181 = vld [vmem:[#allocation3 + $0x168] sm:$0xff]
        %v4182 = vld [vmem:[#allocation3 + $0x170] sm:$0xff]
        %v4183 = vld [vmem:[#allocation3 + $0x178] sm:$0xf]
        %v4184 = vld [vmem:[#allocation3 + $0x17c] sm:$0xff]
        %v4185 = vld [vmem:[#allocation3 + $0x184] sm:$0xff]
        %v4186 = vld [vmem:[#allocation3 + $0x18c] sm:$0xf]
        %v4187 = vld [vmem:[#allocation3 + $0x190] sm:$0xff]
        %v4188 = vld [vmem:[#allocation3 + $0x198] sm:$0xff]
        %v4189 = vld [vmem:[#allocation3 + $0x1a0] sm:$0xf]
        %v4190 = vld [vmem:[#allocation3 + $0x1a4] sm:$0xff]
        %v4191 = vld [vmem:[#allocation3 + $0x1ac] sm:$0xff]
        %v4192 = vld [vmem:[#allocation3 + $0x1b4] sm:$0xf]
        %v4193 = vld [vmem:[#allocation3 + $0x1b8] sm:$0xff]
        %v4194 = vld [vmem:[#allocation3 + $0x1c0] sm:$0xff]
        %v4195 = vld [vmem:[#allocation3 + $0x1c8] sm:$0xf]
        %v4196 = vld [vmem:[#allocation3 + $0x1cc] sm:$0xff]
        %v4197 = vld [vmem:[#allocation3 + $0x1d4] sm:$0xff]
        %v4198 = vld [vmem:[#allocation3 + $0x1dc] sm:$0xf]
        %v4199 = vld [vmem:[#allocation3 + $0x1e0] sm:$0xff]
        %v4200 = vld [vmem:[#allocation3 + $0x1e8] sm:$0xff]
        %v4201 = vld [vmem:[#allocation3 + $0x1f0] sm:$0xf]
        %v4202 = vld [vmem:[#allocation3 + $0x1f4] sm:$0xff]
        %v4203 = vld [vmem:[#allocation3 + $0x1fc] sm:$0xff]
        %v4204 = vld [vmem:[#allocation3 + $0x204] sm:$0xf]
        %v4205 = vld [vmem:[#allocation3 + $0x208] sm:$0xff]
        %v4206 = vld [vmem:[#allocation3 + $0x210] sm:$0xff]
        %v4207 = vld [vmem:[#allocation3 + $0x218] sm:$0xf]
        %v4208 = vld [vmem:[#allocation3 + $0x21c] sm:$0xff]
        %v4209 = vld [vmem:[#allocation3 + $0x224] sm:$0xff]
        %v4210 = vld [vmem:[#allocation3 + $0x22c] sm:$0xf]
        %v4211 = vld [vmem:[#allocation3 + $0x230] sm:$0xff]
        %v4212 = vld [vmem:[#allocation3 + $0x238] sm:$0xff]
        %v4213 = vld [vmem:[#allocation3 + $0x240] sm:$0xf]
        %v4214 = vld [vmem:[#allocation3 + $0x244] sm:$0xff]
        %v4215 = vld [vmem:[#allocation3 + $0x24c] sm:$0xff]
        %v4216 = vld [vmem:[#allocation3 + $0x254] sm:$0xf]
        %v4217 = vld [vmem:[#allocation3 + $0x258] sm:$0xff]
        %v4218 = vld [vmem:[#allocation3 + $0x260] sm:$0xff]
        %v4219 = vld [vmem:[#allocation3 + $0x268] sm:$0xf]
        %v4220 = vld [vmem:[#allocation3 + $0x26c] sm:$0xff]
        %v4221 = vld [vmem:[#allocation3 + $0x274] sm:$0xff]
        %v4222 = vld [vmem:[#allocation3 + $0x27c] sm:$0xf]
        %v4223 = vld [vmem:[%s3] sm:$0xf]
        %v4224 = vld [vmem:[%s3 + $0x4] sm:$0xf]
        %v4225 = vld [vmem:[%s3 + $0x8] sm:$0xf]
        %v4226 = vld [vmem:[%s3 + $0xc] sm:$0xf]
        %v4227 = vld [vmem:[%s3 + $0x10] sm:$0xf]
        %v4228 = vld [vmem:[%s3 + $0x14] sm:$0xf]
        %v4229 = vld [vmem:[%s3 + $0x18] sm:$0xf]
        %v4230 = vld [vmem:[%s3 + $0x1c] sm:$0xf]
        %v4231 = vld [vmem:[%s3 + $0x20] sm:$0xf]
        %v4232 = vld [vmem:[%s3 + $0x24] sm:$0xf]
        %v4233 = vld [vmem:[%s3 + $0x28] sm:$0xf]
        %v4234 = vld [vmem:[%s3 + $0x2c] sm:$0xf]
        %v4235 = vld [vmem:[%s3 + $0x30] sm:$0xf]
        %v4236 = vld [vmem:[%s3 + $0x34] sm:$0xf]
        %v4237 = vld [vmem:[%s3 + $0x38] sm:$0xf]
        %v4238 = vld [vmem:[%s3 + $0x3c] sm:$0xf]
        %v4239 = vld [vmem:[%s3 + $0x40] sm:$0xf]
        %v4240 = vld [vmem:[%s3 + $0x44] sm:$0xf]
        %v4241 = vld [vmem:[%s3 + $0x48] sm:$0xf]
        %v4242 = vld [vmem:[%s3 + $0x4c] sm:$0xf]
        %v4243 = vld [vmem:[%s3 + $0x50] sm:$0xf]
        %v4244 = vld [vmem:[%s3 + $0x54] sm:$0xf]
        %v4245 = vld [vmem:[%s3 + $0x58] sm:$0xf]
        %v4246 = vld [vmem:[%s3 + $0x5c] sm:$0xf]
        %v4247 = vld [vmem:[%s3 + $0x60] sm:$0xf]
        %v4248 = vld [vmem:[%s3 + $0x64] sm:$0xf]
        %v4249 = vld [vmem:[%s3 + $0x68] sm:$0xf]
        %v4250 = vld [vmem:[%s3 + $0x6c] sm:$0xf]
        %v4251 = vld [vmem:[%s3 + $0x70] sm:$0xf]
        %v4252 = vld [vmem:[%s3 + $0x74] sm:$0xf]
        %v4253 = vld [vmem:[%s3 + $0x78] sm:$0xf]
        %v4254 = vld [vmem:[%s3 + $0x7c] sm:$0xf]
        %v4255 = vld [vmem:[%s3 + $0x80] sm:$0xf]
        %v4256 = vld [vmem:[%s3 + $0x84] sm:$0xf]
        %v4257 = vld [vmem:[%s3 + $0x88] sm:$0xf]
        %v4258 = vld [vmem:[%s3 + $0x8c] sm:$0xf]
        %v4259 = vld [vmem:[%s3 + $0x90] sm:$0xf]
        %v4260 = vld [vmem:[%s3 + $0x94] sm:$0xf]
        %v4261 = vld [vmem:[%s3 + $0x98] sm:$0xf]
        %v4262 = vld [vmem:[%s3 + $0x9c] sm:$0xf]
        %v4263 = vld [vmem:[%s3 + $0xa0] sm:$0xf]
        %v4264 = vld [vmem:[%s3 + $0xa4] sm:$0xf]
        %v4265 = vld [vmem:[%s3 + $0xa8] sm:$0xf]
        %v4266 = vld [vmem:[%s3 + $0xac] sm:$0xf]
        %v4267 = vld [vmem:[%s3 + $0xb0] sm:$0xf]
        %v4268 = vld [vmem:[%s3 + $0xb4] sm:$0xf]
        %v4269 = vld [vmem:[%s3 + $0xb8] sm:$0xf]
        %v4270 = vld [vmem:[%s3 + $0xbc] sm:$0xf]
        %v4271 = vld [vmem:[%s3 + $0xc0] sm:$0xf]
        %v4272 = vld [vmem:[%s3 + $0xc4] sm:$0xf]
        %v4273 = vld [vmem:[%s3 + $0xc8] sm:$0xf]
        %v4274 = vld [vmem:[%s3 + $0xcc] sm:$0xf]
        %v4275 = vld [vmem:[%s3 + $0xd0] sm:$0xf]
        %v4276 = vld [vmem:[%s3 + $0xd4] sm:$0xf]
        %v4277 = vld [vmem:[%s3 + $0xd8] sm:$0xf]
        %v4278 = vld [vmem:[%s3 + $0xdc] sm:$0xf]
        %v4279 = vld [vmem:[%s3 + $0xe0] sm:$0xf]
        %v4280 = vld [vmem:[%s3 + $0xe4] sm:$0xf]
        %v4281 = vld [vmem:[%s3 + $0xe8] sm:$0xf]
        %v4282 = vld [vmem:[%s3 + $0xec] sm:$0xf]
        %v4283 = vld [vmem:[%s3 + $0xf0] sm:$0xf]
        %v4284 = vld [vmem:[%s3 + $0xf4] sm:$0xf]
        %v4285 = vld [vmem:[%s3 + $0xf8] sm:$0xf]
        %v4286 = vld [vmem:[%s3 + $0xfc] sm:$0xf]
        %v4287 = vld [vmem:[%s3 + $0x100] sm:$0xf]
        %v4288 = vld [vmem:[%s3 + $0x104] sm:$0xf]
        %v4289 = vld [vmem:[%s3 + $0x108] sm:$0xf]
        %v4290 = vld [vmem:[%s3 + $0x10c] sm:$0xf]
        %v4291 = vld [vmem:[%s3 + $0x110] sm:$0xf]
        %v4292 = vld [vmem:[%s3 + $0x114] sm:$0xf]
        %v4293 = vld [vmem:[%s3 + $0x118] sm:$0xf]
        %v4294 = vld [vmem:[%s3 + $0x11c] sm:$0xf]
        %v4295 = vld [vmem:[%s4] sm:$0x1]
        %v4297 = vlaneseq
        %v4298 = vshrl.u32 %v4297, 7
        %v4299 = vsub.s32 0, %v4298
        %v4300 = vrot.slane %v4295, %v4299
        %v4398 = vunpack.c.l.b16 %v4127
        %v4399 = vunpack.c.h.b16 %v4127
        %v4400 = vunpack.c.l.b16 %v4128
        %v4401 = vunpack.c.h.b16 %v4128
        %v4402 = vunpack.c.l.b16 %v4129
        %v4403 = vunpack.c.l.b16 %v4130
        %v4404 = vunpack.c.h.b16 %v4130
        %v4405 = vunpack.c.l.b16 %v4131
        %v4406 = vunpack.c.h.b16 %v4131
        %v4407 = vunpack.c.l.b16 %v4132
        %v4408 = vunpack.c.l.b16 %v4133
        %v4409 = vunpack.c.h.b16 %v4133
        %v4410 = vunpack.c.l.b16 %v4134
        %v4411 = vunpack.c.h.b16 %v4134
        %v4412 = vunpack.c.l.b16 %v4135
        %v4413 = vunpack.c.l.b16 %v4136
        %v4414 = vunpack.c.h.b16 %v4136
        %v4415 = vunpack.c.l.b16 %v4137
        %v4416 = vunpack.c.h.b16 %v4137
        %v4417 = vunpack.c.l.b16 %v4138
        %v4418 = vunpack.c.l.b16 %v4139
        %v4419 = vunpack.c.h.b16 %v4139
        %v4420 = vunpack.c.l.b16 %v4140
        %v4421 = vunpack.c.h.b16 %v4140
        %v4422 = vunpack.c.l.b16 %v4141
        %v4423 = vunpack.c.l.b16 %v4142
        %v4424 = vunpack.c.h.b16 %v4142
        %v4425 = vunpack.c.l.b16 %v4143
        %v4426 = vunpack.c.h.b16 %v4143
        %v4427 = vunpack.c.l.b16 %v4144
        %v4428 = vunpack.c.l.b16 %v4145
        %v4429 = vunpack.c.h.b16 %v4145
        %v4430 = vunpack.c.l.b16 %v4146
        %v4431 = vunpack.c.h.b16 %v4146
        %v4432 = vunpack.c.l.b16 %v4147
        %v4433 = vunpack.c.l.b16 %v4148
        %v4434 = vunpack.c.h.b16 %v4148
        %v4435 = vunpack.c.l.b16 %v4149
        %v4436 = vunpack.c.h.b16 %v4149
        %v4437 = vunpack.c.l.b16 %v4150
        %v4438 = vunpack.c.l.b16 %v4151
        %v4439 = vunpack.c.h.b16 %v4151
        %v4440 = vunpack.c.l.b16 %v4152
        %v4441 = vunpack.c.h.b16 %v4152
        %v4442 = vunpack.c.l.b16 %v4153
        %v4443 = vunpack.c.l.b16 %v4154
        %v4444 = vunpack.c.h.b16 %v4154
        %v4445 = vunpack.c.l.b16 %v4155
        %v4446 = vunpack.c.h.b16 %v4155
        %v4447 = vunpack.c.l.b16 %v4156
        %v4448 = vunpack.c.l.b16 %v4157
        %v4449 = vunpack.c.h.b16 %v4157
        %v4450 = vunpack.c.l.b16 %v4158
        %v4451 = vunpack.c.h.b16 %v4158
        %v4452 = vunpack.c.l.b16 %v4159
        %v4453 = vunpack.c.l.b16 %v4160
        %v4454 = vunpack.c.h.b16 %v4160
        %v4455 = vunpack.c.l.b16 %v4161
        %v4456 = vunpack.c.h.b16 %v4161
        %v4457 = vunpack.c.l.b16 %v4162
        %v4458 = vunpack.c.l.b16 %v4163
        %v4459 = vunpack.c.h.b16 %v4163
        %v4460 = vunpack.c.l.b16 %v4164
        %v4461 = vunpack.c.h.b16 %v4164
        %v4462 = vunpack.c.l.b16 %v4165
        %v4463 = vunpack.c.l.b16 %v4166
        %v4464 = vunpack.c.h.b16 %v4166
        %v4465 = vunpack.c.l.b16 %v4167
        %v4466 = vunpack.c.h.b16 %v4167
        %v4467 = vunpack.c.l.b16 %v4168
        %v4468 = vunpack.c.l.b16 %v4169
        %v4469 = vunpack.c.h.b16 %v4169
        %v4470 = vunpack.c.l.b16 %v4170
        %v4471 = vunpack.c.h.b16 %v4170
        %v4472 = vunpack.c.l.b16 %v4171
        %v4473 = vunpack.c.l.b16 %v4172
        %v4474 = vunpack.c.h.b16 %v4172
        %v4475 = vunpack.c.l.b16 %v4173
        %v4476 = vunpack.c.h.b16 %v4173
        %v4477 = vunpack.c.l.b16 %v4174
        %v4478 = vunpack.c.l.b16 %v4175
        %v4479 = vunpack.c.h.b16 %v4175
        %v4480 = vunpack.c.l.b16 %v4176
        %v4481 = vunpack.c.h.b16 %v4176
        %v4482 = vunpack.c.l.b16 %v4177
        %v4483 = vunpack.c.l.b16 %v4178
        %v4484 = vunpack.c.h.b16 %v4178
        %v4485 = vunpack.c.l.b16 %v4179
        %v4486 = vunpack.c.h.b16 %v4179
        %v4487 = vunpack.c.l.b16 %v4180
        %v4488 = vunpack.c.l.b16 %v4181
        %v4489 = vunpack.c.h.b16 %v4181
        %v4490 = vunpack.c.l.b16 %v4182
        %v4491 = vunpack.c.h.b16 %v4182
        %v4492 = vunpack.c.l.b16 %v4183
        %v4493 = vunpack.c.l.b16 %v4184
        %v4494 = vunpack.c.h.b16 %v4184
        %v4495 = vunpack.c.l.b16 %v4185
        %v4496 = vunpack.c.h.b16 %v4185
        %v4497 = vunpack.c.l.b16 %v4186
        %v4498 = vunpack.c.l.b16 %v4187
        %v4499 = vunpack.c.h.b16 %v4187
        %v4500 = vunpack.c.l.b16 %v4188
        %v4501 = vunpack.c.h.b16 %v4188
        %v4502 = vunpack.c.l.b16 %v4189
        %v4503 = vunpack.c.l.b16 %v4190
        %v4504 = vunpack.c.h.b16 %v4190
        %v4505 = vunpack.c.l.b16 %v4191
        %v4506 = vunpack.c.h.b16 %v4191
        %v4507 = vunpack.c.l.b16 %v4192
        %v4508 = vunpack.c.l.b16 %v4193
        %v4509 = vunpack.c.h.b16 %v4193
        %v4510 = vunpack.c.l.b16 %v4194
        %v4511 = vunpack.c.h.b16 %v4194
        %v4512 = vunpack.c.l.b16 %v4195
        %v4513 = vunpack.c.l.b16 %v4196
        %v4514 = vunpack.c.h.b16 %v4196
        %v4515 = vunpack.c.l.b16 %v4197
        %v4516 = vunpack.c.h.b16 %v4197
        %v4517 = vunpack.c.l.b16 %v4198
        %v4518 = vunpack.c.l.b16 %v4199
        %v4519 = vunpack.c.h.b16 %v4199
        %v4520 = vunpack.c.l.b16 %v4200
        %v4521 = vunpack.c.h.b16 %v4200
        %v4522 = vunpack.c.l.b16 %v4201
        %v4523 = vunpack.c.l.b16 %v4202
        %v4524 = vunpack.c.h.b16 %v4202
        %v4525 = vunpack.c.l.b16 %v4203
        %v4526 = vunpack.c.h.b16 %v4203
        %v4527 = vunpack.c.l.b16 %v4204
        %v4528 = vunpack.c.l.b16 %v4205
        %v4529 = vunpack.c.h.b16 %v4205
        %v4530 = vunpack.c.l.b16 %v4206
        %v4531 = vunpack.c.h.b16 %v4206
        %v4532 = vunpack.c.l.b16 %v4207
        %v4533 = vunpack.c.l.b16 %v4208
        %v4534 = vunpack.c.h.b16 %v4208
        %v4535 = vunpack.c.l.b16 %v4209
        %v4536 = vunpack.c.h.b16 %v4209
        %v4537 = vunpack.c.l.b16 %v4210
        %v4538 = vunpack.c.l.b16 %v4211
        %v4539 = vunpack.c.h.b16 %v4211
        %v4540 = vunpack.c.l.b16 %v4212
        %v4541 = vunpack.c.h.b16 %v4212
        %v4542 = vunpack.c.l.b16 %v4213
        %v4543 = vunpack.c.l.b16 %v4214
        %v4544 = vunpack.c.h.b16 %v4214
        %v4545 = vunpack.c.l.b16 %v4215
        %v4546 = vunpack.c.h.b16 %v4215
        %v4547 = vunpack.c.l.b16 %v4216
        %v4548 = vunpack.c.l.b16 %v4217
        %v4549 = vunpack.c.h.b16 %v4217
        %v4550 = vunpack.c.l.b16 %v4218
        %v4551 = vunpack.c.h.b16 %v4218
        %v4552 = vunpack.c.l.b16 %v4219
        %v4553 = vunpack.c.l.b16 %v4220
        %v4554 = vunpack.c.h.b16 %v4220
        %v4555 = vunpack.c.l.b16 %v4221
        %v4556 = vunpack.c.h.b16 %v4221
        %v4557 = vunpack.c.l.b16 %v4222
        %v4558 = vpack.c.b16 %v4403, %v4398
        %v4559 = vpack.c.b16 %v4404, %v4399
        %v4560 = vpack.c.b16 %v4405, %v4400
        %v4561 = vpack.c.b16 %v4406, %v4401
        %v4562 = vpack.c.b16 %v4407, %v4402
        %v4563 = vpack.c.b16 %v4413, %v4408
        %v4564 = vpack.c.b16 %v4414, %v4409
        %v4565 = vpack.c.b16 %v4415, %v4410
        %v4566 = vpack.c.b16 %v4416, %v4411
        %v4567 = vpack.c.b16 %v4417, %v4412
        %v4568 = vpack.c.b16 %v4423, %v4418
        %v4569 = vpack.c.b16 %v4424, %v4419
        %v4570 = vpack.c.b16 %v4425, %v4420
        %v4571 = vpack.c.b16 %v4426, %v4421
        %v4572 = vpack.c.b16 %v4427, %v4422
        %v4573 = vpack.c.b16 %v4433, %v4428
        %v4574 = vpack.c.b16 %v4434, %v4429
        %v4575 = vpack.c.b16 %v4435, %v4430
        %v4576 = vpack.c.b16 %v4436, %v4431
        %v4577 = vpack.c.b16 %v4437, %v4432
        %v4578 = vpack.c.b16 %v4443, %v4438
        %v4579 = vpack.c.b16 %v4444, %v4439
        %v4580 = vpack.c.b16 %v4445, %v4440
        %v4581 = vpack.c.b16 %v4446, %v4441
        %v4582 = vpack.c.b16 %v4447, %v4442
        %v4583 = vpack.c.b16 %v4453, %v4448
        %v4584 = vpack.c.b16 %v4454, %v4449
        %v4585 = vpack.c.b16 %v4455, %v4450
        %v4586 = vpack.c.b16 %v4456, %v4451
        %v4587 = vpack.c.b16 %v4457, %v4452
        %v4588 = vpack.c.b16 %v4463, %v4458
        %v4589 = vpack.c.b16 %v4464, %v4459
        %v4590 = vpack.c.b16 %v4465, %v4460
        %v4591 = vpack.c.b16 %v4466, %v4461
        %v4592 = vpack.c.b16 %v4467, %v4462
        %v4593 = vpack.c.b16 %v4473, %v4468
        %v4594 = vpack.c.b16 %v4474, %v4469
        %v4595 = vpack.c.b16 %v4475, %v4470
        %v4596 = vpack.c.b16 %v4476, %v4471
        %v4597 = vpack.c.b16 %v4477, %v4472
        %v4598 = vpack.c.b16 %v4483, %v4478
        %v4599 = vpack.c.b16 %v4484, %v4479
        %v4600 = vpack.c.b16 %v4485, %v4480
        %v4601 = vpack.c.b16 %v4486, %v4481
        %v4602 = vpack.c.b16 %v4487, %v4482
        %v4603 = vpack.c.b16 %v4493, %v4488
        %v4604 = vpack.c.b16 %v4494, %v4489
        %v4605 = vpack.c.b16 %v4495, %v4490
        %v4606 = vpack.c.b16 %v4496, %v4491
        %v4607 = vpack.c.b16 %v4497, %v4492
        %v4608 = vpack.c.b16 %v4503, %v4498
        %v4609 = vpack.c.b16 %v4504, %v4499
        %v4610 = vpack.c.b16 %v4505, %v4500
        %v4611 = vpack.c.b16 %v4506, %v4501
        %v4612 = vpack.c.b16 %v4507, %v4502
        %v4613 = vpack.c.b16 %v4513, %v4508
        %v4614 = vpack.c.b16 %v4514, %v4509
        %v4615 = vpack.c.b16 %v4515, %v4510
        %v4616 = vpack.c.b16 %v4516, %v4511
        %v4617 = vpack.c.b16 %v4517, %v4512
        %v4618 = vpack.c.b16 %v4523, %v4518
        %v4619 = vpack.c.b16 %v4524, %v4519
        %v4620 = vpack.c.b16 %v4525, %v4520
        %v4621 = vpack.c.b16 %v4526, %v4521
        %v4622 = vpack.c.b16 %v4527, %v4522
        %v4623 = vpack.c.b16 %v4533, %v4528
        %v4624 = vpack.c.b16 %v4534, %v4529
        %v4625 = vpack.c.b16 %v4535, %v4530
        %v4626 = vpack.c.b16 %v4536, %v4531
        %v4627 = vpack.c.b16 %v4537, %v4532
        %v4628 = vpack.c.b16 %v4543, %v4538
        %v4629 = vpack.c.b16 %v4544, %v4539
        %v4630 = vpack.c.b16 %v4545, %v4540
        %v4631 = vpack.c.b16 %v4546, %v4541
        %v4632 = vpack.c.b16 %v4547, %v4542
        %v4633 = vpack.c.b16 %v4553, %v4548
        %v4634 = vpack.c.b16 %v4554, %v4549
        %v4635 = vpack.c.b16 %v4555, %v4550
        %v4636 = vpack.c.b16 %v4556, %v4551
        %v4637 = vpack.c.b16 %v4557, %v4552
        %v4774 = vunpack.c.l.b16 %v4223
        %v4775 = vunpack.c.l.b16 %v4224
        %v4776 = vunpack.c.l.b16 %v4225
        %v4777 = vunpack.c.l.b16 %v4226
        %v4778 = vunpack.c.l.b16 %v4227
        %v4779 = vunpack.c.l.b16 %v4228
        %v4780 = vunpack.c.l.b16 %v4229
        %v4781 = vunpack.c.l.b16 %v4230
        %v4782 = vunpack.c.l.b16 %v4231
        %v4783 = vunpack.c.l.b16 %v4232
        %v4784 = vunpack.c.l.b16 %v4233
        %v4785 = vunpack.c.l.b16 %v4234
        %v4786 = vunpack.c.l.b16 %v4235
        %v4787 = vunpack.c.l.b16 %v4236
        %v4788 = vunpack.c.l.b16 %v4237
        %v4789 = vunpack.c.l.b16 %v4238
        %v4790 = vunpack.c.l.b16 %v4239
        %v4791 = vunpack.c.l.b16 %v4240
        %v4792 = vunpack.c.l.b16 %v4241
        %v4793 = vunpack.c.l.b16 %v4242
        %v4794 = vunpack.c.l.b16 %v4243
        %v4795 = vunpack.c.l.b16 %v4244
        %v4796 = vunpack.c.l.b16 %v4245
        %v4797 = vunpack.c.l.b16 %v4246
        %v4798 = vunpack.c.l.b16 %v4247
        %v4799 = vunpack.c.l.b16 %v4248
        %v4800 = vunpack.c.l.b16 %v4249
        %v4801 = vunpack.c.l.b16 %v4250
        %v4802 = vunpack.c.l.b16 %v4251
        %v4803 = vunpack.c.l.b16 %v4252
        %v4804 = vunpack.c.l.b16 %v4253
        %v4805 = vunpack.c.l.b16 %v4254
        %v4806 = vunpack.c.l.b16 %v4255
        %v4807 = vunpack.c.l.b16 %v4256
        %v4808 = vunpack.c.l.b16 %v4257
        %v4809 = vunpack.c.l.b16 %v4258
        %v4810 = vunpack.c.l.b16 %v4259
        %v4811 = vunpack.c.l.b16 %v4260
        %v4812 = vunpack.c.l.b16 %v4261
        %v4813 = vunpack.c.l.b16 %v4262
        %v4814 = vunpack.c.l.b16 %v4263
        %v4815 = vunpack.c.l.b16 %v4264
        %v4816 = vunpack.c.l.b16 %v4265
        %v4817 = vunpack.c.l.b16 %v4266
        %v4818 = vunpack.c.l.b16 %v4267
        %v4819 = vunpack.c.l.b16 %v4268
        %v4820 = vunpack.c.l.b16 %v4269
        %v4821 = vunpack.c.l.b16 %v4270
        %v4822 = vunpack.c.l.b16 %v4271
        %v4823 = vunpack.c.l.b16 %v4272
        %v4824 = vunpack.c.l.b16 %v4273
        %v4825 = vunpack.c.l.b16 %v4274
        %v4826 = vunpack.c.l.b16 %v4275
        %v4827 = vunpack.c.l.b16 %v4276
        %v4828 = vunpack.c.l.b16 %v4277
        %v4829 = vunpack.c.l.b16 %v4278
        %v4830 = vunpack.c.l.b16 %v4279
        %v4831 = vunpack.c.l.b16 %v4280
        %v4832 = vunpack.c.l.b16 %v4281
        %v4833 = vunpack.c.l.b16 %v4282
        %v4834 = vunpack.c.l.b16 %v4283
        %v4835 = vunpack.c.l.b16 %v4284
        %v4836 = vunpack.c.l.b16 %v4285
        %v4837 = vunpack.c.l.b16 %v4286
        %v4838 = vunpack.c.l.b16 %v4287
        %v4839 = vunpack.c.l.b16 %v4288
        %v4840 = vunpack.c.l.b16 %v4289
        %v4841 = vunpack.c.l.b16 %v4290
        %v4842 = vunpack.c.l.b16 %v4291
        %v4843 = vunpack.c.l.b16 %v4292
        %v4844 = vunpack.c.l.b16 %v4293
        %v4845 = vunpack.c.l.b16 %v4294
        %v4846 = vpack.c.b16 %v4775, %v4774
        %v4847 = vpack.c.b16 %v4777, %v4776
        %v4848 = vpack.c.b16 %v4779, %v4778
        %v4849 = vpack.c.b16 %v4781, %v4780
        %v4850 = vpack.c.b16 %v4783, %v4782
        %v4851 = vpack.c.b16 %v4785, %v4784
        %v4852 = vpack.c.b16 %v4787, %v4786
        %v4853 = vpack.c.b16 %v4789, %v4788
        %v4854 = vpack.c.b16 %v4791, %v4790
        %v4855 = vpack.c.b16 %v4793, %v4792
        %v4856 = vpack.c.b16 %v4795, %v4794
        %v4857 = vpack.c.b16 %v4797, %v4796
        %v4858 = vpack.c.b16 %v4799, %v4798
        %v4859 = vpack.c.b16 %v4801, %v4800
        %v4860 = vpack.c.b16 %v4803, %v4802
        %v4861 = vpack.c.b16 %v4805, %v4804
        %v4862 = vpack.c.b16 %v4807, %v4806
        %v4863 = vpack.c.b16 %v4809, %v4808
        %v4864 = vpack.c.b16 %v4811, %v4810
        %v4865 = vpack.c.b16 %v4813, %v4812
        %v4866 = vpack.c.b16 %v4815, %v4814
        %v4867 = vpack.c.b16 %v4817, %v4816
        %v4868 = vpack.c.b16 %v4819, %v4818
        %v4869 = vpack.c.b16 %v4821, %v4820
        %v4870 = vpack.c.b16 %v4823, %v4822
        %v4871 = vpack.c.b16 %v4825, %v4824
        %v4872 = vpack.c.b16 %v4827, %v4826
        %v4873 = vpack.c.b16 %v4829, %v4828
        %v4874 = vpack.c.b16 %v4831, %v4830
        %v4875 = vpack.c.b16 %v4833, %v4832
        %v4876 = vpack.c.b16 %v4835, %v4834
        %v4877 = vpack.c.b16 %v4837, %v4836
        %v4878 = vpack.c.b16 %v4839, %v4838
        %v4879 = vpack.c.b16 %v4841, %v4840
        %v4880 = vpack.c.b16 %v4843, %v4842
        %v4881 = vpack.c.b16 %v4845, %v4844
        %vm4918 = vcmask 523264
        %v4920 = vsel %vm4918, %v4562, 0
        %v4923 = vsel %vm4918, %v4567, 0
        %v4926 = vsel %vm4918, %v4572, 0
        %v4929 = vsel %vm4918, %v4577, 0
        %v4932 = vsel %vm4918, %v4582, 0
        %v4935 = vsel %vm4918, %v4587, 0
        %v4938 = vsel %vm4918, %v4592, 0
        %v4941 = vsel %vm4918, %v4597, 0
        %v4944 = vsel %vm4918, %v4602, 0
        %v4947 = vsel %vm4918, %v4607, 0
        %v4950 = vsel %vm4918, %v4612, 0
        %v4953 = vsel %vm4918, %v4617, 0
        %v4956 = vsel %vm4918, %v4622, 0
        %v4959 = vsel %vm4918, %v4627, 0
        %v4962 = vsel %vm4918, %v4632, 0
        %v4965 = vsel %vm4918, %v4637, 0
        %4967 = vmatprep.subr.bf16.mxu0 0
        %4968 = vmatpush1.bf16.msra.mxu0 %v4853
        %4969 = vmatprep.subr.bf16.mxu0 0
        %4970 = vmatpush1.bf16.msra.mxu0 %v4852
        %4971 = vmatprep.subr.bf16.mxu0 0
        %4972 = vmatpush1.bf16.msra.mxu0 %v4851
        %4973 = vmatprep.subr.bf16.mxu0 0
        %4974 = vmatpush1.bf16.msra.mxu0 %v4850
        %4975 = vmatprep.subr.bf16.mxu0 0
        %4976 = vmatpush1.bf16.msra.mxu0 %v4849
        %4977 = vmatprep.subr.bf16.mxu0 0
        %4978 = vmatpush1.bf16.msra.mxu0 %v4848
        %4979 = vmatprep.subr.bf16.mxu0 0
        %4980 = vmatpush1.bf16.msra.mxu0 %v4847
        %4981 = vmatprep.subr.bf16.mxu0 0
        %4982 = vmatpush1.bf16.msra.mxu0 %v4846
        %4983 = vmatprep.subr.bf16.mxu0 0
        %4984 = vmatpush2.bf16.msra.mxu0 %v4861
        %4985 = vmatprep.subr.bf16.mxu0 0
        %4986 = vmatpush2.bf16.msra.mxu0 %v4860
        %4987 = vmatprep.subr.bf16.mxu0 0
        %4988 = vmatpush2.bf16.msra.mxu0 %v4859
        %4989 = vmatprep.subr.bf16.mxu0 0
        %4990 = vmatpush2.bf16.msra.mxu0 %v4858
        %4991 = vmatprep.subr.bf16.mxu0 0
        %4992 = vmatpush2.bf16.msra.mxu0 %v4857
        %4993 = vmatprep.subr.bf16.mxu0 0
        %4994 = vmatpush2.bf16.msra.mxu0 %v4856
        %4995 = vmatprep.subr.bf16.mxu0 0
        %4996 = vmatpush2.bf16.msra.mxu0 %v4855
        %4997 = vmatprep.subr.bf16.mxu0 0
        %4998 = vmatpush2.bf16.msra.mxu0 %v4854
        %4999 = vmatprep.mubr.bf16.mxu0 %v4559
        %5000 = vmatmul.mubr.bf16.gmra.mxu0 %v4558
        %v5001 = vpop.f32.mrf.mxu0
        %v5002 = vadd.f32 %v4300, %v5001
        %v5003 = vpop.f32.mrf.mxu0
        %v5004 = vpop.f32.mrf.mxu0
        %v5005 = vadd.f32 %v4300, %v5004
        %v5006 = vpop.f32.mrf.mxu0
        %5007 = vmatprep.mubr.bf16.mxu0 %v4564
        %5008 = vmatmul.mubr.bf16.gmra.mxu0 %v4563
        %v5009 = vpop.f32.mrf.mxu0
        %v5010 = vadd.f32 %v4300, %v5009
        %v5011 = vpop.f32.mrf.mxu0
        %v5012 = vpop.f32.mrf.mxu0
        %v5013 = vadd.f32 %v4300, %v5012
        %v5014 = vpop.f32.mrf.mxu0
        %5015 = vmatprep.mubr.bf16.mxu0 %v4569
        %5016 = vmatmul.mubr.bf16.gmra.mxu0 %v4568
        %v5017 = vpop.f32.mrf.mxu0
        %v5018 = vadd.f32 %v4300, %v5017
        %v5019 = vpop.f32.mrf.mxu0
        %v5020 = vpop.f32.mrf.mxu0
        %v5021 = vadd.f32 %v4300, %v5020
        %v5022 = vpop.f32.mrf.mxu0
        %5023 = vmatprep.mubr.bf16.mxu0 %v4574
        %5024 = vmatmul.mubr.bf16.gmra.mxu0 %v4573
        %v5025 = vpop.f32.mrf.mxu0
        %v5026 = vadd.f32 %v4300, %v5025
        %v5027 = vpop.f32.mrf.mxu0
        %v5028 = vpop.f32.mrf.mxu0
        %v5029 = vadd.f32 %v4300, %v5028
        %v5030 = vpop.f32.mrf.mxu0
        %5031 = vmatprep.mubr.bf16.mxu0 %v4579
        %5032 = vmatmul.mubr.bf16.gmra.mxu0 %v4578
        %v5033 = vpop.f32.mrf.mxu0
        %v5034 = vadd.f32 %v4300, %v5033
        %v5035 = vpop.f32.mrf.mxu0
        %v5036 = vpop.f32.mrf.mxu0
        %v5037 = vadd.f32 %v4300, %v5036
        %v5038 = vpop.f32.mrf.mxu0
        %5039 = vmatprep.mubr.bf16.mxu0 %v4584
        %5040 = vmatmul.mubr.bf16.gmra.mxu0 %v4583
        %v5041 = vpop.f32.mrf.mxu0
        %v5042 = vadd.f32 %v4300, %v5041
        %v5043 = vpop.f32.mrf.mxu0
        %v5044 = vpop.f32.mrf.mxu0
        %v5045 = vadd.f32 %v4300, %v5044
        %v5046 = vpop.f32.mrf.mxu0
        %5047 = vmatprep.mubr.bf16.mxu0 %v4589
        %5048 = vmatmul.mubr.bf16.gmra.mxu0 %v4588
        %v5049 = vpop.f32.mrf.mxu0
        %v5050 = vadd.f32 %v4300, %v5049
        %v5051 = vpop.f32.mrf.mxu0
        %v5052 = vpop.f32.mrf.mxu0
        %v5053 = vadd.f32 %v4300, %v5052
        %v5054 = vpop.f32.mrf.mxu0
        %5055 = vmatprep.mubr.bf16.mxu0 %v4594
        %5056 = vmatmul.mubr.bf16.gmra.mxu0 %v4593
        %v5057 = vpop.f32.mrf.mxu0
        %v5058 = vadd.f32 %v4300, %v5057
        %v5059 = vpop.f32.mrf.mxu0
        %v5060 = vpop.f32.mrf.mxu0
        %v5061 = vadd.f32 %v4300, %v5060
        %v5062 = vpop.f32.mrf.mxu0
        %5063 = vmatprep.mubr.bf16.mxu0 %v4599
        %5064 = vmatmul.mubr.bf16.gmra.mxu0 %v4598
        %v5065 = vpop.f32.mrf.mxu0
        %v5066 = vadd.f32 %v4300, %v5065
        %v5067 = vpop.f32.mrf.mxu0
        %v5068 = vpop.f32.mrf.mxu0
        %v5069 = vadd.f32 %v4300, %v5068
        %v5070 = vpop.f32.mrf.mxu0
        %5071 = vmatprep.mubr.bf16.mxu0 %v4604
        %5072 = vmatmul.mubr.bf16.gmra.mxu0 %v4603
        %v5073 = vpop.f32.mrf.mxu0
        %v5074 = vadd.f32 %v4300, %v5073
        %v5075 = vpop.f32.mrf.mxu0
        %v5076 = vpop.f32.mrf.mxu0
        %v5077 = vadd.f32 %v4300, %v5076
        %v5078 = vpop.f32.mrf.mxu0
        %5079 = vmatprep.mubr.bf16.mxu0 %v4609
        %5080 = vmatmul.mubr.bf16.gmra.mxu0 %v4608
        %v5081 = vpop.f32.mrf.mxu0
        %v5082 = vadd.f32 %v4300, %v5081
        %v5083 = vpop.f32.mrf.mxu0
        %v5084 = vpop.f32.mrf.mxu0
        %v5085 = vadd.f32 %v4300, %v5084
        %v5086 = vpop.f32.mrf.mxu0
        %5087 = vmatprep.mubr.bf16.mxu0 %v4614
        %5088 = vmatmul.mubr.bf16.gmra.mxu0 %v4613
        %v5089 = vpop.f32.mrf.mxu0
        %v5090 = vadd.f32 %v4300, %v5089
        %v5091 = vpop.f32.mrf.mxu0
        %v5092 = vpop.f32.mrf.mxu0
        %v5093 = vadd.f32 %v4300, %v5092
        %v5094 = vpop.f32.mrf.mxu0
        %5095 = vmatprep.mubr.bf16.mxu0 %v4619
        %5096 = vmatmul.mubr.bf16.gmra.mxu0 %v4618
        %v5097 = vpop.f32.mrf.mxu0
        %v5098 = vadd.f32 %v4300, %v5097
        %v5099 = vpop.f32.mrf.mxu0
        %v5100 = vpop.f32.mrf.mxu0
        %v5101 = vadd.f32 %v4300, %v5100
        %v5102 = vpop.f32.mrf.mxu0
        %5103 = vmatprep.mubr.bf16.mxu0 %v4624
        %5104 = vmatmul.mubr.bf16.gmra.mxu0 %v4623
        %v5105 = vpop.f32.mrf.mxu0
        %v5106 = vadd.f32 %v4300, %v5105
        %v5107 = vpop.f32.mrf.mxu0
        %v5108 = vpop.f32.mrf.mxu0
        %v5109 = vadd.f32 %v4300, %v5108
        %v5110 = vpop.f32.mrf.mxu0
        %5111 = vmatprep.mubr.bf16.mxu0 %v4629
        %5112 = vmatmul.mubr.bf16.gmra.mxu0 %v4628
        %v5113 = vpop.f32.mrf.mxu0
        %v5114 = vadd.f32 %v4300, %v5113
        %v5115 = vpop.f32.mrf.mxu0
        %v5116 = vpop.f32.mrf.mxu0
        %v5117 = vadd.f32 %v4300, %v5116
        %v5118 = vpop.f32.mrf.mxu0
        %5119 = vmatprep.mubr.bf16.mxu0 %v4634
        %5120 = vmatmul.mubr.bf16.gmra.mxu0 %v4633
        %v5121 = vpop.f32.mrf.mxu0
        %v5122 = vadd.f32 %v4300, %v5121
        %v5123 = vpop.f32.mrf.mxu0
        %v5124 = vpop.f32.mrf.mxu0
        %v5125 = vadd.f32 %v4300, %v5124
        %v5126 = vpop.f32.mrf.mxu0
        %5127 = vdwg.mxu0
        %5128 = vmatprep.subr.bf16.mxu0 0
        %5129 = vmatpush1.bf16.msra.mxu0 %v4869
        %5130 = vmatprep.subr.bf16.mxu0 0
        %5131 = vmatpush1.bf16.msra.mxu0 %v4868
        %5132 = vmatprep.subr.bf16.mxu0 0
        %5133 = vmatpush1.bf16.msra.mxu0 %v4867
        %5134 = vmatprep.subr.bf16.mxu0 0
        %5135 = vmatpush1.bf16.msra.mxu0 %v4866
        %5136 = vmatprep.subr.bf16.mxu0 0
        %5137 = vmatpush1.bf16.msra.mxu0 %v4865
        %5138 = vmatprep.subr.bf16.mxu0 0
        %5139 = vmatpush1.bf16.msra.mxu0 %v4864
        %5140 = vmatprep.subr.bf16.mxu0 0
        %5141 = vmatpush1.bf16.msra.mxu0 %v4863
        %5142 = vmatprep.subr.bf16.mxu0 0
        %5143 = vmatpush1.bf16.msra.mxu0 %v4862
        %5144 = vmatprep.subr.bf16.mxu0 0
        %5145 = vmatpush2.bf16.msra.mxu0 %v4877
        %5146 = vmatprep.subr.bf16.mxu0 0
        %5147 = vmatpush2.bf16.msra.mxu0 %v4876
        %5148 = vmatprep.subr.bf16.mxu0 0
        %5149 = vmatpush2.bf16.msra.mxu0 %v4875
        %5150 = vmatprep.subr.bf16.mxu0 0
        %5151 = vmatpush2.bf16.msra.mxu0 %v4874
        %5152 = vmatprep.subr.bf16.mxu0 0
        %5153 = vmatpush2.bf16.msra.mxu0 %v4873
        %5154 = vmatprep.subr.bf16.mxu0 0
        %5155 = vmatpush2.bf16.msra.mxu0 %v4872
        %5156 = vmatprep.subr.bf16.mxu0 0
        %5157 = vmatpush2.bf16.msra.mxu0 %v4871
        %5158 = vmatprep.subr.bf16.mxu0 0
        %5159 = vmatpush2.bf16.msra.mxu0 %v4870
        %5160 = vmatprep.mubr.bf16.mxu0 %v4561
        %5161 = vmatmul.mubr.bf16.gmra.mxu0 %v4560
        %v5162 = vpop.f32.mrf.mxu0
        %v5163 = vadd.f32 %v5002, %v5162
        %v5164 = vpop.f32.mrf.mxu0
        %v5165 = vpop.f32.mrf.mxu0
        %v5166 = vadd.f32 %v5005, %v5165
        %v5167 = vpop.f32.mrf.mxu0
        %5168 = vmatprep.mubr.bf16.mxu0 %v4566
        %5169 = vmatmul.mubr.bf16.gmra.mxu0 %v4565
        %v5170 = vpop.f32.mrf.mxu0
        %v5171 = vadd.f32 %v5010, %v5170
        %v5172 = vpop.f32.mrf.mxu0
        %v5173 = vpop.f32.mrf.mxu0
        %v5174 = vadd.f32 %v5013, %v5173
        %v5175 = vpop.f32.mrf.mxu0
        %5176 = vmatprep.mubr.bf16.mxu0 %v4571
        %5177 = vmatmul.mubr.bf16.gmra.mxu0 %v4570
        %v5178 = vpop.f32.mrf.mxu0
        %v5179 = vadd.f32 %v5018, %v5178
        %v5180 = vpop.f32.mrf.mxu0
        %v5181 = vpop.f32.mrf.mxu0
        %v5182 = vadd.f32 %v5021, %v5181
        %v5183 = vpop.f32.mrf.mxu0
        %5184 = vmatprep.mubr.bf16.mxu0 %v4576
        %5185 = vmatmul.mubr.bf16.gmra.mxu0 %v4575
        %v5186 = vpop.f32.mrf.mxu0
        %v5187 = vadd.f32 %v5026, %v5186
        %v5188 = vpop.f32.mrf.mxu0
        %v5189 = vpop.f32.mrf.mxu0
        %v5190 = vadd.f32 %v5029, %v5189
        %v5191 = vpop.f32.mrf.mxu0
        %5192 = vmatprep.mubr.bf16.mxu0 %v4581
        %5193 = vmatmul.mubr.bf16.gmra.mxu0 %v4580
        %v5194 = vpop.f32.mrf.mxu0
        %v5195 = vadd.f32 %v5034, %v5194
        %v5196 = vpop.f32.mrf.mxu0
        %v5197 = vpop.f32.mrf.mxu0
        %v5198 = vadd.f32 %v5037, %v5197
        %v5199 = vpop.f32.mrf.mxu0
        %5200 = vmatprep.mubr.bf16.mxu0 %v4586
        %5201 = vmatmul.mubr.bf16.gmra.mxu0 %v4585
        %v5202 = vpop.f32.mrf.mxu0
        %v5203 = vadd.f32 %v5042, %v5202
        %v5204 = vpop.f32.mrf.mxu0
        %v5205 = vpop.f32.mrf.mxu0
        %v5206 = vadd.f32 %v5045, %v5205
        %v5207 = vpop.f32.mrf.mxu0
        %5208 = vmatprep.mubr.bf16.mxu0 %v4591
        %5209 = vmatmul.mubr.bf16.gmra.mxu0 %v4590
        %v5210 = vpop.f32.mrf.mxu0
        %v5211 = vadd.f32 %v5050, %v5210
        %v5212 = vpop.f32.mrf.mxu0
        %v5213 = vpop.f32.mrf.mxu0
        %v5214 = vadd.f32 %v5053, %v5213
        %v5215 = vpop.f32.mrf.mxu0
        %5216 = vmatprep.mubr.bf16.mxu0 %v4596
        %5217 = vmatmul.mubr.bf16.gmra.mxu0 %v4595
        %v5218 = vpop.f32.mrf.mxu0
        %v5219 = vadd.f32 %v5058, %v5218
        %v5220 = vpop.f32.mrf.mxu0
        %v5221 = vpop.f32.mrf.mxu0
        %v5222 = vadd.f32 %v5061, %v5221
        %v5223 = vpop.f32.mrf.mxu0
        %5224 = vmatprep.mubr.bf16.mxu0 %v4601
        %5225 = vmatmul.mubr.bf16.gmra.mxu0 %v4600
        %v5226 = vpop.f32.mrf.mxu0
        %v5227 = vadd.f32 %v5066, %v5226
        %v5228 = vpop.f32.mrf.mxu0
        %v5229 = vpop.f32.mrf.mxu0
        %v5230 = vadd.f32 %v5069, %v5229
        %v5231 = vpop.f32.mrf.mxu0
        %5232 = vmatprep.mubr.bf16.mxu0 %v4606
        %5233 = vmatmul.mubr.bf16.gmra.mxu0 %v4605
        %v5234 = vpop.f32.mrf.mxu0
        %v5235 = vadd.f32 %v5074, %v5234
        %v5236 = vpop.f32.mrf.mxu0
        %v5237 = vpop.f32.mrf.mxu0
        %v5238 = vadd.f32 %v5077, %v5237
        %v5239 = vpop.f32.mrf.mxu0
        %5240 = vmatprep.mubr.bf16.mxu0 %v4611
        %5241 = vmatmul.mubr.bf16.gmra.mxu0 %v4610
        %v5242 = vpop.f32.mrf.mxu0
        %v5243 = vadd.f32 %v5082, %v5242
        %v5244 = vpop.f32.mrf.mxu0
        %v5245 = vpop.f32.mrf.mxu0
        %v5246 = vadd.f32 %v5085, %v5245
        %v5247 = vpop.f32.mrf.mxu0
        %5248 = vmatprep.mubr.bf16.mxu0 %v4616
        %5249 = vmatmul.mubr.bf16.gmra.mxu0 %v4615
        %v5250 = vpop.f32.mrf.mxu0
        %v5251 = vadd.f32 %v5090, %v5250
        %v5252 = vpop.f32.mrf.mxu0
        %v5253 = vpop.f32.mrf.mxu0
        %v5254 = vadd.f32 %v5093, %v5253
        %v5255 = vpop.f32.mrf.mxu0
        %5256 = vmatprep.mubr.bf16.mxu0 %v4621
        %5257 = vmatmul.mubr.bf16.gmra.mxu0 %v4620
        %v5258 = vpop.f32.mrf.mxu0
        %v5259 = vadd.f32 %v5098, %v5258
        %v5260 = vpop.f32.mrf.mxu0
        %v5261 = vpop.f32.mrf.mxu0
        %v5262 = vadd.f32 %v5101, %v5261
        %v5263 = vpop.f32.mrf.mxu0
        %5264 = vmatprep.mubr.bf16.mxu0 %v4626
        %5265 = vmatmul.mubr.bf16.gmra.mxu0 %v4625
        %v5266 = vpop.f32.mrf.mxu0
        %v5267 = vadd.f32 %v5106, %v5266
        %v5268 = vpop.f32.mrf.mxu0
        %v5269 = vpop.f32.mrf.mxu0
        %v5270 = vadd.f32 %v5109, %v5269
        %v5271 = vpop.f32.mrf.mxu0
        %5272 = vmatprep.mubr.bf16.mxu0 %v4631
        %5273 = vmatmul.mubr.bf16.gmra.mxu0 %v4630
        %v5274 = vpop.f32.mrf.mxu0
        %v5275 = vadd.f32 %v5114, %v5274
        %v5276 = vpop.f32.mrf.mxu0
        %v5277 = vpop.f32.mrf.mxu0
        %v5278 = vadd.f32 %v5117, %v5277
        %v5279 = vpop.f32.mrf.mxu0
        %5280 = vmatprep.mubr.bf16.mxu0 %v4636
        %5281 = vmatmul.mubr.bf16.gmra.mxu0 %v4635
        %v5282 = vpop.f32.mrf.mxu0
        %v5283 = vadd.f32 %v5122, %v5282
        %v5284 = vpop.f32.mrf.mxu0
        %v5285 = vpop.f32.mrf.mxu0
        %v5286 = vadd.f32 %v5125, %v5285
        %v5287 = vpop.f32.mrf.mxu0
        %5288 = vdwg.mxu0
        %5289 = vmatprep.subr.bf16.mxu0 0
        %5290 = vmatpush1.bf16.msra.mxu0 0
        %5291 = vmatprep.subr.bf16.mxu0 0
        %5292 = vmatpush1.bf16.msra.mxu0 0
        %5293 = vmatprep.subr.bf16.mxu0 0
        %5294 = vmatpush1.bf16.msra.mxu0 0
        %5295 = vmatprep.subr.bf16.mxu0 0
        %5296 = vmatpush1.bf16.msra.mxu0 0
        %5297 = vmatprep.subr.bf16.mxu0 0
        %5298 = vmatpush1.bf16.msra.mxu0 %v4881
        %5299 = vmatprep.subr.bf16.mxu0 0
        %5300 = vmatpush1.bf16.msra.mxu0 %v4880
        %5301 = vmatprep.subr.bf16.mxu0 0
        %5302 = vmatpush1.bf16.msra.mxu0 %v4879
        %5303 = vmatprep.subr.bf16.mxu0 0
        %5304 = vmatpush1.bf16.msra.mxu0 %v4878
        %5305 = vmatprep.subr.bf16.mxu0 0
        %5306 = vmatpush2.bf16.msra.mxu0 0
        %5307 = vmatprep.subr.bf16.mxu0 0
        %5308 = vmatpush2.bf16.msra.mxu0 0
        %5309 = vmatprep.subr.bf16.mxu0 0
        %5310 = vmatpush2.bf16.msra.mxu0 0
        %5311 = vmatprep.subr.bf16.mxu0 0
        %5312 = vmatpush2.bf16.msra.mxu0 0
        %5313 = vmatprep.subr.bf16.mxu0 0
        %5314 = vmatpush2.bf16.msra.mxu0 0
        %5315 = vmatprep.subr.bf16.mxu0 0
        %5316 = vmatpush2.bf16.msra.mxu0 0
        %5317 = vmatprep.subr.bf16.mxu0 0
        %5318 = vmatpush2.bf16.msra.mxu0 0
        %5319 = vmatprep.subr.bf16.mxu0 0
        %5320 = vmatpush2.bf16.msra.mxu0 0
        %5321 = vmatprep.mubr.bf16.mxu0 0
        %5322 = vmatmul.mubr.bf16.gmra.mxu0 %v4920
        %v5323 = vpop.f32.mrf.mxu0
        %v5324 = vadd.f32 %v5163, %v5323
        %v5325 = vpop.f32.mrf.mxu0
        %v5326 = vpop.f32.mrf.mxu0
        %v5327 = vadd.f32 %v5166, %v5326
        %v5328 = vpop.f32.mrf.mxu0
        %5329 = vmatprep.mubr.bf16.mxu0 0
        %5330 = vmatmul.mubr.bf16.gmra.mxu0 %v4923
        %v5331 = vpop.f32.mrf.mxu0
        %v5332 = vadd.f32 %v5171, %v5331
        %v5333 = vpop.f32.mrf.mxu0
        %v5334 = vpop.f32.mrf.mxu0
        %v5335 = vadd.f32 %v5174, %v5334
        %v5336 = vpop.f32.mrf.mxu0
        %5337 = vmatprep.mubr.bf16.mxu0 0
        %5338 = vmatmul.mubr.bf16.gmra.mxu0 %v4926
        %v5339 = vpop.f32.mrf.mxu0
        %v5340 = vadd.f32 %v5179, %v5339
        %v5341 = vpop.f32.mrf.mxu0
        %v5342 = vpop.f32.mrf.mxu0
        %v5343 = vadd.f32 %v5182, %v5342
        %v5344 = vpop.f32.mrf.mxu0
        %5345 = vmatprep.mubr.bf16.mxu0 0
        %5346 = vmatmul.mubr.bf16.gmra.mxu0 %v4929
        %v5347 = vpop.f32.mrf.mxu0
        %v5348 = vadd.f32 %v5187, %v5347
        %v5349 = vpop.f32.mrf.mxu0
        %v5350 = vpop.f32.mrf.mxu0
        %v5351 = vadd.f32 %v5190, %v5350
        %v5352 = vpop.f32.mrf.mxu0
        %5353 = vmatprep.mubr.bf16.mxu0 0
        %5354 = vmatmul.mubr.bf16.gmra.mxu0 %v4932
        %v5355 = vpop.f32.mrf.mxu0
        %v5356 = vadd.f32 %v5195, %v5355
        %v5357 = vpop.f32.mrf.mxu0
        %v5358 = vpop.f32.mrf.mxu0
        %v5359 = vadd.f32 %v5198, %v5358
        %v5360 = vpop.f32.mrf.mxu0
        %5361 = vmatprep.mubr.bf16.mxu0 0
        %5362 = vmatmul.mubr.bf16.gmra.mxu0 %v4935
        %v5363 = vpop.f32.mrf.mxu0
        %v5364 = vadd.f32 %v5203, %v5363
        %v5365 = vpop.f32.mrf.mxu0
        %v5366 = vpop.f32.mrf.mxu0
        %v5367 = vadd.f32 %v5206, %v5366
        %v5368 = vpop.f32.mrf.mxu0
        %5369 = vmatprep.mubr.bf16.mxu0 0
        %5370 = vmatmul.mubr.bf16.gmra.mxu0 %v4938
        %v5371 = vpop.f32.mrf.mxu0
        %v5372 = vadd.f32 %v5211, %v5371
        %v5373 = vpop.f32.mrf.mxu0
        %v5374 = vpop.f32.mrf.mxu0
        %v5375 = vadd.f32 %v5214, %v5374
        %v5376 = vpop.f32.mrf.mxu0
        %5377 = vmatprep.mubr.bf16.mxu0 0
        %5378 = vmatmul.mubr.bf16.gmra.mxu0 %v4941
        %v5379 = vpop.f32.mrf.mxu0
        %v5380 = vadd.f32 %v5219, %v5379
        %v5381 = vpop.f32.mrf.mxu0
        %v5382 = vpop.f32.mrf.mxu0
        %v5383 = vadd.f32 %v5222, %v5382
        %v5384 = vpop.f32.mrf.mxu0
        %5385 = vmatprep.mubr.bf16.mxu0 0
        %5386 = vmatmul.mubr.bf16.gmra.mxu0 %v4944
        %v5387 = vpop.f32.mrf.mxu0
        %v5388 = vadd.f32 %v5227, %v5387
        %v5389 = vpop.f32.mrf.mxu0
        %v5390 = vpop.f32.mrf.mxu0
        %v5391 = vadd.f32 %v5230, %v5390
        %v5392 = vpop.f32.mrf.mxu0
        %5393 = vmatprep.mubr.bf16.mxu0 0
        %5394 = vmatmul.mubr.bf16.gmra.mxu0 %v4947
        %v5395 = vpop.f32.mrf.mxu0
        %v5396 = vadd.f32 %v5235, %v5395
        %v5397 = vpop.f32.mrf.mxu0
        %v5398 = vpop.f32.mrf.mxu0
        %v5399 = vadd.f32 %v5238, %v5398
        %v5400 = vpop.f32.mrf.mxu0
        %5401 = vmatprep.mubr.bf16.mxu0 0
        %5402 = vmatmul.mubr.bf16.gmra.mxu0 %v4950
        %v5403 = vpop.f32.mrf.mxu0
        %v5404 = vadd.f32 %v5243, %v5403
        %v5405 = vpop.f32.mrf.mxu0
        %v5406 = vpop.f32.mrf.mxu0
        %v5407 = vadd.f32 %v5246, %v5406
        %v5408 = vpop.f32.mrf.mxu0
        %5409 = vmatprep.mubr.bf16.mxu0 0
        %5410 = vmatmul.mubr.bf16.gmra.mxu0 %v4953
        %v5411 = vpop.f32.mrf.mxu0
        %v5412 = vadd.f32 %v5251, %v5411
        %v5413 = vpop.f32.mrf.mxu0
        %v5414 = vpop.f32.mrf.mxu0
        %v5415 = vadd.f32 %v5254, %v5414
        %v5416 = vpop.f32.mrf.mxu0
        %5417 = vmatprep.mubr.bf16.mxu0 0
        %5418 = vmatmul.mubr.bf16.gmra.mxu0 %v4956
        %v5419 = vpop.f32.mrf.mxu0
        %v5420 = vadd.f32 %v5259, %v5419
        %v5421 = vpop.f32.mrf.mxu0
        %v5422 = vpop.f32.mrf.mxu0
        %v5423 = vadd.f32 %v5262, %v5422
        %v5424 = vpop.f32.mrf.mxu0
        %5425 = vmatprep.mubr.bf16.mxu0 0
        %5426 = vmatmul.mubr.bf16.gmra.mxu0 %v4959
        %v5427 = vpop.f32.mrf.mxu0
        %v5428 = vadd.f32 %v5267, %v5427
        %v5429 = vpop.f32.mrf.mxu0
        %v5430 = vpop.f32.mrf.mxu0
        %v5431 = vadd.f32 %v5270, %v5430
        %v5432 = vpop.f32.mrf.mxu0
        %5433 = vmatprep.mubr.bf16.mxu0 0
        %5434 = vmatmul.mubr.bf16.gmra.mxu0 %v4962
        %v5435 = vpop.f32.mrf.mxu0
        %v5436 = vadd.f32 %v5275, %v5435
        %v5437 = vpop.f32.mrf.mxu0
        %v5438 = vpop.f32.mrf.mxu0
        %v5439 = vadd.f32 %v5278, %v5438
        %v5440 = vpop.f32.mrf.mxu0
        %5441 = vmatprep.mubr.bf16.mxu0 0
        %5442 = vmatmul.mubr.bf16.gmra.mxu0 %v4965
        %v5443 = vpop.f32.mrf.mxu0
        %v5444 = vadd.f32 %v5283, %v5443
        %v5445 = vpop.f32.mrf.mxu0
        %v5446 = vpop.f32.mrf.mxu0
        %v5447 = vadd.f32 %v5286, %v5446
        %v5448 = vpop.f32.mrf.mxu0
        %5449 = vdwg.mxu0
        %v5450 = vmax.f32 %v5324, 0.0
        %v5451 = vmax.f32 %v5327, 0.0
        %v5452 = vmax.f32 %v5332, 0.0
        %v5453 = vmax.f32 %v5335, 0.0
        %v5454 = vmax.f32 %v5340, 0.0
        %v5455 = vmax.f32 %v5343, 0.0
        %v5456 = vmax.f32 %v5348, 0.0
        %v5457 = vmax.f32 %v5351, 0.0
        %v5458 = vmax.f32 %v5356, 0.0
        %v5459 = vmax.f32 %v5359, 0.0
        %v5460 = vmax.f32 %v5364, 0.0
        %v5461 = vmax.f32 %v5367, 0.0
        %v5462 = vmax.f32 %v5372, 0.0
        %v5463 = vmax.f32 %v5375, 0.0
        %v5464 = vmax.f32 %v5380, 0.0
        %v5465 = vmax.f32 %v5383, 0.0
        %v5466 = vmax.f32 %v5388, 0.0
        %v5467 = vmax.f32 %v5391, 0.0
        %v5468 = vmax.f32 %v5396, 0.0
        %v5469 = vmax.f32 %v5399, 0.0
        %v5470 = vmax.f32 %v5404, 0.0
        %v5471 = vmax.f32 %v5407, 0.0
        %v5472 = vmax.f32 %v5412, 0.0
        %v5473 = vmax.f32 %v5415, 0.0
        %v5474 = vmax.f32 %v5420, 0.0
        %v5475 = vmax.f32 %v5423, 0.0
        %v5476 = vmax.f32 %v5428, 0.0
        %v5477 = vmax.f32 %v5431, 0.0
        %v5478 = vmax.f32 %v5436, 0.0
        %v5479 = vmax.f32 %v5439, 0.0
        %v5480 = vmax.f32 %v5444, 0.0
        %v5481 = vmax.f32 %v5447, 0.0
        %v5482 = vadd.f32 %v5450, %v5451
        %v5483 = vadd.f32 %v5482, %v5452
        %v5484 = vadd.f32 %v5483, %v5453
        %v5485 = vadd.f32 %v5484, %v5454
        %v5486 = vadd.f32 %v5485, %v5455
        %v5487 = vadd.f32 %v5486, %v5456
        %v5488 = vadd.f32 %v5487, %v5457
        %v5489 = vadd.f32 %v5488, %v5458
        %v5490 = vadd.f32 %v5489, %v5459
        %v5491 = vadd.f32 %v5490, %v5460
        %v5492 = vadd.f32 %v5491, %v5461
        %v5493 = vadd.f32 %v5492, %v5462
        %v5494 = vadd.f32 %v5493, %v5463
        %v5495 = vadd.f32 %v5494, %v5464
        %v5496 = vadd.f32 %v5495, %v5465
        %v5497 = vadd.f32 %v5496, %v5466
        %v5498 = vadd.f32 %v5497, %v5467
        %v5499 = vadd.f32 %v5498, %v5468
        %v5500 = vadd.f32 %v5499, %v5469
        %v5501 = vadd.f32 %v5500, %v5470
        %v5502 = vadd.f32 %v5501, %v5471
        %v5503 = vadd.f32 %v5502, %v5472
        %v5504 = vadd.f32 %v5503, %v5473
        %v5505 = vadd.f32 %v5504, %v5474
        %v5506 = vadd.f32 %v5505, %v5475
        %v5507 = vadd.f32 %v5506, %v5476
        %v5508 = vadd.f32 %v5507, %v5477
        %v5509 = vadd.f32 %v5508, %v5478
        %v5510 = vadd.f32 %v5509, %v5479
        %v5511 = vadd.f32 %v5510, %v5480
        %v5512 = vadd.f32 %v5511, %v5481
        %v5513 = vrot.slane %v5512, 4
        %v5514 = vadd.f32 %v5512, %v5513
        %v5515 = vrot.slane %v5514, 2
        %v5516 = vadd.f32 %v5514, %v5515
        %v5517 = vrot.slane %v5516, 1
        %v5518 = vadd.f32 %v5516, %v5517
        %v5519 = vpack.c.bf16 %v5518, %v5518
        %v5520 = vld [vmem:[%s5] sm:$0xf]
        %v5521 = vld [vmem:[%s5 + $0x4] sm:$0xf]
        %v5522 = vld [vmem:[%s5 + $0x8] sm:$0xf]
        %v5523 = vld [vmem:[%s5 + $0xc] sm:$0xf]
        %v5524 = vld [vmem:[%s5 + $0x10] sm:$0xf]
        %v5525 = vld [vmem:[%s5 + $0x14] sm:$0xf]
        %v5526 = vld [vmem:[%s5 + $0x18] sm:$0xf]
        %v5527 = vld [vmem:[%s5 + $0x1c] sm:$0xf]
        %v5528 = vld [vmem:[%s5 + $0x20] sm:$0xf]
        %v5529 = vld [vmem:[%s5 + $0x24] sm:$0xf]
        %v5530 = vld [vmem:[%s5 + $0x28] sm:$0xf]
        %v5531 = vld [vmem:[%s5 + $0x2c] sm:$0xf]
        %v5532 = vld [vmem:[%s5 + $0x30] sm:$0xf]
        %v5533 = vld [vmem:[%s5 + $0x34] sm:$0xf]
        %v5534 = vld [vmem:[%s5 + $0x38] sm:$0xf]
        %v5535 = vld [vmem:[%s5 + $0x3c] sm:$0xf]
        %v5536 = vld [vmem:[%s6] sm:$0x1]
        %v5553 = vunpack.c.l.b16 %v5520
        %v5554 = vunpack.c.l.b16 %v5521
        %v5555 = vunpack.c.l.b16 %v5522
        %v5556 = vunpack.c.l.b16 %v5523
        %v5557 = vunpack.c.l.b16 %v5524
        %v5558 = vunpack.c.l.b16 %v5525
        %v5559 = vunpack.c.l.b16 %v5526
        %v5560 = vunpack.c.l.b16 %v5527
        %v5561 = vunpack.c.l.b16 %v5528
        %v5562 = vunpack.c.l.b16 %v5529
        %v5563 = vunpack.c.l.b16 %v5530
        %v5564 = vunpack.c.l.b16 %v5531
        %v5565 = vunpack.c.l.b16 %v5532
        %v5566 = vunpack.c.l.b16 %v5533
        %v5567 = vunpack.c.l.b16 %v5534
        %v5568 = vunpack.c.l.b16 %v5535
        %v5569 = vpack.c.b16 %v5554, %v5553
        %v5570 = vpack.c.b16 %v5556, %v5555
        %v5571 = vpack.c.b16 %v5558, %v5557
        %v5572 = vpack.c.b16 %v5560, %v5559
        %v5573 = vpack.c.b16 %v5562, %v5561
        %v5574 = vpack.c.b16 %v5564, %v5563
        %v5575 = vpack.c.b16 %v5566, %v5565
        %v5576 = vpack.c.b16 %v5568, %v5567
        %5585 = vmatprep.subr.bf16.mxu0 0
        %5586 = vmatpush1.bf16.msra.mxu0 %v5576
        %5587 = vmatprep.subr.bf16.mxu0 0
        %5588 = vmatpush1.bf16.msra.mxu0 %v5575
        %5589 = vmatprep.subr.bf16.mxu0 0
        %5590 = vmatpush1.bf16.msra.mxu0 %v5574
        %5591 = vmatprep.subr.bf16.mxu0 0
        %5592 = vmatpush1.bf16.msra.mxu0 %v5573
        %5593 = vmatprep.subr.bf16.mxu0 0
        %5594 = vmatpush1.bf16.msra.mxu0 %v5572
        %5595 = vmatprep.subr.bf16.mxu0 0
        %5596 = vmatpush1.bf16.msra.mxu0 %v5571
        %5597 = vmatprep.subr.bf16.mxu0 0
        %5598 = vmatpush1.bf16.msra.mxu0 %v5570
        %5599 = vmatprep.subr.bf16.mxu0 0
        %5600 = vmatpush1.bf16.msra.mxu0 %v5569
        %5601 = vmatprep.subr.bf16.mxu0 0
        %5602 = vmatpush2.bf16.msra.mxu0 0
        %5603 = vmatprep.subr.bf16.mxu0 0
        %5604 = vmatpush2.bf16.msra.mxu0 0
        %5605 = vmatprep.subr.bf16.mxu0 0
        %5606 = vmatpush2.bf16.msra.mxu0 0
        %5607 = vmatprep.subr.bf16.mxu0 0
        %5608 = vmatpush2.bf16.msra.mxu0 0
        %5609 = vmatprep.subr.bf16.mxu0 0
        %5610 = vmatpush2.bf16.msra.mxu0 0
        %5611 = vmatprep.subr.bf16.mxu0 0
        %5612 = vmatpush2.bf16.msra.mxu0 0
        %5613 = vmatprep.subr.bf16.mxu0 0
        %5614 = vmatpush2.bf16.msra.mxu0 0
        %5615 = vmatprep.subr.bf16.mxu0 0
        %5616 = vmatpush2.bf16.msra.mxu0 0
        %5617 = vmatprep.mubr.bf16.mxu0 0
        %5618 = vmatmul.mubr.bf16.gmra.mxu0 %v5519
        %v5619 = vpop.f32.mrf.mxu0
        %v5620 = vadd.f32 %v5536, %v5619
        %v5621 = vpop.f32.mrf.mxu0
        %v5622 = vpop.f32.mrf.mxu0
        %v5623 = vpop.f32.mrf.mxu0
        %5624 = vdwg.mxu0
        %5625 = vst [vmem:[%s270] sm:$0x1] %v5620
        %s5626 = sand.u32 %s181, 1
        %s5627 = scalar_lea.sflag [#allocation5], %s5626
        %s5628 = sand.u32 %s181, 1
        %s5629 = scalar_lea.vmem [#allocation4], %s5628
        // Predicated region
        $region49: #{simple_cnn.1} parent=47 // pred_check
          %p5630 = pneg %p191
        $region50: #{simple_cnn.1} parent=47 // pred_check_branch
          %5632 = sbr.rel (%p5630) target = $region52
        $region51: #{simple_cnn.1} parent=47 // pred_region
          %s5634 = ssub.s32 16, 16
          %5635 = vsyncadd %s5627, %s5634
          %s5636 = smul.addr %s21, 16
          %s5637 = scalar_lea.hbm %s7, %s5636
          %s5639 = sshll.u32 %s5629, 4
          %s5640 = int_to_ptr.vmem [resolvable:$true] %s5639
          %5642 = dma.vmem_to_hbm [thread:$0]  %s5640, 16, %s5637, %s5627
        $region52: #{simple_cnn.1} parent=47 // pred_fallthru
          _
      $region48: #{simple_cnn.1} parent=5 // pred_fallthru
        _
      %p5643 = scmp.le.s32.totalorder 2, %s16
      // Predicated region
      $region53: #{simple_cnn.1} parent=5 // pred_check
        %p5644 = pneg %p5643
      $region54: #{simple_cnn.1} parent=5 // pred_check_branch
        %5646 = sbr.rel (%p5644) target = $region56
      $region55: #{simple_cnn.1} parent=5 // pred_region
        %s5647 = ssub.s32 %s16, 2
        // Predicated region
        $region57: #{simple_cnn.1} parent=55 // pred_check
          %p5648 = pneg %p197
        $region58: #{simple_cnn.1} parent=55 // pred_check_branch
          %5650 = sbr.rel (%p5648) target = $region60
        $region59: #{simple_cnn.1} parent=55 // pred_region
          %s5651 = sand.u32 %s182, 1
          %s5652 = scalar_lea.sflag [#allocation5], %s5651
          %s5653 = sand.u32 %s182, 1
          %s5654 = scalar_lea.vmem [#allocation4], %s5653
          %5655 = dma.done %s5652, 16
        $region60: #{simple_cnn.1} parent=55 // pred_fallthru
          _
      $region56: #{simple_cnn.1} parent=5 // pred_fallthru
        _
    $region6: #{simple_cnn.1} parent=1 // loop_footer
      %s20 = sadd.s32 1, %s16
    $region7: #{simple_cnn.1} parent=1 // loop_footer_branch
      %15 = sbr.rel target = $region3
    $region8: #{simple_cnn.1} parent=1 // loop_exit
      _
    %5656 = vsyncpa [#allocation5], 1
    %s5657 = scalar_lea.sflag [#allocation5], 1
    %5658 = vsyncpa %s5657, 1

</llo_original>
